<compile_context>
chip_gen: v7x
topology: tpu7x:2x2x1
jax: 0.10.0
libtpu: 0.0.40
codegen_flags: <defaults>
</compile_context>

<pallas_src>
import functools

import jax
import jax.numpy as jnp
from jax.experimental import pallas as pl
from jax.experimental.pallas import tpu as pltpu

EPS = 1e-5  # nn.LayerNorm default


def _layernorm(x, gamma, beta):
    mu = jnp.mean(x, axis=-1, keepdims=True)
    var = jnp.mean(jnp.square(x - mu), axis=-1, keepdims=True)
    return (x - mu) * jax.lax.rsqrt(var + EPS) * gamma + beta


def _gelu_exact(x):
    # torch nn.GELU default (erf-based, exact)
    return 0.5 * x * (1.0 + jax.lax.erf(x * jnp.float32(0.7071067811865476)))


def encoder_kernel(B, N, H,
                   x_ref, pos_ref,
                   g1_ref, be1_ref, wq_ref, wk_ref, wv_ref, wp_ref, bp_ref,
                   g2_ref, be2_ref, w1_ref, b1_ref, w2_ref, b2_ref,
                   o_ref, act_ref):
    """Grid axis 0 = layer index. act_ref carries the activations across layers."""
    layer = pl.program_id(0)

    @pl.when(layer == 0)
    def _():
        act_ref[...] = x_ref[...]

    BN, C = act_ref.shape
    Dh = C // H

    # pos is re-added before every block (TransformerEncoder: x = block(x + pos)).
    h = act_ref[...] + pos_ref[...]                       # (BN, C)

    # ---------------- attention branch: h += proj(MHA(norm1(h))) ----------------
    y = _layernorm(h, g1_ref[0], be1_ref[0])              # (BN, C)
    wq = wq_ref[0]                                        # (H, C, Dh), 1/sqrt(Dh) folded in
    wk = wk_ref[0]                                        # (H, C, Dh)
    wv = wv_ref[0]                                        # (H, C, Dh)
    wp = wp_ref[0]                                        # (H, Dh, C)

    ao_rows = []
    for b in range(B):  # static unroll over (small) batch: attention is per-sample
        yb = jnp.broadcast_to(y[b * N:(b + 1) * N, :], (H, N, C))
        q = jnp.einsum('hnc,hcd->hnd', yb, wq, preferred_element_type=jnp.float32)
        k = jnp.einsum('hnc,hcd->hnd', yb, wk, preferred_element_type=jnp.float32)
        v = jnp.einsum('hnc,hcd->hnd', yb, wv, preferred_element_type=jnp.float32)
        s = jnp.einsum('hnd,hmd->hnm', q, k, preferred_element_type=jnp.float32)  # (H,N,N)
        s = s - jnp.max(s, axis=-1, keepdims=True)
        p = jnp.exp(s)
        p = p * pl.reciprocal(jnp.sum(p, axis=-1, keepdims=True), approx=True)
        o = jnp.einsum('hnm,hmd->hnd', p, v, preferred_element_type=jnp.float32)  # (H,N,Dh)
        # Fuse "merge heads" with the output projection: sum_h (o_h @ Wp_h)  -> (N, C)
        pr = jnp.einsum('hnd,hdc->hnc', o, wp, preferred_element_type=jnp.float32)
        ao_rows.append(jnp.sum(pr, axis=0))
    ao = jnp.concatenate(ao_rows, axis=0) + bp_ref[0]     # (BN, C)
    h = h + ao

    # ---------------- MLP branch: out = h + fc2(gelu(fc1(norm2(h)))) ----------------
    y2 = _layernorm(h, g2_ref[0], be2_ref[0])
    z = jnp.dot(y2, w1_ref[0], preferred_element_type=jnp.float32) + b1_ref[0]
    z = _gelu_exact(z)
    z = jnp.dot(z, w2_ref[0], preferred_element_type=jnp.float32) + b2_ref[0]

    out = h + z
    act_ref[...] = out       # keep activations resident in VMEM for the next layer
    o_ref[0] = out           # one lane-dense (B*N, C) store per layer


def prepare_params(blocks_params, num_heads):
    """Stack per-layer params along a leading depth axis; split qkv/proj per head;
    fold the 1/sqrt(Dh) attention scale into Wq."""
    C = blocks_params[0]["wqkv"].shape[0]
    H = num_heads
    Dh = C // H
    scale = Dh ** (-0.5)

    def stack(fn):
        return jnp.stack([fn(p) for p in blocks_params], axis=0)

    return dict(
        g1=stack(lambda p: p["g1"].reshape(1, C)),
        be1=stack(lambda p: p["be1"].reshape(1, C)),
        # qkv column layout is [3, H, Dh]; columns 0:C are Q, C:2C are K, 2C:3C are V.
        wq=stack(lambda p: (p["wqkv"][:, 0:C] * scale).reshape(C, H, Dh).transpose(1, 0, 2)),
        wk=stack(lambda p: p["wqkv"][:, C:2 * C].reshape(C, H, Dh).transpose(1, 0, 2)),
        wv=stack(lambda p: p["wqkv"][:, 2 * C:3 * C].reshape(C, H, Dh).transpose(1, 0, 2)),
        wp=stack(lambda p: p["wp"].reshape(H, Dh, C)),
        bp=stack(lambda p: p["bp"].reshape(1, C)),
        g2=stack(lambda p: p["g2"].reshape(1, C)),
        be2=stack(lambda p: p["be2"].reshape(1, C)),
        w1=stack(lambda p: p["w1"]),
        b1=stack(lambda p: p["b1"].reshape(1, -1)),
        w2=stack(lambda p: p["w2"]),
        b2=stack(lambda p: p["b2"].reshape(1, C)),
    )


def transformer_encoder(x, pos, blocks_params, num_heads, fetch_idx=(3, 7, 11)):
    """Mirrors TransformerEncoder.forward; returns the feature list at fetch_idx."""
    B, N, C = x.shape
    depth = len(blocks_params)
    H = num_heads
    Dh = C // H
    hidden = blocks_params[0]["w1"].shape[1]
    sp = prepare_params(blocks_params, num_heads)

    kernel = functools.partial(encoder_kernel, B, N, H)

    def layer_spec(shape):
        n = len(shape)
        return pl.BlockSpec((1,) + shape, lambda l, n=n: (l,) + (0,) * n)

    in_specs = [
        pl.BlockSpec((B * N, C), lambda l: (0, 0)),   # x      (consumed at layer 0 only)
        pl.BlockSpec((B * N, C), lambda l: (0, 0)),   # pos    (re-added every layer)
        layer_spec((1, C)),        # norm1 gamma
        layer_spec((1, C)),        # norm1 beta
        layer_spec((H, C, Dh)),    # Wq per head (scale folded in)
        layer_spec((H, C, Dh)),    # Wk per head
        layer_spec((H, C, Dh)),    # Wv per head
        layer_spec((H, Dh, C)),    # Wproj per head
        layer_spec((1, C)),        # proj bias
        layer_spec((1, C)),        # norm2 gamma
        layer_spec((1, C)),        # norm2 beta
        layer_spec((C, hidden)),   # fc1 weight
        layer_spec((1, hidden)),   # fc1 bias
        layer_spec((hidden, C)),   # fc2 weight
        layer_spec((1, C)),        # fc2 bias
    ]

    out = pl.pallas_call(
        kernel,
        out_shape=jax.ShapeDtypeStruct((depth, B * N, C), jnp.float32),
        grid=(depth,),
        in_specs=in_specs,
        out_specs=pl.BlockSpec((1, B * N, C), lambda l: (l, 0, 0)),
        scratch_shapes=[pltpu.VMEM((B * N, C), jnp.float32)],
        # Layers are sequential (state carried in the VMEM scratch) -> "arbitrary".
        # TODO(synk): on multi-TensorCore chips (v7x) expose a "parallel" batch/seq-tile
        # axis in addition to the layer axis so both cores are used.
        compiler_params=pltpu.CompilerParams(dimension_semantics=("arbitrary",)),
    )(x.reshape(B * N, C), pos.reshape(B * N, C),
      sp["g1"], sp["be1"], sp["wq"], sp["wk"], sp["wv"], sp["wp"], sp["bp"],
      sp["g2"], sp["be2"], sp["w1"], sp["b1"], sp["w2"], sp["b2"])

    return [out[i].reshape(B, N, C) for i in fetch_idx if i < depth]


# ---------------- pure-JAX reference (mirrors the PyTorch math exactly) ----------------
def _ref_block(x, pos, p, num_heads):
    B, N, C = x.shape
    Dh = C // num_heads
    scale = Dh ** (-0.5)
    h = x + pos
    y = _layernorm(h, p["g1"][0], p["be1"][0])
    qkv = (y @ p["wqkv"]).reshape(B, N, 3, num_heads, Dh).transpose(2, 0, 3, 1, 4)
    q, k, v = qkv[0], qkv[1], qkv[2]
    attn = jnp.einsum("bhnd,bhmd->bhnm", q * scale, k)
    attn = jax.nn.softmax(attn, axis=-1)
    ao = jnp.einsum("bhnm,bhmd->bhnd", attn, v).transpose(0, 2, 1, 3).reshape(B, N, C)
    ao = ao @ p["wp"] + p["bp"][0]
    h = h + ao
    y2 = _layernorm(h, p["g2"][0], p["be2"][0])
    z = y2 @ p["w1"] + p["b1"][0]
    z = _gelu_exact(z)
    z = z @ p["w2"] + p["b2"][0]
    return h + z


def _ref_encoder(x, pos, blocks_params, num_heads, fetch_idx=(3, 7, 11)):
    feats = []
    for i, p in enumerate(blocks_params):
        x = _ref_block(x, pos, p, num_heads)
        if i in fetch_idx:
            feats.append(x)
    return feats


if __name__ == "__main__":
    # Small shapes consistent with the module (depth=4 default, num_heads divides dim).
    B, N, C = 2, 16, 64
    num_heads, depth, mlp_ratio = 4, 4, 4.0
    hidden = int(C * mlp_ratio)

    key = jax.random.PRNGKey(0)
    keys = jax.random.split(key, 2 + depth * 10)
    x = jax.random.normal(keys[0], (B, N, C), jnp.float32)
    pos = jax.random.normal(keys[1], (B, N, C), jnp.float32)

    blocks_params = []
    ki = 2
    for _ in range(depth):
        p = dict(
            g1=1.0 + 0.1 * jax.random.normal(keys[ki + 0], (1, C), jnp.float32),
            be1=0.1 * jax.random.normal(keys[ki + 1], (1, C), jnp.float32),
            wqkv=0.02 * jax.random.normal(keys[ki + 2], (C, 3 * C), jnp.float32),
            wp=0.02 * jax.random.normal(keys[ki + 3], (C, C), jnp.float32),
            bp=0.1 * jax.random.normal(keys[ki + 4], (1, C), jnp.float32),
            g2=1.0 + 0.1 * jax.random.normal(keys[ki + 5], (1, C), jnp.float32),
            be2=0.1 * jax.random.normal(keys[ki + 6], (1, C), jnp.float32),
            w1=0.02 * jax.random.normal(keys[ki + 7], (C, hidden), jnp.float32),
            b1=0.1 * jax.random.normal(keys[ki + 8], (1, hidden), jnp.float32),
            w2=0.02 * jax.random.normal(keys[ki + 9], (hidden, C), jnp.float32),
            b2=jnp.zeros((1, C), jnp.float32),
        )
        ki += 10
        blocks_params.append(p)

    feats = transformer_encoder(x, pos, blocks_params, num_heads)
    feats = [jax.block_until_ready(f) for f in feats]

    ref_feats = _ref_encoder(x, pos, blocks_params, num_heads)
    assert len(feats) == len(ref_feats) == 1  # depth=4 -> only fetch_idx 3 collected
    for a, b in zip(feats, ref_feats):
        assert a.shape == (B, N, C)
        err = float(jnp.max(jnp.abs(a - b)))
        # tolerance allows for the EUP approx-reciprocal in the softmax denominator
        assert err < 1e-2, err

    print("KERNEL_OK")
</pallas_src>

<mosaic_0001>
module attributes {stable_mosaic.version = 11 : i64} {
  func.func @encoder_kernel(%arg0: i32, %arg1: memref<32x64xf32, #tpu.memory_space<vmem>>, %arg2: memref<32x64xf32, #tpu.memory_space<vmem>>, %arg3: memref<1x1x64xf32, #tpu.memory_space<vmem>>, %arg4: memref<1x1x64xf32, #tpu.memory_space<vmem>>, %arg5: memref<1x4x64x16xf32, #tpu.memory_space<vmem>>, %arg6: memref<1x4x64x16xf32, #tpu.memory_space<vmem>>, %arg7: memref<1x4x64x16xf32, #tpu.memory_space<vmem>>, %arg8: memref<1x4x16x64xf32, #tpu.memory_space<vmem>>, %arg9: memref<1x1x64xf32, #tpu.memory_space<vmem>>, %arg10: memref<1x1x64xf32, #tpu.memory_space<vmem>>, %arg11: memref<1x1x64xf32, #tpu.memory_space<vmem>>, %arg12: memref<1x64x256xf32, #tpu.memory_space<vmem>>, %arg13: memref<1x1x256xf32, #tpu.memory_space<vmem>>, %arg14: memref<1x256x64xf32, #tpu.memory_space<vmem>>, %arg15: memref<1x1x64xf32, #tpu.memory_space<vmem>>, %arg16: memref<1x32x64xf32, #tpu.memory_space<vmem>>, %arg17: memref<32x64xf32, #tpu.memory_space<vmem>>) attributes {dimension_semantics = [#tpu.dimension_semantics<arbitrary>], iteration_bounds = array<i64: 4>, scalar_prefetch = 0 : i64, scratch_operands = 1 : i64, tpu.core_type = #tpu.core_type<tc>, window_params = [{pipeline_mode = #tpu.pipeline_mode<synchronous>, transform_indices = @transform_0, window_bounds = array<i64: 32, 64>}, {pipeline_mode = #tpu.pipeline_mode<synchronous>, transform_indices = @transform_1, window_bounds = array<i64: 32, 64>}, {transform_indices = @transform_2, window_bounds = array<i64: 1, 1, 64>}, {transform_indices = @transform_3, window_bounds = array<i64: 1, 1, 64>}, {transform_indices = @transform_4, window_bounds = array<i64: 1, 4, 64, 16>}, {transform_indices = @transform_5, window_bounds = array<i64: 1, 4, 64, 16>}, {transform_indices = @transform_6, window_bounds = array<i64: 1, 4, 64, 16>}, {transform_indices = @transform_7, window_bounds = array<i64: 1, 4, 16, 64>}, {transform_indices = @transform_8, window_bounds = array<i64: 1, 1, 64>}, {transform_indices = @transform_9, window_bounds = array<i64: 1, 1, 64>}, {transform_indices = @transform_10, window_bounds = array<i64: 1, 1, 64>}, {transform_indices = @transform_11, window_bounds = array<i64: 1, 64, 256>}, {transform_indices = @transform_12, window_bounds = array<i64: 1, 1, 256>}, {transform_indices = @transform_13, window_bounds = array<i64: 1, 256, 64>}, {transform_indices = @transform_14, window_bounds = array<i64: 1, 1, 64>}, {transform_indices = @transform_15, window_bounds = array<i64: 1, 32, 64>}]} {
    %c0_i32 = arith.constant 0 : i32
    %0 = arith.cmpi eq, %arg0, %c0_i32 : i32
    %1 = arith.extui %0 : i1 to i32
    %c0_i32_0 = arith.constant 0 : i32
    %2 = arith.cmpi ne, %1, %c0_i32_0 : i32
    scf.if %2 {
      %c0_84 = arith.constant 0 : index
      %c0_85 = arith.constant 0 : index
      %139 = vector.load %arg1[%c0_84, %c0_85] : memref<32x64xf32, #tpu.memory_space<vmem>>, vector<32x64xf32>
      %c0_86 = arith.constant 0 : index
      %c0_87 = arith.constant 0 : index
      %140 = vector.load %arg17[%c0_86, %c0_87] : memref<32x64xf32, #tpu.memory_space<vmem>>, vector<32x64xf32>
      tpu.vector_store %arg17[%c0_86, %c0_87], %139 {strides = array<i32>} : memref<32x64xf32, #tpu.memory_space<vmem>>, vector<32x64xf32>,
    } else {
    }
    %c0 = arith.constant 0 : index
    %c0_1 = arith.constant 0 : index
    %3 = vector.load %arg17[%c0, %c0_1] : memref<32x64xf32, #tpu.memory_space<vmem>>, vector<32x64xf32>
    %c0_2 = arith.constant 0 : index
    %c0_3 = arith.constant 0 : index
    %4 = vector.load %arg2[%c0_2, %c0_3] : memref<32x64xf32, #tpu.memory_space<vmem>>, vector<32x64xf32>
    %5 = arith.addf %3, %4 : vector<32x64xf32>
    %c0_4 = arith.constant 0 : index
    %c0_5 = arith.constant 0 : index
    %c0_6 = arith.constant 0 : index
    %6 = vector.load %arg3[%c0_4, %c0_5, %c0_6] : memref<1x1x64xf32, #tpu.memory_space<vmem>>, vector<1x1x64xf32>
    %7 = vector.shape_cast %6 : vector<1x1x64xf32> to vector<1x64xf32>
    %c0_7 = arith.constant 0 : index
    %c0_8 = arith.constant 0 : index
    %c0_9 = arith.constant 0 : index
    %8 = vector.load %arg4[%c0_7, %c0_8, %c0_9] : memref<1x1x64xf32, #tpu.memory_space<vmem>>, vector<1x1x64xf32>
    %9 = vector.shape_cast %8 : vector<1x1x64xf32> to vector<1x64xf32>
    %cst = arith.constant dense<0.000000e+00> : vector<32xf32>
    %10 = vector.multi_reduction <add>, %5, %cst [1] : vector<32x64xf32> to vector<32xf32>
    %11 = vector.shape_cast %10 : vector<32xf32> to vector<32x1xf32>
    %cst_10 = arith.constant 6.400000e+01 : f32
    %12 = vector.broadcast %cst_10 : f32 to vector<32x1xf32>
    %13 = arith.divf %11, %12 : vector<32x1xf32>
    %14 = vector.broadcast %13 : vector<32x1xf32> to vector<32x64xf32>
    %15 = arith.subf %5, %14 : vector<32x64xf32>
    %16 = arith.mulf %15, %15 : vector<32x64xf32>
    %cst_11 = arith.constant dense<0.000000e+00> : vector<32xf32>
    %17 = vector.multi_reduction <add>, %16, %cst_11 [1] : vector<32x64xf32> to vector<32xf32>
    %18 = vector.shape_cast %17 : vector<32xf32> to vector<32x1xf32>
    %cst_12 = arith.constant 6.400000e+01 : f32
    %19 = vector.broadcast %cst_12 : f32 to vector<32x1xf32>
    %20 = arith.divf %18, %19 : vector<32x1xf32>
    %21 = vector.broadcast %13 : vector<32x1xf32> to vector<32x64xf32>
    %22 = arith.subf %5, %21 : vector<32x64xf32>
    %cst_13 = arith.constant 9.99999974E-6 : f32
    %23 = vector.broadcast %cst_13 : f32 to vector<32x1xf32>
    %24 = arith.addf %20, %23 : vector<32x1xf32>
    %25 = math.rsqrt %24 : vector<32x1xf32>
    %26 = vector.broadcast %25 : vector<32x1xf32> to vector<32x64xf32>
    %27 = arith.mulf %22, %26 : vector<32x64xf32>
    %28 = vector.broadcast %7 : vector<1x64xf32> to vector<32x64xf32>
    %29 = arith.mulf %27, %28 : vector<32x64xf32>
    %30 = vector.broadcast %9 : vector<1x64xf32> to vector<32x64xf32>
    %31 = arith.addf %29, %30 : vector<32x64xf32>
    %c0_14 = arith.constant 0 : index
    %c0_15 = arith.constant 0 : index
    %c0_16 = arith.constant 0 : index
    %c0_17 = arith.constant 0 : index
    %32 = vector.load %arg5[%c0_14, %c0_15, %c0_16, %c0_17] : memref<1x4x64x16xf32, #tpu.memory_space<vmem>>, vector<1x4x64x16xf32>
    %33 = vector.shape_cast %32 : vector<1x4x64x16xf32> to vector<4x64x16xf32>
    %c0_18 = arith.constant 0 : index
    %c0_19 = arith.constant 0 : index
    %c0_20 = arith.constant 0 : index
    %c0_21 = arith.constant 0 : index
    %34 = vector.load %arg6[%c0_18, %c0_19, %c0_20, %c0_21] : memref<1x4x64x16xf32, #tpu.memory_space<vmem>>, vector<1x4x64x16xf32>
    %35 = vector.shape_cast %34 : vector<1x4x64x16xf32> to vector<4x64x16xf32>
    %c0_22 = arith.constant 0 : index
    %c0_23 = arith.constant 0 : index
    %c0_24 = arith.constant 0 : index
    %c0_25 = arith.constant 0 : index
    %36 = vector.load %arg7[%c0_22, %c0_23, %c0_24, %c0_25] : memref<1x4x64x16xf32, #tpu.memory_space<vmem>>, vector<1x4x64x16xf32>
    %37 = vector.shape_cast %36 : vector<1x4x64x16xf32> to vector<4x64x16xf32>
    %c0_26 = arith.constant 0 : index
    %c0_27 = arith.constant 0 : index
    %c0_28 = arith.constant 0 : index
    %c0_29 = arith.constant 0 : index
    %38 = vector.load %arg8[%c0_26, %c0_27, %c0_28, %c0_29] : memref<1x4x16x64xf32, #tpu.memory_space<vmem>>, vector<1x4x16x64xf32>
    %39 = vector.shape_cast %38 : vector<1x4x16x64xf32> to vector<4x16x64xf32>
    %40 = vector.extract_strided_slice %31 {offsets = [0, 0], sizes = [16, 64], strides = [1, 1]} : vector<32x64xf32> to vector<16x64xf32>
    %41 = vector.shape_cast %40 : vector<16x64xf32> to vector<1x16x64xf32>
    %42 = vector.broadcast %41 : vector<1x16x64xf32> to vector<4x16x64xf32>
    "tpu.trace_start"() <{level = 10 : i32, message = "hnc,hcd->hnd"}> : () -> ()
    %cst_30 = arith.constant dense<0.000000e+00> : vector<4x16x16xf32>
    %43 = tpu.matmul %42, %33, %cst_30 {dimension_numbers = #tpu.dot_dimension_numbers<[2], [1], [1], [2], [0, 0, 0, 1, 1, 2], [0], [0]>} : vector<4x16x64xf32>, vector<4x64x16xf32>, vector<4x16x16xf32> -> vector<4x16x16xf32>
    %cst_31 = arith.constant dense<0.000000e+00> : vector<4x16x16xf32>
    %44 = tpu.matmul %42, %35, %cst_31 {dimension_numbers = #tpu.dot_dimension_numbers<[2], [1], [1], [2], [0, 0, 0, 1, 1, 2], [0], [0]>} : vector<4x16x64xf32>, vector<4x64x16xf32>, vector<4x16x16xf32> -> vector<4x16x16xf32>
    %cst_32 = arith.constant dense<0.000000e+00> : vector<4x16x16xf32>
    %45 = tpu.matmul %42, %37, %cst_32 {dimension_numbers = #tpu.dot_dimension_numbers<[2], [1], [1], [2], [0, 0, 0, 1, 1, 2], [0], [0]>} : vector<4x16x64xf32>, vector<4x64x16xf32>, vector<4x16x16xf32> -> vector<4x16x16xf32>
    "tpu.trace_stop"() : () -> ()
    "tpu.trace_start"() <{level = 10 : i32, message = "hnd,hmd->hnm"}> : () -> ()
    %cst_33 = arith.constant dense<0.000000e+00> : vector<4x16x16xf32>
    %46 = tpu.matmul %43, %44, %cst_33 {dimension_numbers = #tpu.dot_dimension_numbers<[2], [2], [1], [1], [0, 0, 0, 1, 1, 1], [0], [0]>} : vector<4x16x16xf32>, vector<4x16x16xf32>, vector<4x16x16xf32> -> vector<4x16x16xf32>
    "tpu.trace_stop"() : () -> ()
    %cst_34 = arith.constant dense<0xFF800000> : vector<4x16xf32>
    %47 = vector.multi_reduction <maximumf>, %46, %cst_34 [2] : vector<4x16x16xf32> to vector<4x16xf32>
    %48 = vector.shape_cast %47 : vector<4x16xf32> to vector<4x16x1xf32>
    %49 = vector.broadcast %48 : vector<4x16x1xf32> to vector<4x16x16xf32>
    %50 = arith.subf %46, %49 : vector<4x16x16xf32>
    %51 = math.exp %50 : vector<4x16x16xf32>
    %cst_35 = arith.constant dense<0.000000e+00> : vector<4x16xf32>
    %52 = vector.multi_reduction <add>, %51, %cst_35 [2] : vector<4x16x16xf32> to vector<4x16xf32>
    %53 = vector.shape_cast %52 : vector<4x16xf32> to vector<4x16x1xf32>
    %54 = tpu.reciprocal %53 {approx = true} : vector<4x16x1xf32> -> vector<4x16x1xf32>
    %55 = vector.broadcast %54 : vector<4x16x1xf32> to vector<4x16x16xf32>
    %56 = arith.mulf %51, %55 : vector<4x16x16xf32>
    "tpu.trace_start"() <{level = 10 : i32, message = "hnm,hmd->hnd"}> : () -> ()
    %cst_36 = arith.constant dense<0.000000e+00> : vector<4x16x16xf32>
    %57 = tpu.matmul %56, %45, %cst_36 {dimension_numbers = #tpu.dot_dimension_numbers<[2], [1], [1], [2], [0, 0, 0, 1, 1, 2], [0], [0]>} : vector<4x16x16xf32>, vector<4x16x16xf32>, vector<4x16x16xf32> -> vector<4x16x16xf32>
    "tpu.trace_stop"() : () -> ()
    "tpu.trace_start"() <{level = 10 : i32, message = "hnd,hdc->hnc"}> : () -> ()
    %cst_37 = arith.constant dense<0.000000e+00> : vector<4x16x64xf32>
    %58 = tpu.matmul %57, %39, %cst_37 {dimension_numbers = #tpu.dot_dimension_numbers<[2], [1], [1], [2], [0, 0, 0, 1, 1, 2], [0], [0]>} : vector<4x16x16xf32>, vector<4x16x64xf32>, vector<4x16x64xf32> -> vector<4x16x64xf32>
    "tpu.trace_stop"() : () -> ()
    %cst_38 = arith.constant dense<0.000000e+00> : vector<16x64xf32>
    %59 = vector.multi_reduction <add>, %58, %cst_38 [0] : vector<4x16x64xf32> to vector<16x64xf32>
    %60 = vector.extract_strided_slice %31 {offsets = [16, 0], sizes = [16, 64], strides = [1, 1]} : vector<32x64xf32> to vector<16x64xf32>
    %61 = vector.shape_cast %60 : vector<16x64xf32> to vector<1x16x64xf32>
    %62 = vector.broadcast %61 : vector<1x16x64xf32> to vector<4x16x64xf32>
    "tpu.trace_start"() <{level = 10 : i32, message = "hnc,hcd->hnd"}> : () -> ()
    %cst_39 = arith.constant dense<0.000000e+00> : vector<4x16x16xf32>
    %63 = tpu.matmul %62, %33, %cst_39 {dimension_numbers = #tpu.dot_dimension_numbers<[2], [1], [1], [2], [0, 0, 0, 1, 1, 2], [0], [0]>} : vector<4x16x64xf32>, vector<4x64x16xf32>, vector<4x16x16xf32> -> vector<4x16x16xf32>
    %cst_40 = arith.constant dense<0.000000e+00> : vector<4x16x16xf32>
    %64 = tpu.matmul %62, %35, %cst_40 {dimension_numbers = #tpu.dot_dimension_numbers<[2], [1], [1], [2], [0, 0, 0, 1, 1, 2], [0], [0]>} : vector<4x16x64xf32>, vector<4x64x16xf32>, vector<4x16x16xf32> -> vector<4x16x16xf32>
    %cst_41 = arith.constant dense<0.000000e+00> : vector<4x16x16xf32>
    %65 = tpu.matmul %62, %37, %cst_41 {dimension_numbers = #tpu.dot_dimension_numbers<[2], [1], [1], [2], [0, 0, 0, 1, 1, 2], [0], [0]>} : vector<4x16x64xf32>, vector<4x64x16xf32>, vector<4x16x16xf32> -> vector<4x16x16xf32>
    "tpu.trace_stop"() : () -> ()
    "tpu.trace_start"() <{level = 10 : i32, message = "hnd,hmd->hnm"}> : () -> ()
    %cst_42 = arith.constant dense<0.000000e+00> : vector<4x16x16xf32>
    %66 = tpu.matmul %63, %64, %cst_42 {dimension_numbers = #tpu.dot_dimension_numbers<[2], [2], [1], [1], [0, 0, 0, 1, 1, 1], [0], [0]>} : vector<4x16x16xf32>, vector<4x16x16xf32>, vector<4x16x16xf32> -> vector<4x16x16xf32>
    "tpu.trace_stop"() : () -> ()
    %cst_43 = arith.constant dense<0xFF800000> : vector<4x16xf32>
    %67 = vector.multi_reduction <maximumf>, %66, %cst_43 [2] : vector<4x16x16xf32> to vector<4x16xf32>
    %68 = vector.shape_cast %67 : vector<4x16xf32> to vector<4x16x1xf32>
    %69 = vector.broadcast %68 : vector<4x16x1xf32> to vector<4x16x16xf32>
    %70 = arith.subf %66, %69 : vector<4x16x16xf32>
    %71 = math.exp %70 : vector<4x16x16xf32>
    %cst_44 = arith.constant dense<0.000000e+00> : vector<4x16xf32>
    %72 = vector.multi_reduction <add>, %71, %cst_44 [2] : vector<4x16x16xf32> to vector<4x16xf32>
    %73 = vector.shape_cast %72 : vector<4x16xf32> to vector<4x16x1xf32>
    %74 = tpu.reciprocal %73 {approx = true} : vector<4x16x1xf32> -> vector<4x16x1xf32>
    %75 = vector.broadcast %74 : vector<4x16x1xf32> to vector<4x16x16xf32>
    %76 = arith.mulf %71, %75 : vector<4x16x16xf32>
    "tpu.trace_start"() <{level = 10 : i32, message = "hnm,hmd->hnd"}> : () -> ()
    %cst_45 = arith.constant dense<0.000000e+00> : vector<4x16x16xf32>
    %77 = tpu.matmul %76, %65, %cst_45 {dimension_numbers = #tpu.dot_dimension_numbers<[2], [1], [1], [2], [0, 0, 0, 1, 1, 2], [0], [0]>} : vector<4x16x16xf32>, vector<4x16x16xf32>, vector<4x16x16xf32> -> vector<4x16x16xf32>
    "tpu.trace_stop"() : () -> ()
    "tpu.trace_start"() <{level = 10 : i32, message = "hnd,hdc->hnc"}> : () -> ()
    %cst_46 = arith.constant dense<0.000000e+00> : vector<4x16x64xf32>
    %78 = tpu.matmul %77, %39, %cst_46 {dimension_numbers = #tpu.dot_dimension_numbers<[2], [1], [1], [2], [0, 0, 0, 1, 1, 2], [0], [0]>} : vector<4x16x16xf32>, vector<4x16x64xf32>, vector<4x16x64xf32> -> vector<4x16x64xf32>
    "tpu.trace_stop"() : () -> ()
    %cst_47 = arith.constant dense<0.000000e+00> : vector<16x64xf32>
    %79 = vector.multi_reduction <add>, %78, %cst_47 [0] : vector<4x16x64xf32> to vector<16x64xf32>
    %80 = tpu.concatenate %59, %79 in 0 : vector<16x64xf32>, vector<16x64xf32> -> vector<32x64xf32>
    %c0_48 = arith.constant 0 : index
    %c0_49 = arith.constant 0 : index
    %c0_50 = arith.constant 0 : index
    %81 = vector.load %arg9[%c0_48, %c0_49, %c0_50] : memref<1x1x64xf32, #tpu.memory_space<vmem>>, vector<1x1x64xf32>
    %82 = vector.shape_cast %81 : vector<1x1x64xf32> to vector<1x64xf32>
    %83 = vector.broadcast %82 : vector<1x64xf32> to vector<32x64xf32>
    %84 = arith.addf %80, %83 : vector<32x64xf32>
    %85 = arith.addf %5, %84 : vector<32x64xf32>
    %c0_51 = arith.constant 0 : index
    %c0_52 = arith.constant 0 : index
    %c0_53 = arith.constant 0 : index
    %86 = vector.load %arg10[%c0_51, %c0_52, %c0_53] : memref<1x1x64xf32, #tpu.memory_space<vmem>>, vector<1x1x64xf32>
    %87 = vector.shape_cast %86 : vector<1x1x64xf32> to vector<1x64xf32>
    %c0_54 = arith.constant 0 : index
    %c0_55 = arith.constant 0 : index
    %c0_56 = arith.constant 0 : index
    %88 = vector.load %arg11[%c0_54, %c0_55, %c0_56] : memref<1x1x64xf32, #tpu.memory_space<vmem>>, vector<1x1x64xf32>
    %89 = vector.shape_cast %88 : vector<1x1x64xf32> to vector<1x64xf32>
    %cst_57 = arith.constant dense<0.000000e+00> : vector<32xf32>
    %90 = vector.multi_reduction <add>, %85, %cst_57 [1] : vector<32x64xf32> to vector<32xf32>
    %91 = vector.shape_cast %90 : vector<32xf32> to vector<32x1xf32>
    %cst_58 = arith.constant 6.400000e+01 : f32
    %92 = vector.broadcast %cst_58 : f32 to vector<32x1xf32>
    %93 = arith.divf %91, %92 : vector<32x1xf32>
    %94 = vector.broadcast %93 : vector<32x1xf32> to vector<32x64xf32>
    %95 = arith.subf %85, %94 : vector<32x64xf32>
    %96 = arith.mulf %95, %95 : vector<32x64xf32>
    %cst_59 = arith.constant dense<0.000000e+00> : vector<32xf32>
    %97 = vector.multi_reduction <add>, %96, %cst_59 [1] : vector<32x64xf32> to vector<32xf32>
    %98 = vector.shape_cast %97 : vector<32xf32> to vector<32x1xf32>
    %cst_60 = arith.constant 6.400000e+01 : f32
    %99 = vector.broadcast %cst_60 : f32 to vector<32x1xf32>
    %100 = arith.divf %98, %99 : vector<32x1xf32>
    %101 = vector.broadcast %93 : vector<32x1xf32> to vector<32x64xf32>
    %102 = arith.subf %85, %101 : vector<32x64xf32>
    %cst_61 = arith.constant 9.99999974E-6 : f32
    %103 = vector.broadcast %cst_61 : f32 to vector<32x1xf32>
    %104 = arith.addf %100, %103 : vector<32x1xf32>
    %105 = math.rsqrt %104 : vector<32x1xf32>
    %106 = vector.broadcast %105 : vector<32x1xf32> to vector<32x64xf32>
    %107 = arith.mulf %102, %106 : vector<32x64xf32>
    %108 = vector.broadcast %87 : vector<1x64xf32> to vector<32x64xf32>
    %109 = arith.mulf %107, %108 : vector<32x64xf32>
    %110 = vector.broadcast %89 : vector<1x64xf32> to vector<32x64xf32>
    %111 = arith.addf %109, %110 : vector<32x64xf32>
    %c0_62 = arith.constant 0 : index
    %c0_63 = arith.constant 0 : index
    %c0_64 = arith.constant 0 : index
    %112 = vector.load %arg12[%c0_62, %c0_63, %c0_64] : memref<1x64x256xf32, #tpu.memory_space<vmem>>, vector<1x64x256xf32>
    %113 = vector.shape_cast %112 : vector<1x64x256xf32> to vector<64x256xf32>
    %cst_65 = arith.constant dense<0.000000e+00> : vector<32x256xf32>
    %114 = tpu.matmul %111, %113, %cst_65 {dimension_numbers = #tpu.dot_dimension_numbers<[1], [0], [0], [1], [0, 0, 1, 1], [], []>} : vector<32x64xf32>, vector<64x256xf32>, vector<32x256xf32> -> vector<32x256xf32>
    %c0_66 = arith.constant 0 : index
    %c0_67 = arith.constant 0 : index
    %c0_68 = arith.constant 0 : index
    %115 = vector.load %arg13[%c0_66, %c0_67, %c0_68] : memref<1x1x256xf32, #tpu.memory_space<vmem>>, vector<1x1x256xf32>
    %116 = vector.shape_cast %115 : vector<1x1x256xf32> to vector<1x256xf32>
    %117 = vector.broadcast %116 : vector<1x256xf32> to vector<32x256xf32>
    %118 = arith.addf %114, %117 : vector<32x256xf32>
    %cst_69 = arith.constant 5.000000e-01 : f32
    %119 = vector.broadcast %cst_69 : f32 to vector<32x256xf32>
    %120 = arith.mulf %119, %118 : vector<32x256xf32>
    %cst_70 = arith.constant 0.707106769 : f32
    %121 = vector.broadcast %cst_70 : f32 to vector<32x256xf32>
    %122 = arith.mulf %118, %121 : vector<32x256xf32>
    %123 = math.erf %122 : vector<32x256xf32>
    %cst_71 = arith.constant 1.000000e+00 : f32
    %124 = vector.broadcast %cst_71 : f32 to vector<32x256xf32>
    %125 = arith.addf %124, %123 : vector<32x256xf32>
    %126 = arith.mulf %120, %125 : vector<32x256xf32>
    %c0_72 = arith.constant 0 : index
    %c0_73 = arith.constant 0 : index
    %c0_74 = arith.constant 0 : index
    %127 = vector.load %arg14[%c0_72, %c0_73, %c0_74] : memref<1x256x64xf32, #tpu.memory_space<vmem>>, vector<1x256x64xf32>
    %128 = vector.shape_cast %127 : vector<1x256x64xf32> to vector<256x64xf32>
    %cst_75 = arith.constant dense<0.000000e+00> : vector<32x64xf32>
    %129 = tpu.matmul %126, %128, %cst_75 {dimension_numbers = #tpu.dot_dimension_numbers<[1], [0], [0], [1], [0, 0, 1, 1], [], []>} : vector<32x256xf32>, vector<256x64xf32>, vector<32x64xf32> -> vector<32x64xf32>
    %c0_76 = arith.constant 0 : index
    %c0_77 = arith.constant 0 : index
    %c0_78 = arith.constant 0 : index
    %130 = vector.load %arg15[%c0_76, %c0_77, %c0_78] : memref<1x1x64xf32, #tpu.memory_space<vmem>>, vector<1x1x64xf32>
    %131 = vector.shape_cast %130 : vector<1x1x64xf32> to vector<1x64xf32>
    %132 = vector.broadcast %131 : vector<1x64xf32> to vector<32x64xf32>
    %133 = arith.addf %129, %132 : vector<32x64xf32>
    %134 = arith.addf %85, %133 : vector<32x64xf32>
    %c0_79 = arith.constant 0 : index
    %c0_80 = arith.constant 0 : index
    %135 = vector.load %arg17[%c0_79, %c0_80] : memref<32x64xf32, #tpu.memory_space<vmem>>, vector<32x64xf32>
    tpu.vector_store %arg17[%c0_79, %c0_80], %134 {strides = array<i32>} : memref<32x64xf32, #tpu.memory_space<vmem>>, vector<32x64xf32>,
    %c0_81 = arith.constant 0 : index
    %c0_82 = arith.constant 0 : index
    %c0_83 = arith.constant 0 : index
    %136 = vector.load %arg16[%c0_81, %c0_82, %c0_83] : memref<1x32x64xf32, #tpu.memory_space<vmem>>, vector<1x32x64xf32>
    %137 = vector.shape_cast %136 : vector<1x32x64xf32> to vector<32x64xf32>
    %138 = vector.shape_cast %134 : vector<32x64xf32> to vector<1x32x64xf32>
    tpu.vector_store %arg16[%c0_81, %c0_82, %c0_83], %138 {strides = array<i32>} : memref<1x32x64xf32, #tpu.memory_space<vmem>>, vector<1x32x64xf32>,
    return
  }
  func.func @transform_0(%arg0: i32) -> (i32, i32) {
    %c0_i32 = arith.constant 0 : i32
    %c0_i32_0 = arith.constant 0 : i32
    %c0_i32_1 = arith.constant 0 : i32
    return %c0_i32, %c0_i32_0 : i32, i32
  }
  func.func @transform_1(%arg0: i32) -> (i32, i32) {
    %c0_i32 = arith.constant 0 : i32
    %c0_i32_0 = arith.constant 0 : i32
    %c0_i32_1 = arith.constant 0 : i32
    return %c0_i32, %c0_i32_0 : i32, i32
  }
  func.func @transform_2(%arg0: i32) -> (i32, i32, i32) {
    %c0_i32 = arith.constant 0 : i32
    %c0_i32_0 = arith.constant 0 : i32
    %c0_i32_1 = arith.constant 0 : i32
    return %arg0, %c0_i32, %c0_i32_0 : i32, i32, i32
  }
  func.func @transform_3(%arg0: i32) -> (i32, i32, i32) {
    %c0_i32 = arith.constant 0 : i32
    %c0_i32_0 = arith.constant 0 : i32
    %c0_i32_1 = arith.constant 0 : i32
    return %arg0, %c0_i32, %c0_i32_0 : i32, i32, i32
  }
  func.func @transform_4(%arg0: i32) -> (i32, i32, i32, i32) {
    %c0_i32 = arith.constant 0 : i32
    %c0_i32_0 = arith.constant 0 : i32
    %c0_i32_1 = arith.constant 0 : i32
    %c0_i32_2 = arith.constant 0 : i32
    return %arg0, %c0_i32, %c0_i32_0, %c0_i32_1 : i32, i32, i32, i32
  }
  func.func @transform_5(%arg0: i32) -> (i32, i32, i32, i32) {
    %c0_i32 = arith.constant 0 : i32
    %c0_i32_0 = arith.constant 0 : i32
    %c0_i32_1 = arith.constant 0 : i32
    %c0_i32_2 = arith.constant 0 : i32
    return %arg0, %c0_i32, %c0_i32_0, %c0_i32_1 : i32, i32, i32, i32
  }
  func.func @transform_6(%arg0: i32) -> (i32, i32, i32, i32) {
    %c0_i32 = arith.constant 0 : i32
    %c0_i32_0 = arith.constant 0 : i32
    %c0_i32_1 = arith.constant 0 : i32
    %c0_i32_2 = arith.constant 0 : i32
    return %arg0, %c0_i32, %c0_i32_0, %c0_i32_1 : i32, i32, i32, i32
  }
  func.func @transform_7(%arg0: i32) -> (i32, i32, i32, i32) {
    %c0_i32 = arith.constant 0 : i32
    %c0_i32_0 = arith.constant 0 : i32
    %c0_i32_1 = arith.constant 0 : i32
    %c0_i32_2 = arith.constant 0 : i32
    return %arg0, %c0_i32, %c0_i32_0, %c0_i32_1 : i32, i32, i32, i32
  }
  func.func @transform_8(%arg0: i32) -> (i32, i32, i32) {
    %c0_i32 = arith.constant 0 : i32
    %c0_i32_0 = arith.constant 0 : i32
    %c0_i32_1 = arith.constant 0 : i32
    return %arg0, %c0_i32, %c0_i32_0 : i32, i32, i32
  }
  func.func @transform_9(%arg0: i32) -> (i32, i32, i32) {
    %c0_i32 = arith.constant 0 : i32
    %c0_i32_0 = arith.constant 0 : i32
    %c0_i32_1 = arith.constant 0 : i32
    return %arg0, %c0_i32, %c0_i32_0 : i32, i32, i32
  }
  func.func @transform_10(%arg0: i32) -> (i32, i32, i32) {
    %c0_i32 = arith.constant 0 : i32
    %c0_i32_0 = arith.constant 0 : i32
    %c0_i32_1 = arith.constant 0 : i32
    return %arg0, %c0_i32, %c0_i32_0 : i32, i32, i32
  }
  func.func @transform_11(%arg0: i32) -> (i32, i32, i32) {
    %c0_i32 = arith.constant 0 : i32
    %c0_i32_0 = arith.constant 0 : i32
    %c0_i32_1 = arith.constant 0 : i32
    return %arg0, %c0_i32, %c0_i32_0 : i32, i32, i32
  }
  func.func @transform_12(%arg0: i32) -> (i32, i32, i32) {
    %c0_i32 = arith.constant 0 : i32
    %c0_i32_0 = arith.constant 0 : i32
    %c0_i32_1 = arith.constant 0 : i32
    return %arg0, %c0_i32, %c0_i32_0 : i32, i32, i32
  }
  func.func @transform_13(%arg0: i32) -> (i32, i32, i32) {
    %c0_i32 = arith.constant 0 : i32
    %c0_i32_0 = arith.constant 0 : i32
    %c0_i32_1 = arith.constant 0 : i32
    return %arg0, %c0_i32, %c0_i32_0 : i32, i32, i32
  }
  func.func @transform_14(%arg0: i32) -> (i32, i32, i32) {
    %c0_i32 = arith.constant 0 : i32
    %c0_i32_0 = arith.constant 0 : i32
    %c0_i32_1 = arith.constant 0 : i32
    return %arg0, %c0_i32, %c0_i32_0 : i32, i32, i32
  }
  func.func @transform_15(%arg0: i32) -> (i32, i32, i32) {
    %c0_i32 = arith.constant 0 : i32
    %c0_i32_0 = arith.constant 0 : i32
    %c0_i32_1 = arith.constant 0 : i32
    return %arg0, %c0_i32, %c0_i32_0 : i32, i32, i32
  }
}

</mosaic_0001>

<llo_original>
// kernel: tpu_custom_call.1
$region0: #{tpu_custom_call.1}
  #allocation0 [shape = 'u32[]', space=smem, size = 0x4, offset = 0x4, fixed_abs, tag = 'smem constant byte address 0x4 - core index']
  #allocation1 [shape = 'u32[144,128]{1,0:T(1,128)}', space=vmem, size = 0x12000, scoped, tag = 'internal scratch']
  #allocation2 [shape = 'f32[32,64]{1,0:T(8,128)}', space=vmem, size = 0x4000, scoped, tag = 'scratch operand']
  %s0 = inlined_call_operand.vmem [shape: f32[32,64], index: 0, kind: input, shape index: {}]
  %s1 = inlined_call_operand.vmem [shape: f32[32,64], index: 1, kind: input, shape index: {}]
  %s2 = inlined_call_operand.vmem [shape: f32[4,1,64], index: 2, kind: input, shape index: {}]
  %s3 = inlined_call_operand.vmem [shape: f32[4,1,64], index: 3, kind: input, shape index: {}]
  %s4 = inlined_call_operand.vmem [shape: f32[4,4,64,16], index: 4, kind: input, shape index: {}]
  %s5 = inlined_call_operand.vmem [shape: f32[4,4,64,16], index: 5, kind: input, shape index: {}]
  %s6 = inlined_call_operand.vmem [shape: f32[4,4,64,16], index: 6, kind: input, shape index: {}]
  %s7 = inlined_call_operand.vmem [shape: f32[4,4,16,64], index: 7, kind: input, shape index: {}]
  %s8 = inlined_call_operand.vmem [shape: f32[4,1,64], index: 8, kind: input, shape index: {}]
  %s9 = inlined_call_operand.vmem [shape: f32[4,1,64], index: 9, kind: input, shape index: {}]
  %s10 = inlined_call_operand.vmem [shape: f32[4,1,64], index: 10, kind: input, shape index: {}]
  %s11 = inlined_call_operand.vmem [shape: f32[4,64,256], index: 11, kind: input, shape index: {}]
  %s12 = inlined_call_operand.vmem [shape: f32[4,1,256], index: 12, kind: input, shape index: {}]
  %s13 = inlined_call_operand.vmem [shape: f32[4,256,64], index: 13, kind: input, shape index: {}]
  %s14 = inlined_call_operand.vmem [shape: f32[4,1,64], index: 14, kind: input, shape index: {}]
  %s15 = inlined_call_operand.hbm [shape: f32[4,32,64], index: 15, kind: output, shape index: {}]
  %s16 = sld [smem:[#allocation0]]
  $region97: #{tpu_custom_call.1} parent=0
    _
  %s18 = ssub.s32 1, %s16
  %s19 = scalar_select 0, %s18, %s16
  $region1: #{tpu_custom_call.1} parent=0
    #allocation3 [shape = 'u8[32768]{0}', space=vmem, size = 0x8000, scoped, tag = 'output window, operand 0']
    #allocation4 [shape = 's32[2]{0}', space=sflag, size = 0x8, scoped, tag = 'scoped memory for tpu_custom_call.1']
    %20 = vsyncpa [#allocation4], 0
    %s21 = scalar_lea.sflag [#allocation4], 1
    %22 = vsyncpa %s21, 0
    loop: start=0, step=1, limit=6
    $region2: #{tpu_custom_call.1} parent=1 // loop_pre_header
      _
    $region3: #{tpu_custom_call.1} parent=1 // loop_header
      %s24 = sphi 0, %s28
      %p25 = scmp.ge.s32.totalorder %s24, 6
      %s32 = sphi 0, %s32
      %s34 = sphi 0, %s32
      %s35 = sphi 0, %s34
      %s49 = sphi 0, %s35
      %s53 = sphi 0, %s53
      %s55 = sphi 0, %s53
      %s56 = sphi 0, %s55
      %s70 = sphi 0, %s56
      %s76 = sphi 0, %s78
      %s79 = sphi 0, %s76
      %s80 = sphi 0, %s79
      %s96 = sphi 0, %s80
      %s102 = sphi 0, %s104
      %s105 = sphi 0, %s102
      %s106 = sphi 0, %s105
      %s122 = sphi 0, %s106
      %s128 = sphi 0, %s130
      %s131 = sphi 0, %s128
      %s132 = sphi 0, %s131
      %s148 = sphi 0, %s132
      %s154 = sphi 0, %s156
      %s157 = sphi 0, %s154
      %s158 = sphi 0, %s157
      %s174 = sphi 0, %s158
      %s180 = sphi 0, %s182
      %s183 = sphi 0, %s180
      %s184 = sphi 0, %s183
      %s200 = sphi 0, %s184
      %s206 = sphi 0, %s208
      %s209 = sphi 0, %s206
      %s210 = sphi 0, %s209
      %s226 = sphi 0, %s210
      %s232 = sphi 0, %s234
      %s235 = sphi 0, %s232
      %s236 = sphi 0, %s235
      %s252 = sphi 0, %s236
      %s258 = sphi 0, %s260
      %s261 = sphi 0, %s258
      %s262 = sphi 0, %s261
      %s278 = sphi 0, %s262
      %s284 = sphi 0, %s286
      %s287 = sphi 0, %s284
      %s288 = sphi 0, %s287
      %s304 = sphi 0, %s288
      %s310 = sphi 0, %s312
      %s313 = sphi 0, %s310
      %s314 = sphi 0, %s313
      %s330 = sphi 0, %s314
      %s336 = sphi 0, %s338
      %s339 = sphi 0, %s336
      %s340 = sphi 0, %s339
      %s356 = sphi 0, %s340
      %s362 = sphi 0, %s364
      %s365 = sphi 0, %s362
      %s366 = sphi 0, %s365
      %s382 = sphi 0, %s366
      %s388 = sphi 0, %s390
      %s391 = sphi 0, %s388
      %s392 = sphi 0, %s391
      %s408 = sphi 0, %s392
      %s414 = sphi 0, %s416
      %s417 = sphi 0, %s414
      %s418 = sphi 0, %s417
      %s434 = sphi 0, %s418
    $region4: #{tpu_custom_call.1} parent=1 // loop_header_branch
      %27 = sbr.rel (%p25) target = $region8
    $region5: #{tpu_custom_call.1} parent=1 // loop_body
      %s29 = ssub.s32 %s24, 1
      %s30 = ssub.s32 %s24, 2
      %s31 = sadd.s32 %s24, 1
      %s33 = sadd.s32 %s32, 1
      %p36 = scmp.eq.s32.totalorder %s24, 3
      %p37 = scmp.ne.s32.totalorder %s32, %s34
      %p38 = scmp.eq.s32.totalorder %s24, 0
      %p39 = por %p37, %p38
      %p40 = scmp.ne.s32.totalorder %s32, %s34
      %p41 = scmp.eq.s32.totalorder %s29, 3
      %p42 = por %p40, %p41
      %p43 = scmp.ne.s32.totalorder %s34, %s35
      %p44 = scmp.eq.s32.totalorder %s29, 0
      %p45 = por %p43, %p44
      %p46 = scmp.ne.s32.totalorder %s34, %s35
      %p47 = scmp.eq.s32.totalorder %s30, 3
      %p48 = por %p46, %p47
      %p50 = scmp.ne.s32.totalorder %s35, %s49
      %p51 = scmp.eq.s32.totalorder %s30, 0
      %p52 = por %p50, %p51
      %s54 = sadd.s32 %s53, 1
      %p57 = scmp.eq.s32.totalorder %s24, 3
      %p58 = scmp.ne.s32.totalorder %s53, %s55
      %p59 = scmp.eq.s32.totalorder %s24, 0
      %p60 = por %p58, %p59
      %p61 = scmp.ne.s32.totalorder %s53, %s55
      %p62 = scmp.eq.s32.totalorder %s29, 3
      %p63 = por %p61, %p62
      %p64 = scmp.ne.s32.totalorder %s55, %s56
      %p65 = scmp.eq.s32.totalorder %s29, 0
      %p66 = por %p64, %p65
      %p67 = scmp.ne.s32.totalorder %s55, %s56
      %p68 = scmp.eq.s32.totalorder %s30, 3
      %p69 = por %p67, %p68
      %p71 = scmp.ne.s32.totalorder %s56, %s70
      %p72 = scmp.eq.s32.totalorder %s30, 0
      %p73 = por %p71, %p72
      %s74 = ssub.s32 %s24, %s31
      %p75 = scmp.eq.s32.totalorder %s74, 0
      %s77 = sadd.s32 %s76, 1
      %s78 = scalar_select %p75, %s76, %s77
      %p81 = pneg %p75
      %p82 = scmp.eq.s32.totalorder %s24, 3
      %p83 = por %p81, %p82
      %p84 = scmp.ne.s32.totalorder %s76, %s79
      %p85 = scmp.eq.s32.totalorder %s24, 0
      %p86 = por %p84, %p85
      %p87 = scmp.ne.s32.totalorder %s76, %s79
      %p88 = scmp.eq.s32.totalorder %s29, 3
      %p89 = por %p87, %p88
      %p90 = scmp.ne.s32.totalorder %s79, %s80
      %p91 = scmp.eq.s32.totalorder %s29, 0
      %p92 = por %p90, %p91
      %p93 = scmp.ne.s32.totalorder %s79, %s80
      %p94 = scmp.eq.s32.totalorder %s30, 3
      %p95 = por %p93, %p94
      %p97 = scmp.ne.s32.totalorder %s80, %s96
      %p98 = scmp.eq.s32.totalorder %s30, 0
      %p99 = por %p97, %p98
      %s100 = ssub.s32 %s24, %s31
      %p101 = scmp.eq.s32.totalorder %s100, 0
      %s103 = sadd.s32 %s102, 1
      %s104 = scalar_select %p101, %s102, %s103
      %p107 = pneg %p101
      %p108 = scmp.eq.s32.totalorder %s24, 3
      %p109 = por %p107, %p108
      %p110 = scmp.ne.s32.totalorder %s102, %s105
      %p111 = scmp.eq.s32.totalorder %s24, 0
      %p112 = por %p110, %p111
      %p113 = scmp.ne.s32.totalorder %s102, %s105
      %p114 = scmp.eq.s32.totalorder %s29, 3
      %p115 = por %p113, %p114
      %p116 = scmp.ne.s32.totalorder %s105, %s106
      %p117 = scmp.eq.s32.totalorder %s29, 0
      %p118 = por %p116, %p117
      %p119 = scmp.ne.s32.totalorder %s105, %s106
      %p120 = scmp.eq.s32.totalorder %s30, 3
      %p121 = por %p119, %p120
      %p123 = scmp.ne.s32.totalorder %s106, %s122
      %p124 = scmp.eq.s32.totalorder %s30, 0
      %p125 = por %p123, %p124
      %s126 = ssub.s32 %s24, %s31
      %p127 = scmp.eq.s32.totalorder %s126, 0
      %s129 = sadd.s32 %s128, 1
      %s130 = scalar_select %p127, %s128, %s129
      %p133 = pneg %p127
      %p134 = scmp.eq.s32.totalorder %s24, 3
      %p135 = por %p133, %p134
      %p136 = scmp.ne.s32.totalorder %s128, %s131
      %p137 = scmp.eq.s32.totalorder %s24, 0
      %p138 = por %p136, %p137
      %p139 = scmp.ne.s32.totalorder %s128, %s131
      %p140 = scmp.eq.s32.totalorder %s29, 3
      %p141 = por %p139, %p140
      %p142 = scmp.ne.s32.totalorder %s131, %s132
      %p143 = scmp.eq.s32.totalorder %s29, 0
      %p144 = por %p142, %p143
      %p145 = scmp.ne.s32.totalorder %s131, %s132
      %p146 = scmp.eq.s32.totalorder %s30, 3
      %p147 = por %p145, %p146
      %p149 = scmp.ne.s32.totalorder %s132, %s148
      %p150 = scmp.eq.s32.totalorder %s30, 0
      %p151 = por %p149, %p150
      %s152 = ssub.s32 %s24, %s31
      %p153 = scmp.eq.s32.totalorder %s152, 0
      %s155 = sadd.s32 %s154, 1
      %s156 = scalar_select %p153, %s154, %s155
      %p159 = pneg %p153
      %p160 = scmp.eq.s32.totalorder %s24, 3
      %p161 = por %p159, %p160
      %p162 = scmp.ne.s32.totalorder %s154, %s157
      %p163 = scmp.eq.s32.totalorder %s24, 0
      %p164 = por %p162, %p163
      %p165 = scmp.ne.s32.totalorder %s154, %s157
      %p166 = scmp.eq.s32.totalorder %s29, 3
      %p167 = por %p165, %p166
      %p168 = scmp.ne.s32.totalorder %s157, %s158
      %p169 = scmp.eq.s32.totalorder %s29, 0
      %p170 = por %p168, %p169
      %p171 = scmp.ne.s32.totalorder %s157, %s158
      %p172 = scmp.eq.s32.totalorder %s30, 3
      %p173 = por %p171, %p172
      %p175 = scmp.ne.s32.totalorder %s158, %s174
      %p176 = scmp.eq.s32.totalorder %s30, 0
      %p177 = por %p175, %p176
      %s178 = ssub.s32 %s24, %s31
      %p179 = scmp.eq.s32.totalorder %s178, 0
      %s181 = sadd.s32 %s180, 1
      %s182 = scalar_select %p179, %s180, %s181
      %p185 = pneg %p179
      %p186 = scmp.eq.s32.totalorder %s24, 3
      %p187 = por %p185, %p186
      %p188 = scmp.ne.s32.totalorder %s180, %s183
      %p189 = scmp.eq.s32.totalorder %s24, 0
      %p190 = por %p188, %p189
      %p191 = scmp.ne.s32.totalorder %s180, %s183
      %p192 = scmp.eq.s32.totalorder %s29, 3
      %p193 = por %p191, %p192
      %p194 = scmp.ne.s32.totalorder %s183, %s184
      %p195 = scmp.eq.s32.totalorder %s29, 0
      %p196 = por %p194, %p195
      %p197 = scmp.ne.s32.totalorder %s183, %s184
      %p198 = scmp.eq.s32.totalorder %s30, 3
      %p199 = por %p197, %p198
      %p201 = scmp.ne.s32.totalorder %s184, %s200
      %p202 = scmp.eq.s32.totalorder %s30, 0
      %p203 = por %p201, %p202
      %s204 = ssub.s32 %s24, %s31
      %p205 = scmp.eq.s32.totalorder %s204, 0
      %s207 = sadd.s32 %s206, 1
      %s208 = scalar_select %p205, %s206, %s207
      %p211 = pneg %p205
      %p212 = scmp.eq.s32.totalorder %s24, 3
      %p213 = por %p211, %p212
      %p214 = scmp.ne.s32.totalorder %s206, %s209
      %p215 = scmp.eq.s32.totalorder %s24, 0
      %p216 = por %p214, %p215
      %p217 = scmp.ne.s32.totalorder %s206, %s209
      %p218 = scmp.eq.s32.totalorder %s29, 3
      %p219 = por %p217, %p218
      %p220 = scmp.ne.s32.totalorder %s209, %s210
      %p221 = scmp.eq.s32.totalorder %s29, 0
      %p222 = por %p220, %p221
      %p223 = scmp.ne.s32.totalorder %s209, %s210
      %p224 = scmp.eq.s32.totalorder %s30, 3
      %p225 = por %p223, %p224
      %p227 = scmp.ne.s32.totalorder %s210, %s226
      %p228 = scmp.eq.s32.totalorder %s30, 0
      %p229 = por %p227, %p228
      %s230 = ssub.s32 %s24, %s31
      %p231 = scmp.eq.s32.totalorder %s230, 0
      %s233 = sadd.s32 %s232, 1
      %s234 = scalar_select %p231, %s232, %s233
      %p237 = pneg %p231
      %p238 = scmp.eq.s32.totalorder %s24, 3
      %p239 = por %p237, %p238
      %p240 = scmp.ne.s32.totalorder %s232, %s235
      %p241 = scmp.eq.s32.totalorder %s24, 0
      %p242 = por %p240, %p241
      %p243 = scmp.ne.s32.totalorder %s232, %s235
      %p244 = scmp.eq.s32.totalorder %s29, 3
      %p245 = por %p243, %p244
      %p246 = scmp.ne.s32.totalorder %s235, %s236
      %p247 = scmp.eq.s32.totalorder %s29, 0
      %p248 = por %p246, %p247
      %p249 = scmp.ne.s32.totalorder %s235, %s236
      %p250 = scmp.eq.s32.totalorder %s30, 3
      %p251 = por %p249, %p250
      %p253 = scmp.ne.s32.totalorder %s236, %s252
      %p254 = scmp.eq.s32.totalorder %s30, 0
      %p255 = por %p253, %p254
      %s256 = ssub.s32 %s24, %s31
      %p257 = scmp.eq.s32.totalorder %s256, 0
      %s259 = sadd.s32 %s258, 1
      %s260 = scalar_select %p257, %s258, %s259
      %p263 = pneg %p257
      %p264 = scmp.eq.s32.totalorder %s24, 3
      %p265 = por %p263, %p264
      %p266 = scmp.ne.s32.totalorder %s258, %s261
      %p267 = scmp.eq.s32.totalorder %s24, 0
      %p268 = por %p266, %p267
      %p269 = scmp.ne.s32.totalorder %s258, %s261
      %p270 = scmp.eq.s32.totalorder %s29, 3
      %p271 = por %p269, %p270
      %p272 = scmp.ne.s32.totalorder %s261, %s262
      %p273 = scmp.eq.s32.totalorder %s29, 0
      %p274 = por %p272, %p273
      %p275 = scmp.ne.s32.totalorder %s261, %s262
      %p276 = scmp.eq.s32.totalorder %s30, 3
      %p277 = por %p275, %p276
      %p279 = scmp.ne.s32.totalorder %s262, %s278
      %p280 = scmp.eq.s32.totalorder %s30, 0
      %p281 = por %p279, %p280
      %s282 = ssub.s32 %s24, %s31
      %p283 = scmp.eq.s32.totalorder %s282, 0
      %s285 = sadd.s32 %s284, 1
      %s286 = scalar_select %p283, %s284, %s285
      %p289 = pneg %p283
      %p290 = scmp.eq.s32.totalorder %s24, 3
      %p291 = por %p289, %p290
      %p292 = scmp.ne.s32.totalorder %s284, %s287
      %p293 = scmp.eq.s32.totalorder %s24, 0
      %p294 = por %p292, %p293
      %p295 = scmp.ne.s32.totalorder %s284, %s287
      %p296 = scmp.eq.s32.totalorder %s29, 3
      %p297 = por %p295, %p296
      %p298 = scmp.ne.s32.totalorder %s287, %s288
      %p299 = scmp.eq.s32.totalorder %s29, 0
      %p300 = por %p298, %p299
      %p301 = scmp.ne.s32.totalorder %s287, %s288
      %p302 = scmp.eq.s32.totalorder %s30, 3
      %p303 = por %p301, %p302
      %p305 = scmp.ne.s32.totalorder %s288, %s304
      %p306 = scmp.eq.s32.totalorder %s30, 0
      %p307 = por %p305, %p306
      %s308 = ssub.s32 %s24, %s31
      %p309 = scmp.eq.s32.totalorder %s308, 0
      %s311 = sadd.s32 %s310, 1
      %s312 = scalar_select %p309, %s310, %s311
      %p315 = pneg %p309
      %p316 = scmp.eq.s32.totalorder %s24, 3
      %p317 = por %p315, %p316
      %p318 = scmp.ne.s32.totalorder %s310, %s313
      %p319 = scmp.eq.s32.totalorder %s24, 0
      %p320 = por %p318, %p319
      %p321 = scmp.ne.s32.totalorder %s310, %s313
      %p322 = scmp.eq.s32.totalorder %s29, 3
      %p323 = por %p321, %p322
      %p324 = scmp.ne.s32.totalorder %s313, %s314
      %p325 = scmp.eq.s32.totalorder %s29, 0
      %p326 = por %p324, %p325
      %p327 = scmp.ne.s32.totalorder %s313, %s314
      %p328 = scmp.eq.s32.totalorder %s30, 3
      %p329 = por %p327, %p328
      %p331 = scmp.ne.s32.totalorder %s314, %s330
      %p332 = scmp.eq.s32.totalorder %s30, 0
      %p333 = por %p331, %p332
      %s334 = ssub.s32 %s24, %s31
      %p335 = scmp.eq.s32.totalorder %s334, 0
      %s337 = sadd.s32 %s336, 1
      %s338 = scalar_select %p335, %s336, %s337
      %p341 = pneg %p335
      %p342 = scmp.eq.s32.totalorder %s24, 3
      %p343 = por %p341, %p342
      %p344 = scmp.ne.s32.totalorder %s336, %s339
      %p345 = scmp.eq.s32.totalorder %s24, 0
      %p346 = por %p344, %p345
      %p347 = scmp.ne.s32.totalorder %s336, %s339
      %p348 = scmp.eq.s32.totalorder %s29, 3
      %p349 = por %p347, %p348
      %p350 = scmp.ne.s32.totalorder %s339, %s340
      %p351 = scmp.eq.s32.totalorder %s29, 0
      %p352 = por %p350, %p351
      %p353 = scmp.ne.s32.totalorder %s339, %s340
      %p354 = scmp.eq.s32.totalorder %s30, 3
      %p355 = por %p353, %p354
      %p357 = scmp.ne.s32.totalorder %s340, %s356
      %p358 = scmp.eq.s32.totalorder %s30, 0
      %p359 = por %p357, %p358
      %s360 = ssub.s32 %s24, %s31
      %p361 = scmp.eq.s32.totalorder %s360, 0
      %s363 = sadd.s32 %s362, 1
      %s364 = scalar_select %p361, %s362, %s363
      %p367 = pneg %p361
      %p368 = scmp.eq.s32.totalorder %s24, 3
      %p369 = por %p367, %p368
      %p370 = scmp.ne.s32.totalorder %s362, %s365
      %p371 = scmp.eq.s32.totalorder %s24, 0
      %p372 = por %p370, %p371
      %p373 = scmp.ne.s32.totalorder %s362, %s365
      %p374 = scmp.eq.s32.totalorder %s29, 3
      %p375 = por %p373, %p374
      %p376 = scmp.ne.s32.totalorder %s365, %s366
      %p377 = scmp.eq.s32.totalorder %s29, 0
      %p378 = por %p376, %p377
      %p379 = scmp.ne.s32.totalorder %s365, %s366
      %p380 = scmp.eq.s32.totalorder %s30, 3
      %p381 = por %p379, %p380
      %p383 = scmp.ne.s32.totalorder %s366, %s382
      %p384 = scmp.eq.s32.totalorder %s30, 0
      %p385 = por %p383, %p384
      %s386 = ssub.s32 %s24, %s31
      %p387 = scmp.eq.s32.totalorder %s386, 0
      %s389 = sadd.s32 %s388, 1
      %s390 = scalar_select %p387, %s388, %s389
      %p393 = pneg %p387
      %p394 = scmp.eq.s32.totalorder %s24, 3
      %p395 = por %p393, %p394
      %p396 = scmp.ne.s32.totalorder %s388, %s391
      %p397 = scmp.eq.s32.totalorder %s24, 0
      %p398 = por %p396, %p397
      %p399 = scmp.ne.s32.totalorder %s388, %s391
      %p400 = scmp.eq.s32.totalorder %s29, 3
      %p401 = por %p399, %p400
      %p402 = scmp.ne.s32.totalorder %s391, %s392
      %p403 = scmp.eq.s32.totalorder %s29, 0
      %p404 = por %p402, %p403
      %p405 = scmp.ne.s32.totalorder %s391, %s392
      %p406 = scmp.eq.s32.totalorder %s30, 3
      %p407 = por %p405, %p406
      %p409 = scmp.ne.s32.totalorder %s392, %s408
      %p410 = scmp.eq.s32.totalorder %s30, 0
      %p411 = por %p409, %p410
      %s412 = ssub.s32 %s24, %s31
      %p413 = scmp.eq.s32.totalorder %s412, 0
      %s415 = sadd.s32 %s414, 1
      %s416 = scalar_select %p413, %s414, %s415
      %p419 = pneg %p413
      %p420 = scmp.eq.s32.totalorder %s24, 3
      %p421 = por %p419, %p420
      %p422 = scmp.ne.s32.totalorder %s414, %s417
      %p423 = scmp.eq.s32.totalorder %s24, 0
      %p424 = por %p422, %p423
      %p425 = scmp.ne.s32.totalorder %s414, %s417
      %p426 = scmp.eq.s32.totalorder %s29, 3
      %p427 = por %p425, %p426
      %p428 = scmp.ne.s32.totalorder %s417, %s418
      %p429 = scmp.eq.s32.totalorder %s29, 0
      %p430 = por %p428, %p429
      %p431 = scmp.ne.s32.totalorder %s417, %s418
      %p432 = scmp.eq.s32.totalorder %s30, 3
      %p433 = por %p431, %p432
      %p435 = scmp.ne.s32.totalorder %s418, %s434
      %p436 = scmp.eq.s32.totalorder %s30, 0
      %p437 = por %p435, %p436
      %p438 = scmp.le.s32.totalorder 1, %s24
      %p439 = scmp.lt.s32.totalorder %s24, 5
      %p440 = pnand %p438, %p439
      %p441 = pneg %p440
      // Predicated region
      $region9: #{tpu_custom_call.1} parent=5 // pred_check
        _
      $region10: #{tpu_custom_call.1} parent=5 // pred_check_branch
        %443 = sbr.rel (%p440) target = $region12
      $region11: #{tpu_custom_call.1} parent=5 // pred_region
        %s444 = ssub.s32 %s24, 1
        // Predicated region
        $region13: #{tpu_custom_call.1} parent=11 // pred_check
          %p445 = pneg %p45
        $region14: #{tpu_custom_call.1} parent=11 // pred_check_branch
          %447 = sbr.rel (%p445) target = $region16
        $region15: #{tpu_custom_call.1} parent=11 // pred_region
          _
        $region16: #{tpu_custom_call.1} parent=11 // pred_fallthru
          _
        // Predicated region
        $region17: #{tpu_custom_call.1} parent=11 // pred_check
          %p448 = pneg %p66
        $region18: #{tpu_custom_call.1} parent=11 // pred_check_branch
          %450 = sbr.rel (%p448) target = $region20
        $region19: #{tpu_custom_call.1} parent=11 // pred_region
          _
        $region20: #{tpu_custom_call.1} parent=11 // pred_fallthru
          _
      $region12: #{tpu_custom_call.1} parent=5 // pred_fallthru
        _
      %p451 = scmp.lt.s32.totalorder %s24, 4
      // Predicated region
      $region21: #{tpu_custom_call.1} parent=5 // pred_check
        %p452 = pneg %p451
      $region22: #{tpu_custom_call.1} parent=5 // pred_check_branch
        %454 = sbr.rel (%p452) target = $region24
      $region23: #{tpu_custom_call.1} parent=5 // pred_region
        // Predicated region
        $region25: #{tpu_custom_call.1} parent=23 // pred_check
          %p455 = pneg %p86
        $region26: #{tpu_custom_call.1} parent=23 // pred_check_branch
          %457 = sbr.rel (%p455) target = $region28
        $region27: #{tpu_custom_call.1} parent=23 // pred_region
          %p458 = scmp.lt.s32.totalorder %s24, 3
          %s459 = scalar_select %p458, %s24, 3
          %s460 = scalar_lea.vmem %s2, %s459
        $region28: #{tpu_custom_call.1} parent=23 // pred_fallthru
          _
        // Predicated region
        $region29: #{tpu_custom_call.1} parent=23 // pred_check
          %p461 = pneg %p112
        $region30: #{tpu_custom_call.1} parent=23 // pred_check_branch
          %463 = sbr.rel (%p461) target = $region32
        $region31: #{tpu_custom_call.1} parent=23 // pred_region
          %p464 = scmp.lt.s32.totalorder %s24, 3
          %s465 = scalar_select %p464, %s24, 3
          %s466 = scalar_lea.vmem %s3, %s465
        $region32: #{tpu_custom_call.1} parent=23 // pred_fallthru
          _
        // Predicated region
        $region33: #{tpu_custom_call.1} parent=23 // pred_check
          %p467 = pneg %p138
        $region34: #{tpu_custom_call.1} parent=23 // pred_check_branch
          %469 = sbr.rel (%p467) target = $region36
        $region35: #{tpu_custom_call.1} parent=23 // pred_region
          %p470 = scmp.lt.s32.totalorder %s24, 3
          %s471 = scalar_select %p470, %s24, 3
          %s472 = smul.addr %s471, 32
          %s473 = smul.addr %s472, 8
          %s474 = scalar_lea.vmem %s4, %s473
        $region36: #{tpu_custom_call.1} parent=23 // pred_fallthru
          _
        // Predicated region
        $region37: #{tpu_custom_call.1} parent=23 // pred_check
          %p475 = pneg %p164
        $region38: #{tpu_custom_call.1} parent=23 // pred_check_branch
          %477 = sbr.rel (%p475) target = $region40
        $region39: #{tpu_custom_call.1} parent=23 // pred_region
          %p478 = scmp.lt.s32.totalorder %s24, 3
          %s479 = scalar_select %p478, %s24, 3
          %s480 = smul.addr %s479, 32
          %s481 = smul.addr %s480, 8
          %s482 = scalar_lea.vmem %s5, %s481
        $region40: #{tpu_custom_call.1} parent=23 // pred_fallthru
          _
        // Predicated region
        $region41: #{tpu_custom_call.1} parent=23 // pred_check
          %p483 = pneg %p190
        $region42: #{tpu_custom_call.1} parent=23 // pred_check_branch
          %485 = sbr.rel (%p483) target = $region44
        $region43: #{tpu_custom_call.1} parent=23 // pred_region
          %p486 = scmp.lt.s32.totalorder %s24, 3
          %s487 = scalar_select %p486, %s24, 3
          %s488 = smul.addr %s487, 32
          %s489 = smul.addr %s488, 8
          %s490 = scalar_lea.vmem %s6, %s489
        $region44: #{tpu_custom_call.1} parent=23 // pred_fallthru
          _
        // Predicated region
        $region45: #{tpu_custom_call.1} parent=23 // pred_check
          %p491 = pneg %p216
        $region46: #{tpu_custom_call.1} parent=23 // pred_check_branch
          %493 = sbr.rel (%p491) target = $region48
        $region47: #{tpu_custom_call.1} parent=23 // pred_region
          %p494 = scmp.lt.s32.totalorder %s24, 3
          %s495 = scalar_select %p494, %s24, 3
          %s496 = smul.addr %s495, 8
          %s497 = smul.addr %s496, 8
          %s498 = scalar_lea.vmem %s7, %s497
        $region48: #{tpu_custom_call.1} parent=23 // pred_fallthru
          _
        // Predicated region
        $region49: #{tpu_custom_call.1} parent=23 // pred_check
          %p499 = pneg %p242
        $region50: #{tpu_custom_call.1} parent=23 // pred_check_branch
          %501 = sbr.rel (%p499) target = $region52
        $region51: #{tpu_custom_call.1} parent=23 // pred_region
          %p502 = scmp.lt.s32.totalorder %s24, 3
          %s503 = scalar_select %p502, %s24, 3
          %s504 = scalar_lea.vmem %s8, %s503
        $region52: #{tpu_custom_call.1} parent=23 // pred_fallthru
          _
        // Predicated region
        $region53: #{tpu_custom_call.1} parent=23 // pred_check
          %p505 = pneg %p268
        $region54: #{tpu_custom_call.1} parent=23 // pred_check_branch
          %507 = sbr.rel (%p505) target = $region56
        $region55: #{tpu_custom_call.1} parent=23 // pred_region
          %p508 = scmp.lt.s32.totalorder %s24, 3
          %s509 = scalar_select %p508, %s24, 3
          %s510 = scalar_lea.vmem %s9, %s509
        $region56: #{tpu_custom_call.1} parent=23 // pred_fallthru
          _
        // Predicated region
        $region57: #{tpu_custom_call.1} parent=23 // pred_check
          %p511 = pneg %p294
        $region58: #{tpu_custom_call.1} parent=23 // pred_check_branch
          %513 = sbr.rel (%p511) target = $region60
        $region59: #{tpu_custom_call.1} parent=23 // pred_region
          %p514 = scmp.lt.s32.totalorder %s24, 3
          %s515 = scalar_select %p514, %s24, 3
          %s516 = scalar_lea.vmem %s10, %s515
        $region60: #{tpu_custom_call.1} parent=23 // pred_fallthru
          _
        // Predicated region
        $region61: #{tpu_custom_call.1} parent=23 // pred_check
          %p517 = pneg %p320
        $region62: #{tpu_custom_call.1} parent=23 // pred_check_branch
          %519 = sbr.rel (%p517) target = $region64
        $region63: #{tpu_custom_call.1} parent=23 // pred_region
          %p520 = scmp.lt.s32.totalorder %s24, 3
          %s521 = scalar_select %p520, %s24, 3
          %s522 = smul.addr %s521, 16
          %s523 = smul.addr %s522, 8
          %s524 = scalar_lea.vmem %s11, %s523
        $region64: #{tpu_custom_call.1} parent=23 // pred_fallthru
          _
        // Predicated region
        $region65: #{tpu_custom_call.1} parent=23 // pred_check
          %p525 = pneg %p346
        $region66: #{tpu_custom_call.1} parent=23 // pred_check_branch
          %527 = sbr.rel (%p525) target = $region68
        $region67: #{tpu_custom_call.1} parent=23 // pred_region
          %p528 = scmp.lt.s32.totalorder %s24, 3
          %s529 = scalar_select %p528, %s24, 3
          %s530 = smul.addr %s529, 2
          %s531 = scalar_lea.vmem %s12, %s530
        $region68: #{tpu_custom_call.1} parent=23 // pred_fallthru
          _
        // Predicated region
        $region69: #{tpu_custom_call.1} parent=23 // pred_check
          %p532 = pneg %p372
        $region70: #{tpu_custom_call.1} parent=23 // pred_check_branch
          %534 = sbr.rel (%p532) target = $region72
        $region71: #{tpu_custom_call.1} parent=23 // pred_region
          %p535 = scmp.lt.s32.totalorder %s24, 3
          %s536 = scalar_select %p535, %s24, 3
          %s537 = smul.addr %s536, 32
          %s538 = smul.addr %s537, 8
          %s539 = scalar_lea.vmem %s13, %s538
        $region72: #{tpu_custom_call.1} parent=23 // pred_fallthru
          _
        // Predicated region
        $region73: #{tpu_custom_call.1} parent=23 // pred_check
          %p540 = pneg %p398
        $region74: #{tpu_custom_call.1} parent=23 // pred_check_branch
          %542 = sbr.rel (%p540) target = $region76
        $region75: #{tpu_custom_call.1} parent=23 // pred_region
          %p543 = scmp.lt.s32.totalorder %s24, 3
          %s544 = scalar_select %p543, %s24, 3
          %s545 = scalar_lea.vmem %s14, %s544
        $region76: #{tpu_custom_call.1} parent=23 // pred_fallthru
          _
      $region24: #{tpu_custom_call.1} parent=5 // pred_fallthru
        _
      %p546 = scmp.le.s32.totalorder 1, %s24
      %p547 = scmp.lt.s32.totalorder %s24, 5
      %p548 = pnand %p546, %p547
      %p549 = pneg %p548
      // Predicated region
      $region77: #{tpu_custom_call.1} parent=5 // pred_check
        _
      $region78: #{tpu_custom_call.1} parent=5 // pred_check_branch
        %551 = sbr.rel (%p548) target = $region80
      $region79: #{tpu_custom_call.1} parent=5 // pred_region
        %s552 = ssub.s32 %s24, 1
        %p553 = pneg %p45
        %p554 = pneg %p42
        %p555 = pneg %p66
        %p556 = pneg %p63
        %p557 = scmp.lt.s32.totalorder %s29, 3
        %s558 = scalar_select %p557, %s29, 3
        %s559 = scalar_lea.vmem %s2, %s558
        %p560 = pneg %p92
        %p561 = pneg %p89
        %p562 = scmp.lt.s32.totalorder %s29, 3
        %s563 = scalar_select %p562, %s29, 3
        %s564 = scalar_lea.vmem %s3, %s563
        %p565 = pneg %p118
        %p566 = pneg %p115
        %p567 = scmp.lt.s32.totalorder %s29, 3
        %s568 = scalar_select %p567, %s29, 3
        %s569 = smul.addr %s568, 32
        %s570 = smul.addr %s569, 8
        %s571 = scalar_lea.vmem %s4, %s570
        %p572 = pneg %p144
        %p573 = pneg %p141
        %p574 = scmp.lt.s32.totalorder %s29, 3
        %s575 = scalar_select %p574, %s29, 3
        %s576 = smul.addr %s575, 32
        %s577 = smul.addr %s576, 8
        %s578 = scalar_lea.vmem %s5, %s577
        %p579 = pneg %p170
        %p580 = pneg %p167
        %p581 = scmp.lt.s32.totalorder %s29, 3
        %s582 = scalar_select %p581, %s29, 3
        %s583 = smul.addr %s582, 32
        %s584 = smul.addr %s583, 8
        %s585 = scalar_lea.vmem %s6, %s584
        %p586 = pneg %p196
        %p587 = pneg %p193
        %p588 = scmp.lt.s32.totalorder %s29, 3
        %s589 = scalar_select %p588, %s29, 3
        %s590 = smul.addr %s589, 8
        %s591 = smul.addr %s590, 8
        %s592 = scalar_lea.vmem %s7, %s591
        %p593 = pneg %p222
        %p594 = pneg %p219
        %p595 = scmp.lt.s32.totalorder %s29, 3
        %s596 = scalar_select %p595, %s29, 3
        %s597 = scalar_lea.vmem %s8, %s596
        %p598 = pneg %p248
        %p599 = pneg %p245
        %p600 = scmp.lt.s32.totalorder %s29, 3
        %s601 = scalar_select %p600, %s29, 3
        %s602 = scalar_lea.vmem %s9, %s601
        %p603 = pneg %p274
        %p604 = pneg %p271
        %p605 = scmp.lt.s32.totalorder %s29, 3
        %s606 = scalar_select %p605, %s29, 3
        %s607 = scalar_lea.vmem %s10, %s606
        %p608 = pneg %p300
        %p609 = pneg %p297
        %p610 = scmp.lt.s32.totalorder %s29, 3
        %s611 = scalar_select %p610, %s29, 3
        %s612 = smul.addr %s611, 16
        %s613 = smul.addr %s612, 8
        %s614 = scalar_lea.vmem %s11, %s613
        %p615 = pneg %p326
        %p616 = pneg %p323
        %p617 = scmp.lt.s32.totalorder %s29, 3
        %s618 = scalar_select %p617, %s29, 3
        %s619 = smul.addr %s618, 2
        %s620 = scalar_lea.vmem %s12, %s619
        %p621 = pneg %p352
        %p622 = pneg %p349
        %p623 = scmp.lt.s32.totalorder %s29, 3
        %s624 = scalar_select %p623, %s29, 3
        %s625 = smul.addr %s624, 32
        %s626 = smul.addr %s625, 8
        %s627 = scalar_lea.vmem %s13, %s626
        %p628 = pneg %p378
        %p629 = pneg %p375
        %p630 = scmp.lt.s32.totalorder %s29, 3
        %s631 = scalar_select %p630, %s29, 3
        %s632 = scalar_lea.vmem %s14, %s631
        %p633 = pneg %p404
        %p634 = pneg %p401
        %p635 = pneg %p430
        %p636 = pneg %p427
        %s637 = sand.u32 %s417, 1
        %s638 = scalar_lea.sflag [#allocation4], %s637
        %s639 = sand.u32 %s417, 1
        %s640 = smul.addr %s639, 32
        %s641 = scalar_lea.vmem [#allocation3], %s640
        %p642 = scmp.lt.s32.totalorder %s29, 3
        %s643 = scalar_select %p642, %s29, 3
        %s644 = scalar_lea.vmem %s2, %s643
        %p645 = scmp.lt.s32.totalorder %s29, 3
        %s646 = scalar_select %p645, %s29, 3
        %s647 = scalar_lea.vmem %s3, %s646
        %p648 = scmp.lt.s32.totalorder %s29, 3
        %s649 = scalar_select %p648, %s29, 3
        %s650 = smul.addr %s649, 32
        %s651 = smul.addr %s650, 8
        %s652 = scalar_lea.vmem %s4, %s651
        %p653 = scmp.lt.s32.totalorder %s29, 3
        %s654 = scalar_select %p653, %s29, 3
        %s655 = smul.addr %s654, 32
        %s656 = smul.addr %s655, 8
        %s657 = scalar_lea.vmem %s5, %s656
        %p658 = scmp.lt.s32.totalorder %s29, 3
        %s659 = scalar_select %p658, %s29, 3
        %s660 = smul.addr %s659, 32
        %s661 = smul.addr %s660, 8
        %s662 = scalar_lea.vmem %s6, %s661
        %p663 = scmp.lt.s32.totalorder %s29, 3
        %s664 = scalar_select %p663, %s29, 3
        %s665 = smul.addr %s664, 8
        %s666 = smul.addr %s665, 8
        %s667 = scalar_lea.vmem %s7, %s666
        %p668 = scmp.lt.s32.totalorder %s29, 3
        %s669 = scalar_select %p668, %s29, 3
        %s670 = scalar_lea.vmem %s8, %s669
        %p671 = scmp.lt.s32.totalorder %s29, 3
        %s672 = scalar_select %p671, %s29, 3
        %s673 = scalar_lea.vmem %s9, %s672
        %p674 = scmp.lt.s32.totalorder %s29, 3
        %s675 = scalar_select %p674, %s29, 3
        %s676 = scalar_lea.vmem %s10, %s675
        %p677 = scmp.lt.s32.totalorder %s29, 3
        %s678 = scalar_select %p677, %s29, 3
        %s679 = smul.addr %s678, 16
        %s680 = smul.addr %s679, 8
        %s681 = scalar_lea.vmem %s11, %s680
        %p682 = scmp.lt.s32.totalorder %s29, 3
        %s683 = scalar_select %p682, %s29, 3
        %s684 = smul.addr %s683, 2
        %s685 = scalar_lea.vmem %s12, %s684
        %p686 = scmp.lt.s32.totalorder %s29, 3
        %s687 = scalar_select %p686, %s29, 3
        %s688 = smul.addr %s687, 32
        %s689 = smul.addr %s688, 8
        %s690 = scalar_lea.vmem %s13, %s689
        %p691 = scmp.lt.s32.totalorder %s29, 3
        %s692 = scalar_select %p691, %s29, 3
        %s693 = scalar_lea.vmem %s14, %s692
        %p694 = scmp.eq.s32.totalorder %s29, 0
        // Predicated region
        $region81: #{tpu_custom_call.1} parent=79 // pred_check
          %p695 = pneg %p694
        $region82: #{tpu_custom_call.1} parent=79 // pred_check_branch
          %697 = sbr.rel (%p695) target = $region84
        $region83: #{tpu_custom_call.1} parent=79 // pred_region
          %v698 = vld [vmem:[%s0] sm:$0xff]
          %v699 = vld [vmem:[%s0 + $0x8] sm:$0xff]
          %v700 = vld [vmem:[%s0 + $0x10] sm:$0xff]
          %v701 = vld [vmem:[%s0 + $0x18] sm:$0xff]
          %vm702 = vcmask 523264
          %703 = vst.msk [vmem:[#allocation2] sm:$0xff] %vm702, %v698
          %704 = vst.msk [vmem:[#allocation2 + $0x8] sm:$0xff] %vm702, %v699
          %705 = vst.msk [vmem:[#allocation2 + $0x10] sm:$0xff] %vm702, %v700
          %706 = vst.msk [vmem:[#allocation2 + $0x18] sm:$0xff] %vm702, %v701
        $region84: #{tpu_custom_call.1} parent=79 // pred_fallthru
          _
        %v707 = vld [vmem:[#allocation2] sm:$0xff]
        %v708 = vld [vmem:[#allocation2 + $0x8] sm:$0xff]
        %v709 = vld [vmem:[#allocation2 + $0x10] sm:$0xff]
        %v710 = vld [vmem:[#allocation2 + $0x18] sm:$0xff]
        %v711 = vld [vmem:[%s1] sm:$0xff]
        %v712 = vld [vmem:[%s1 + $0x8] sm:$0xff]
        %v713 = vld [vmem:[%s1 + $0x10] sm:$0xff]
        %v714 = vld [vmem:[%s1 + $0x18] sm:$0xff]
        %v715 = vadd.f32 %v707, %v711
        %v716 = vadd.f32 %v708, %v712
        %v717 = vadd.f32 %v709, %v713
        %v718 = vadd.f32 %v710, %v714
        %v719 = vld [vmem:[%s644] sm:$0x1]
        %v720 = vld [vmem:[%s647] sm:$0x1]
        %vm721 = vcmask 523264
        %v722 = vsel %vm721, %v715, 0.0
        %723 = vadd.xlane.f32.xlu0 %v722
        %v724 = vpop.xlane.xlu0 %723
        %v725 = vsel %vm721, %v716, 0.0
        %726 = vadd.xlane.f32.xlu0 %v725
        %v727 = vpop.xlane.xlu0 %726
        %v728 = vsel %vm721, %v717, 0.0
        %729 = vadd.xlane.f32.xlu0 %v728
        %v730 = vpop.xlane.xlu0 %729
        %v731 = vsel %vm721, %v718, 0.0
        %732 = vadd.xlane.f32.xlu0 %v731
        %v733 = vpop.xlane.xlu0 %732
        %v734 = vrcp.pop 64.0
        %v735 = vmul.f32 %v724, %v734
        %v736 = vmul.f32 %v727, %v734
        %v737 = vmul.f32 %v730, %v734
        %v738 = vmul.f32 %v733, %v734
        %v739 = vsub.f32 %v715, %v735
        %v740 = vsub.f32 %v716, %v736
        %v741 = vsub.f32 %v717, %v737
        %v742 = vsub.f32 %v718, %v738
        %v743 = vmul.f32 %v739, %v739
        %v744 = vmul.f32 %v740, %v740
        %v745 = vmul.f32 %v741, %v741
        %v746 = vmul.f32 %v742, %v742
        %v747 = vsel %vm721, %v743, 0.0
        %748 = vadd.xlane.f32.xlu0 %v747
        %v749 = vpop.xlane.xlu0 %748
        %v750 = vsel %vm721, %v744, 0.0
        %751 = vadd.xlane.f32.xlu0 %v750
        %v752 = vpop.xlane.xlu0 %751
        %v753 = vsel %vm721, %v745, 0.0
        %754 = vadd.xlane.f32.xlu0 %v753
        %v755 = vpop.xlane.xlu0 %754
        %v756 = vsel %vm721, %v746, 0.0
        %757 = vadd.xlane.f32.xlu0 %v756
        %v758 = vpop.xlane.xlu0 %757
        %v759 = vmul.f32 %v749, %v734
        %v760 = vmul.f32 %v752, %v734
        %v761 = vmul.f32 %v755, %v734
        %v762 = vmul.f32 %v758, %v734
        %v763 = vadd.f32 %v759, 1e-05
        %v764 = vadd.f32 %v760, 1e-05
        %v765 = vadd.f32 %v761, 1e-05
        %v766 = vadd.f32 %v762, 1e-05
        %v767 = vrsqrt.pop %v763
        %v768 = vrsqrt.pop %v764
        %v769 = vrsqrt.pop %v765
        %v770 = vrsqrt.pop %v766
        %v771 = vmul.f32 %v739, %v767
        %v772 = vmul.f32 %v740, %v768
        %v773 = vmul.f32 %v741, %v769
        %v774 = vmul.f32 %v742, %v770
        %v776 = vlaneseq
        %v777 = vshrl.u32 %v776, 7
        %v778 = vsub.s32 0, %v777
        %v779 = vrot.slane %v719, %v778
        %v781 = vmul.f32 %v771, %v779
        %v782 = vmul.f32 %v772, %v779
        %v783 = vmul.f32 %v773, %v779
        %v784 = vmul.f32 %v774, %v779
        %v786 = vlaneseq
        %v787 = vshrl.u32 %v786, 7
        %v788 = vsub.s32 0, %v787
        %v789 = vrot.slane %v720, %v788
        %v791 = vadd.f32 %v781, %v789
        %v792 = vadd.f32 %v782, %v789
        %v793 = vadd.f32 %v783, %v789
        %v794 = vadd.f32 %v784, %v789
        %v795 = vld [vmem:[%s652] sm:$0xff]
        %v796 = vld [vmem:[%s652 + $0x8] sm:$0xff]
        %v797 = vld [vmem:[%s652 + $0x10] sm:$0xff]
        %v798 = vld [vmem:[%s652 + $0x18] sm:$0xff]
        %v799 = vld [vmem:[%s652 + $0x20] sm:$0xff]
        %v800 = vld [vmem:[%s652 + $0x28] sm:$0xff]
        %v801 = vld [vmem:[%s652 + $0x30] sm:$0xff]
        %v802 = vld [vmem:[%s652 + $0x38] sm:$0xff]
        %v803 = vld [vmem:[%s652 + $0x40] sm:$0xff]
        %v804 = vld [vmem:[%s652 + $0x48] sm:$0xff]
        %v805 = vld [vmem:[%s652 + $0x50] sm:$0xff]
        %v806 = vld [vmem:[%s652 + $0x58] sm:$0xff]
        %v807 = vld [vmem:[%s652 + $0x60] sm:$0xff]
        %v808 = vld [vmem:[%s652 + $0x68] sm:$0xff]
        %v809 = vld [vmem:[%s652 + $0x70] sm:$0xff]
        %v810 = vld [vmem:[%s652 + $0x78] sm:$0xff]
        %v811 = vld [vmem:[%s652 + $0x80] sm:$0xff]
        %v812 = vld [vmem:[%s652 + $0x88] sm:$0xff]
        %v813 = vld [vmem:[%s652 + $0x90] sm:$0xff]
        %v814 = vld [vmem:[%s652 + $0x98] sm:$0xff]
        %v815 = vld [vmem:[%s652 + $0xa0] sm:$0xff]
        %v816 = vld [vmem:[%s652 + $0xa8] sm:$0xff]
        %v817 = vld [vmem:[%s652 + $0xb0] sm:$0xff]
        %v818 = vld [vmem:[%s652 + $0xb8] sm:$0xff]
        %v819 = vld [vmem:[%s652 + $0xc0] sm:$0xff]
        %v820 = vld [vmem:[%s652 + $0xc8] sm:$0xff]
        %v821 = vld [vmem:[%s652 + $0xd0] sm:$0xff]
        %v822 = vld [vmem:[%s652 + $0xd8] sm:$0xff]
        %v823 = vld [vmem:[%s652 + $0xe0] sm:$0xff]
        %v824 = vld [vmem:[%s652 + $0xe8] sm:$0xff]
        %v825 = vld [vmem:[%s652 + $0xf0] sm:$0xff]
        %v826 = vld [vmem:[%s652 + $0xf8] sm:$0xff]
        %v827 = vld [vmem:[%s657] sm:$0xff]
        %v828 = vld [vmem:[%s657 + $0x8] sm:$0xff]
        %v829 = vld [vmem:[%s657 + $0x10] sm:$0xff]
        %v830 = vld [vmem:[%s657 + $0x18] sm:$0xff]
        %v831 = vld [vmem:[%s657 + $0x20] sm:$0xff]
        %v832 = vld [vmem:[%s657 + $0x28] sm:$0xff]
        %v833 = vld [vmem:[%s657 + $0x30] sm:$0xff]
        %v834 = vld [vmem:[%s657 + $0x38] sm:$0xff]
        %v835 = vld [vmem:[%s657 + $0x40] sm:$0xff]
        %v836 = vld [vmem:[%s657 + $0x48] sm:$0xff]
        %v837 = vld [vmem:[%s657 + $0x50] sm:$0xff]
        %v838 = vld [vmem:[%s657 + $0x58] sm:$0xff]
        %v839 = vld [vmem:[%s657 + $0x60] sm:$0xff]
        %v840 = vld [vmem:[%s657 + $0x68] sm:$0xff]
        %v841 = vld [vmem:[%s657 + $0x70] sm:$0xff]
        %v842 = vld [vmem:[%s657 + $0x78] sm:$0xff]
        %v843 = vld [vmem:[%s657 + $0x80] sm:$0xff]
        %v844 = vld [vmem:[%s657 + $0x88] sm:$0xff]
        %v845 = vld [vmem:[%s657 + $0x90] sm:$0xff]
        %v846 = vld [vmem:[%s657 + $0x98] sm:$0xff]
        %v847 = vld [vmem:[%s657 + $0xa0] sm:$0xff]
        %v848 = vld [vmem:[%s657 + $0xa8] sm:$0xff]
        %v849 = vld [vmem:[%s657 + $0xb0] sm:$0xff]
        %v850 = vld [vmem:[%s657 + $0xb8] sm:$0xff]
        %v851 = vld [vmem:[%s657 + $0xc0] sm:$0xff]
        %v852 = vld [vmem:[%s657 + $0xc8] sm:$0xff]
        %v853 = vld [vmem:[%s657 + $0xd0] sm:$0xff]
        %v854 = vld [vmem:[%s657 + $0xd8] sm:$0xff]
        %v855 = vld [vmem:[%s657 + $0xe0] sm:$0xff]
        %v856 = vld [vmem:[%s657 + $0xe8] sm:$0xff]
        %v857 = vld [vmem:[%s657 + $0xf0] sm:$0xff]
        %v858 = vld [vmem:[%s657 + $0xf8] sm:$0xff]
        %v859 = vld [vmem:[%s662] sm:$0xff]
        %v860 = vld [vmem:[%s662 + $0x8] sm:$0xff]
        %v861 = vld [vmem:[%s662 + $0x10] sm:$0xff]
        %v862 = vld [vmem:[%s662 + $0x18] sm:$0xff]
        %v863 = vld [vmem:[%s662 + $0x20] sm:$0xff]
        %v864 = vld [vmem:[%s662 + $0x28] sm:$0xff]
        %v865 = vld [vmem:[%s662 + $0x30] sm:$0xff]
        %v866 = vld [vmem:[%s662 + $0x38] sm:$0xff]
        %v867 = vld [vmem:[%s662 + $0x40] sm:$0xff]
        %v868 = vld [vmem:[%s662 + $0x48] sm:$0xff]
        %v869 = vld [vmem:[%s662 + $0x50] sm:$0xff]
        %v870 = vld [vmem:[%s662 + $0x58] sm:$0xff]
        %v871 = vld [vmem:[%s662 + $0x60] sm:$0xff]
        %v872 = vld [vmem:[%s662 + $0x68] sm:$0xff]
        %v873 = vld [vmem:[%s662 + $0x70] sm:$0xff]
        %v874 = vld [vmem:[%s662 + $0x78] sm:$0xff]
        %v875 = vld [vmem:[%s662 + $0x80] sm:$0xff]
        %v876 = vld [vmem:[%s662 + $0x88] sm:$0xff]
        %v877 = vld [vmem:[%s662 + $0x90] sm:$0xff]
        %v878 = vld [vmem:[%s662 + $0x98] sm:$0xff]
        %v879 = vld [vmem:[%s662 + $0xa0] sm:$0xff]
        %v880 = vld [vmem:[%s662 + $0xa8] sm:$0xff]
        %v881 = vld [vmem:[%s662 + $0xb0] sm:$0xff]
        %v882 = vld [vmem:[%s662 + $0xb8] sm:$0xff]
        %v883 = vld [vmem:[%s662 + $0xc0] sm:$0xff]
        %v884 = vld [vmem:[%s662 + $0xc8] sm:$0xff]
        %v885 = vld [vmem:[%s662 + $0xd0] sm:$0xff]
        %v886 = vld [vmem:[%s662 + $0xd8] sm:$0xff]
        %v887 = vld [vmem:[%s662 + $0xe0] sm:$0xff]
        %v888 = vld [vmem:[%s662 + $0xe8] sm:$0xff]
        %v889 = vld [vmem:[%s662 + $0xf0] sm:$0xff]
        %v890 = vld [vmem:[%s662 + $0xf8] sm:$0xff]
        %v891 = vld [vmem:[%s667] sm:$0xff]
        %v892 = vld [vmem:[%s667 + $0x8] sm:$0xff]
        %v893 = vld [vmem:[%s667 + $0x10] sm:$0xff]
        %v894 = vld [vmem:[%s667 + $0x18] sm:$0xff]
        %v895 = vld [vmem:[%s667 + $0x20] sm:$0xff]
        %v896 = vld [vmem:[%s667 + $0x28] sm:$0xff]
        %v897 = vld [vmem:[%s667 + $0x30] sm:$0xff]
        %v898 = vld [vmem:[%s667 + $0x38] sm:$0xff]
        %v900 = vsel %vm721, %v791, 0
        %v903 = vsel %vm721, %v792, 0
        %905 = vmatprep.subr.mxu0 0.0
        %906 = vmatpush1.msra.mxu0 %v795
        %907 = vmatprep.subr.mxu0 0.0
        %908 = vmatpush1.msra.mxu0 %v796
        %909 = vmatprep.subr.mxu0 0.0
        %910 = vmatpush1.msra.mxu0 %v797
        %911 = vmatprep.subr.mxu0 0.0
        %912 = vmatpush1.msra.mxu0 %v798
        %913 = vmatprep.subr.mxu0 0.0
        %914 = vmatpush1.msra.mxu0 %v799
        %915 = vmatprep.subr.mxu0 0.0
        %916 = vmatpush1.msra.mxu0 %v800
        %917 = vmatprep.subr.mxu0 0.0
        %918 = vmatpush1.msra.mxu0 %v801
        %919 = vmatprep.subr.mxu0 0.0
        %920 = vmatpush1.msra.mxu0 %v802
        %921 = vmatprep.subr.mxu0 0.0
        %922 = vmatpush1.msra.mxu0 0.0
        %923 = vmatprep.subr.mxu0 0.0
        %924 = vmatpush1.msra.mxu0 0.0
        %925 = vmatprep.subr.mxu0 0.0
        %926 = vmatpush1.msra.mxu0 0.0
        %927 = vmatprep.subr.mxu0 0.0
        %928 = vmatpush1.msra.mxu0 0.0
        %929 = vmatprep.subr.mxu0 0.0
        %930 = vmatpush1.msra.mxu0 0.0
        %931 = vmatprep.subr.mxu0 0.0
        %932 = vmatpush1.msra.mxu0 0.0
        %933 = vmatprep.subr.mxu0 0.0
        %934 = vmatpush1.msra.mxu0 0.0
        %935 = vmatprep.subr.mxu0 0.0
        %936 = vmatpush1.msra.mxu0 0.0
        %937 = vmatprep.subr.mxu0 0.0
        %938 = vmatpush1.msra.mxu0 0.0
        %939 = vmatprep.subr.mxu0 0.0
        %940 = vmatpush1.msra.mxu0 0.0
        %941 = vmatprep.subr.mxu0 0.0
        %942 = vmatpush1.msra.mxu0 0.0
        %943 = vmatprep.subr.mxu0 0.0
        %944 = vmatpush1.msra.mxu0 0.0
        %945 = vmatprep.subr.mxu0 0.0
        %946 = vmatpush1.msra.mxu0 0.0
        %947 = vmatprep.subr.mxu0 0.0
        %948 = vmatpush1.msra.mxu0 0.0
        %949 = vmatprep.subr.mxu0 0.0
        %950 = vmatpush1.msra.mxu0 0.0
        %951 = vmatprep.subr.mxu0 0.0
        %952 = vmatpush1.msra.mxu0 0.0
        %953 = vmatprep.subr.mxu0 0.0
        %954 = vmatpush1.msra.mxu0 0.0
        %955 = vmatprep.subr.mxu0 0.0
        %956 = vmatpush1.msra.mxu0 0.0
        %957 = vmatprep.subr.mxu0 0.0
        %958 = vmatpush1.msra.mxu0 0.0
        %959 = vmatprep.subr.mxu0 0.0
        %960 = vmatpush1.msra.mxu0 0.0
        %961 = vmatprep.subr.mxu0 0.0
        %962 = vmatpush1.msra.mxu0 0.0
        %963 = vmatprep.subr.mxu0 0.0
        %964 = vmatpush1.msra.mxu0 0.0
        %965 = vmatprep.subr.mxu0 0.0
        %966 = vmatpush1.msra.mxu0 0.0
        %967 = vmatprep.subr.mxu0 0.0
        %968 = vmatpush1.msra.mxu0 0.0
        %969 = vmatprep.mubr.f32.mxu0 0.0
        %970 = vmatmul.mubr.f32.gmra.mrb[0].mxu0 %v900
        %v971 = vpop.f32.mrb[0].mxu0
        %v972 = vadd.f32 0.0, %v971
        %v973 = vpop.f32.mrb[0].mxu0
        %974 = vmatprep.mubr.f32.mxu0 0.0
        %975 = vmatmul.mubr.f32.gmra.mrb[0].mxu0 %v903
        %v976 = vpop.f32.mrb[0].mxu0
        %v977 = vadd.f32 0.0, %v976
        %v978 = vpop.f32.mrb[0].mxu0
        %979 = vdwg.mxu0
        %980 = vmatprep.subr.mxu0 0.0
        %981 = vmatpush1.msra.mxu0 %v803
        %982 = vmatprep.subr.mxu0 0.0
        %983 = vmatpush1.msra.mxu0 %v804
        %984 = vmatprep.subr.mxu0 0.0
        %985 = vmatpush1.msra.mxu0 %v805
        %986 = vmatprep.subr.mxu0 0.0
        %987 = vmatpush1.msra.mxu0 %v806
        %988 = vmatprep.subr.mxu0 0.0
        %989 = vmatpush1.msra.mxu0 %v807
        %990 = vmatprep.subr.mxu0 0.0
        %991 = vmatpush1.msra.mxu0 %v808
        %992 = vmatprep.subr.mxu0 0.0
        %993 = vmatpush1.msra.mxu0 %v809
        %994 = vmatprep.subr.mxu0 0.0
        %995 = vmatpush1.msra.mxu0 %v810
        %996 = vmatprep.subr.mxu0 0.0
        %997 = vmatpush1.msra.mxu0 0.0
        %998 = vmatprep.subr.mxu0 0.0
        %999 = vmatpush1.msra.mxu0 0.0
        %1000 = vmatprep.subr.mxu0 0.0
        %1001 = vmatpush1.msra.mxu0 0.0
        %1002 = vmatprep.subr.mxu0 0.0
        %1003 = vmatpush1.msra.mxu0 0.0
        %1004 = vmatprep.subr.mxu0 0.0
        %1005 = vmatpush1.msra.mxu0 0.0
        %1006 = vmatprep.subr.mxu0 0.0
        %1007 = vmatpush1.msra.mxu0 0.0
        %1008 = vmatprep.subr.mxu0 0.0
        %1009 = vmatpush1.msra.mxu0 0.0
        %1010 = vmatprep.subr.mxu0 0.0
        %1011 = vmatpush1.msra.mxu0 0.0
        %1012 = vmatprep.subr.mxu0 0.0
        %1013 = vmatpush1.msra.mxu0 0.0
        %1014 = vmatprep.subr.mxu0 0.0
        %1015 = vmatpush1.msra.mxu0 0.0
        %1016 = vmatprep.subr.mxu0 0.0
        %1017 = vmatpush1.msra.mxu0 0.0
        %1018 = vmatprep.subr.mxu0 0.0
        %1019 = vmatpush1.msra.mxu0 0.0
        %1020 = vmatprep.subr.mxu0 0.0
        %1021 = vmatpush1.msra.mxu0 0.0
        %1022 = vmatprep.subr.mxu0 0.0
        %1023 = vmatpush1.msra.mxu0 0.0
        %1024 = vmatprep.subr.mxu0 0.0
        %1025 = vmatpush1.msra.mxu0 0.0
        %1026 = vmatprep.subr.mxu0 0.0
        %1027 = vmatpush1.msra.mxu0 0.0
        %1028 = vmatprep.subr.mxu0 0.0
        %1029 = vmatpush1.msra.mxu0 0.0
        %1030 = vmatprep.subr.mxu0 0.0
        %1031 = vmatpush1.msra.mxu0 0.0
        %1032 = vmatprep.subr.mxu0 0.0
        %1033 = vmatpush1.msra.mxu0 0.0
        %1034 = vmatprep.subr.mxu0 0.0
        %1035 = vmatpush1.msra.mxu0 0.0
        %1036 = vmatprep.subr.mxu0 0.0
        %1037 = vmatpush1.msra.mxu0 0.0
        %1038 = vmatprep.subr.mxu0 0.0
        %1039 = vmatpush1.msra.mxu0 0.0
        %1040 = vmatprep.subr.mxu0 0.0
        %1041 = vmatpush1.msra.mxu0 0.0
        %1042 = vmatprep.subr.mxu0 0.0
        %1043 = vmatpush1.msra.mxu0 0.0
        %1044 = vmatprep.mubr.f32.mxu0 0.0
        %1045 = vmatmul.mubr.f32.gmra.mrb[0].mxu0 %v900
        %v1046 = vpop.f32.mrb[0].mxu0
        %v1047 = vadd.f32 0.0, %v1046
        %v1048 = vpop.f32.mrb[0].mxu0
        %1049 = vmatprep.mubr.f32.mxu0 0.0
        %1050 = vmatmul.mubr.f32.gmra.mrb[0].mxu0 %v903
        %v1051 = vpop.f32.mrb[0].mxu0
        %v1052 = vadd.f32 0.0, %v1051
        %v1053 = vpop.f32.mrb[0].mxu0
        %1054 = vdwg.mxu0
        %1055 = vmatprep.subr.mxu0 0.0
        %1056 = vmatpush1.msra.mxu0 %v811
        %1057 = vmatprep.subr.mxu0 0.0
        %1058 = vmatpush1.msra.mxu0 %v812
        %1059 = vmatprep.subr.mxu0 0.0
        %1060 = vmatpush1.msra.mxu0 %v813
        %1061 = vmatprep.subr.mxu0 0.0
        %1062 = vmatpush1.msra.mxu0 %v814
        %1063 = vmatprep.subr.mxu0 0.0
        %1064 = vmatpush1.msra.mxu0 %v815
        %1065 = vmatprep.subr.mxu0 0.0
        %1066 = vmatpush1.msra.mxu0 %v816
        %1067 = vmatprep.subr.mxu0 0.0
        %1068 = vmatpush1.msra.mxu0 %v817
        %1069 = vmatprep.subr.mxu0 0.0
        %1070 = vmatpush1.msra.mxu0 %v818
        %1071 = vmatprep.subr.mxu0 0.0
        %1072 = vmatpush1.msra.mxu0 0.0
        %1073 = vmatprep.subr.mxu0 0.0
        %1074 = vmatpush1.msra.mxu0 0.0
        %1075 = vmatprep.subr.mxu0 0.0
        %1076 = vmatpush1.msra.mxu0 0.0
        %1077 = vmatprep.subr.mxu0 0.0
        %1078 = vmatpush1.msra.mxu0 0.0
        %1079 = vmatprep.subr.mxu0 0.0
        %1080 = vmatpush1.msra.mxu0 0.0
        %1081 = vmatprep.subr.mxu0 0.0
        %1082 = vmatpush1.msra.mxu0 0.0
        %1083 = vmatprep.subr.mxu0 0.0
        %1084 = vmatpush1.msra.mxu0 0.0
        %1085 = vmatprep.subr.mxu0 0.0
        %1086 = vmatpush1.msra.mxu0 0.0
        %1087 = vmatprep.subr.mxu0 0.0
        %1088 = vmatpush1.msra.mxu0 0.0
        %1089 = vmatprep.subr.mxu0 0.0
        %1090 = vmatpush1.msra.mxu0 0.0
        %1091 = vmatprep.subr.mxu0 0.0
        %1092 = vmatpush1.msra.mxu0 0.0
        %1093 = vmatprep.subr.mxu0 0.0
        %1094 = vmatpush1.msra.mxu0 0.0
        %1095 = vmatprep.subr.mxu0 0.0
        %1096 = vmatpush1.msra.mxu0 0.0
        %1097 = vmatprep.subr.mxu0 0.0
        %1098 = vmatpush1.msra.mxu0 0.0
        %1099 = vmatprep.subr.mxu0 0.0
        %1100 = vmatpush1.msra.mxu0 0.0
        %1101 = vmatprep.subr.mxu0 0.0
        %1102 = vmatpush1.msra.mxu0 0.0
        %1103 = vmatprep.subr.mxu0 0.0
        %1104 = vmatpush1.msra.mxu0 0.0
        %1105 = vmatprep.subr.mxu0 0.0
        %1106 = vmatpush1.msra.mxu0 0.0
        %1107 = vmatprep.subr.mxu0 0.0
        %1108 = vmatpush1.msra.mxu0 0.0
        %1109 = vmatprep.subr.mxu0 0.0
        %1110 = vmatpush1.msra.mxu0 0.0
        %1111 = vmatprep.subr.mxu0 0.0
        %1112 = vmatpush1.msra.mxu0 0.0
        %1113 = vmatprep.subr.mxu0 0.0
        %1114 = vmatpush1.msra.mxu0 0.0
        %1115 = vmatprep.subr.mxu0 0.0
        %1116 = vmatpush1.msra.mxu0 0.0
        %1117 = vmatprep.subr.mxu0 0.0
        %1118 = vmatpush1.msra.mxu0 0.0
        %1119 = vmatprep.mubr.f32.mxu0 0.0
        %1120 = vmatmul.mubr.f32.gmra.mrb[0].mxu0 %v900
        %v1121 = vpop.f32.mrb[0].mxu0
        %v1122 = vadd.f32 0.0, %v1121
        %v1123 = vpop.f32.mrb[0].mxu0
        %1124 = vmatprep.mubr.f32.mxu0 0.0
        %1125 = vmatmul.mubr.f32.gmra.mrb[0].mxu0 %v903
        %v1126 = vpop.f32.mrb[0].mxu0
        %v1127 = vadd.f32 0.0, %v1126
        %v1128 = vpop.f32.mrb[0].mxu0
        %1129 = vdwg.mxu0
        %1130 = vmatprep.subr.mxu0 0.0
        %1131 = vmatpush1.msra.mxu0 %v819
        %1132 = vmatprep.subr.mxu0 0.0
        %1133 = vmatpush1.msra.mxu0 %v820
        %1134 = vmatprep.subr.mxu0 0.0
        %1135 = vmatpush1.msra.mxu0 %v821
        %1136 = vmatprep.subr.mxu0 0.0
        %1137 = vmatpush1.msra.mxu0 %v822
        %1138 = vmatprep.subr.mxu0 0.0
        %1139 = vmatpush1.msra.mxu0 %v823
        %1140 = vmatprep.subr.mxu0 0.0
        %1141 = vmatpush1.msra.mxu0 %v824
        %1142 = vmatprep.subr.mxu0 0.0
        %1143 = vmatpush1.msra.mxu0 %v825
        %1144 = vmatprep.subr.mxu0 0.0
        %1145 = vmatpush1.msra.mxu0 %v826
        %1146 = vmatprep.subr.mxu0 0.0
        %1147 = vmatpush1.msra.mxu0 0.0
        %1148 = vmatprep.subr.mxu0 0.0
        %1149 = vmatpush1.msra.mxu0 0.0
        %1150 = vmatprep.subr.mxu0 0.0
        %1151 = vmatpush1.msra.mxu0 0.0
        %1152 = vmatprep.subr.mxu0 0.0
        %1153 = vmatpush1.msra.mxu0 0.0
        %1154 = vmatprep.subr.mxu0 0.0
        %1155 = vmatpush1.msra.mxu0 0.0
        %1156 = vmatprep.subr.mxu0 0.0
        %1157 = vmatpush1.msra.mxu0 0.0
        %1158 = vmatprep.subr.mxu0 0.0
        %1159 = vmatpush1.msra.mxu0 0.0
        %1160 = vmatprep.subr.mxu0 0.0
        %1161 = vmatpush1.msra.mxu0 0.0
        %1162 = vmatprep.subr.mxu0 0.0
        %1163 = vmatpush1.msra.mxu0 0.0
        %1164 = vmatprep.subr.mxu0 0.0
        %1165 = vmatpush1.msra.mxu0 0.0
        %1166 = vmatprep.subr.mxu0 0.0
        %1167 = vmatpush1.msra.mxu0 0.0
        %1168 = vmatprep.subr.mxu0 0.0
        %1169 = vmatpush1.msra.mxu0 0.0
        %1170 = vmatprep.subr.mxu0 0.0
        %1171 = vmatpush1.msra.mxu0 0.0
        %1172 = vmatprep.subr.mxu0 0.0
        %1173 = vmatpush1.msra.mxu0 0.0
        %1174 = vmatprep.subr.mxu0 0.0
        %1175 = vmatpush1.msra.mxu0 0.0
        %1176 = vmatprep.subr.mxu0 0.0
        %1177 = vmatpush1.msra.mxu0 0.0
        %1178 = vmatprep.subr.mxu0 0.0
        %1179 = vmatpush1.msra.mxu0 0.0
        %1180 = vmatprep.subr.mxu0 0.0
        %1181 = vmatpush1.msra.mxu0 0.0
        %1182 = vmatprep.subr.mxu0 0.0
        %1183 = vmatpush1.msra.mxu0 0.0
        %1184 = vmatprep.subr.mxu0 0.0
        %1185 = vmatpush1.msra.mxu0 0.0
        %1186 = vmatprep.subr.mxu0 0.0
        %1187 = vmatpush1.msra.mxu0 0.0
        %1188 = vmatprep.subr.mxu0 0.0
        %1189 = vmatpush1.msra.mxu0 0.0
        %1190 = vmatprep.subr.mxu0 0.0
        %1191 = vmatpush1.msra.mxu0 0.0
        %1192 = vmatprep.subr.mxu0 0.0
        %1193 = vmatpush1.msra.mxu0 0.0
        %1194 = vmatprep.mubr.f32.mxu0 0.0
        %1195 = vmatmul.mubr.f32.gmra.mrb[0].mxu0 %v900
        %v1196 = vpop.f32.mrb[0].mxu0
        %v1197 = vadd.f32 0.0, %v1196
        %v1198 = vpop.f32.mrb[0].mxu0
        %1199 = vmatprep.mubr.f32.mxu0 0.0
        %1200 = vmatmul.mubr.f32.gmra.mrb[0].mxu0 %v903
        %v1201 = vpop.f32.mrb[0].mxu0
        %v1202 = vadd.f32 0.0, %v1201
        %v1203 = vpop.f32.mrb[0].mxu0
        %1204 = vdwg.mxu0
        %1205 = vmatprep.subr.mxu0 0.0
        %1206 = vmatpush1.msra.mxu0 %v827
        %1207 = vmatprep.subr.mxu0 0.0
        %1208 = vmatpush1.msra.mxu0 %v828
        %1209 = vmatprep.subr.mxu0 0.0
        %1210 = vmatpush1.msra.mxu0 %v829
        %1211 = vmatprep.subr.mxu0 0.0
        %1212 = vmatpush1.msra.mxu0 %v830
        %1213 = vmatprep.subr.mxu0 0.0
        %1214 = vmatpush1.msra.mxu0 %v831
        %1215 = vmatprep.subr.mxu0 0.0
        %1216 = vmatpush1.msra.mxu0 %v832
        %1217 = vmatprep.subr.mxu0 0.0
        %1218 = vmatpush1.msra.mxu0 %v833
        %1219 = vmatprep.subr.mxu0 0.0
        %1220 = vmatpush1.msra.mxu0 %v834
        %1221 = vmatprep.subr.mxu0 0.0
        %1222 = vmatpush1.msra.mxu0 0.0
        %1223 = vmatprep.subr.mxu0 0.0
        %1224 = vmatpush1.msra.mxu0 0.0
        %1225 = vmatprep.subr.mxu0 0.0
        %1226 = vmatpush1.msra.mxu0 0.0
        %1227 = vmatprep.subr.mxu0 0.0
        %1228 = vmatpush1.msra.mxu0 0.0
        %1229 = vmatprep.subr.mxu0 0.0
        %1230 = vmatpush1.msra.mxu0 0.0
        %1231 = vmatprep.subr.mxu0 0.0
        %1232 = vmatpush1.msra.mxu0 0.0
        %1233 = vmatprep.subr.mxu0 0.0
        %1234 = vmatpush1.msra.mxu0 0.0
        %1235 = vmatprep.subr.mxu0 0.0
        %1236 = vmatpush1.msra.mxu0 0.0
        %1237 = vmatprep.subr.mxu0 0.0
        %1238 = vmatpush1.msra.mxu0 0.0
        %1239 = vmatprep.subr.mxu0 0.0
        %1240 = vmatpush1.msra.mxu0 0.0
        %1241 = vmatprep.subr.mxu0 0.0
        %1242 = vmatpush1.msra.mxu0 0.0
        %1243 = vmatprep.subr.mxu0 0.0
        %1244 = vmatpush1.msra.mxu0 0.0
        %1245 = vmatprep.subr.mxu0 0.0
        %1246 = vmatpush1.msra.mxu0 0.0
        %1247 = vmatprep.subr.mxu0 0.0
        %1248 = vmatpush1.msra.mxu0 0.0
        %1249 = vmatprep.subr.mxu0 0.0
        %1250 = vmatpush1.msra.mxu0 0.0
        %1251 = vmatprep.subr.mxu0 0.0
        %1252 = vmatpush1.msra.mxu0 0.0
        %1253 = vmatprep.subr.mxu0 0.0
        %1254 = vmatpush1.msra.mxu0 0.0
        %1255 = vmatprep.subr.mxu0 0.0
        %1256 = vmatpush1.msra.mxu0 0.0
        %1257 = vmatprep.subr.mxu0 0.0
        %1258 = vmatpush1.msra.mxu0 0.0
        %1259 = vmatprep.subr.mxu0 0.0
        %1260 = vmatpush1.msra.mxu0 0.0
        %1261 = vmatprep.subr.mxu0 0.0
        %1262 = vmatpush1.msra.mxu0 0.0
        %1263 = vmatprep.subr.mxu0 0.0
        %1264 = vmatpush1.msra.mxu0 0.0
        %1265 = vmatprep.subr.mxu0 0.0
        %1266 = vmatpush1.msra.mxu0 0.0
        %1267 = vmatprep.subr.mxu0 0.0
        %1268 = vmatpush1.msra.mxu0 0.0
        %1269 = vmatprep.mubr.f32.mxu0 0.0
        %1270 = vmatmul.mubr.f32.gmra.mrb[0].mxu0 %v900
        %v1271 = vpop.f32.mrb[0].mxu0
        %v1272 = vadd.f32 0.0, %v1271
        %v1273 = vpop.f32.mrb[0].mxu0
        %1274 = vmatprep.mubr.f32.mxu0 0.0
        %1275 = vmatmul.mubr.f32.gmra.mrb[0].mxu0 %v903
        %v1276 = vpop.f32.mrb[0].mxu0
        %v1277 = vadd.f32 0.0, %v1276
        %v1278 = vpop.f32.mrb[0].mxu0
        %1279 = vdwg.mxu0
        %1280 = vmatprep.subr.mxu0 0.0
        %1281 = vmatpush1.msra.mxu0 %v835
        %1282 = vmatprep.subr.mxu0 0.0
        %1283 = vmatpush1.msra.mxu0 %v836
        %1284 = vmatprep.subr.mxu0 0.0
        %1285 = vmatpush1.msra.mxu0 %v837
        %1286 = vmatprep.subr.mxu0 0.0
        %1287 = vmatpush1.msra.mxu0 %v838
        %1288 = vmatprep.subr.mxu0 0.0
        %1289 = vmatpush1.msra.mxu0 %v839
        %1290 = vmatprep.subr.mxu0 0.0
        %1291 = vmatpush1.msra.mxu0 %v840
        %1292 = vmatprep.subr.mxu0 0.0
        %1293 = vmatpush1.msra.mxu0 %v841
        %1294 = vmatprep.subr.mxu0 0.0
        %1295 = vmatpush1.msra.mxu0 %v842
        %1296 = vmatprep.subr.mxu0 0.0
        %1297 = vmatpush1.msra.mxu0 0.0
        %1298 = vmatprep.subr.mxu0 0.0
        %1299 = vmatpush1.msra.mxu0 0.0
        %1300 = vmatprep.subr.mxu0 0.0
        %1301 = vmatpush1.msra.mxu0 0.0
        %1302 = vmatprep.subr.mxu0 0.0
        %1303 = vmatpush1.msra.mxu0 0.0
        %1304 = vmatprep.subr.mxu0 0.0
        %1305 = vmatpush1.msra.mxu0 0.0
        %1306 = vmatprep.subr.mxu0 0.0
        %1307 = vmatpush1.msra.mxu0 0.0
        %1308 = vmatprep.subr.mxu0 0.0
        %1309 = vmatpush1.msra.mxu0 0.0
        %1310 = vmatprep.subr.mxu0 0.0
        %1311 = vmatpush1.msra.mxu0 0.0
        %1312 = vmatprep.subr.mxu0 0.0
        %1313 = vmatpush1.msra.mxu0 0.0
        %1314 = vmatprep.subr.mxu0 0.0
        %1315 = vmatpush1.msra.mxu0 0.0
        %1316 = vmatprep.subr.mxu0 0.0
        %1317 = vmatpush1.msra.mxu0 0.0
        %1318 = vmatprep.subr.mxu0 0.0
        %1319 = vmatpush1.msra.mxu0 0.0
        %1320 = vmatprep.subr.mxu0 0.0
        %1321 = vmatpush1.msra.mxu0 0.0
        %1322 = vmatprep.subr.mxu0 0.0
        %1323 = vmatpush1.msra.mxu0 0.0
        %1324 = vmatprep.subr.mxu0 0.0
        %1325 = vmatpush1.msra.mxu0 0.0
        %1326 = vmatprep.subr.mxu0 0.0
        %1327 = vmatpush1.msra.mxu0 0.0
        %1328 = vmatprep.subr.mxu0 0.0
        %1329 = vmatpush1.msra.mxu0 0.0
        %1330 = vmatprep.subr.mxu0 0.0
        %1331 = vmatpush1.msra.mxu0 0.0
        %1332 = vmatprep.subr.mxu0 0.0
        %1333 = vmatpush1.msra.mxu0 0.0
        %1334 = vmatprep.subr.mxu0 0.0
        %1335 = vmatpush1.msra.mxu0 0.0
        %1336 = vmatprep.subr.mxu0 0.0
        %1337 = vmatpush1.msra.mxu0 0.0
        %1338 = vmatprep.subr.mxu0 0.0
        %1339 = vmatpush1.msra.mxu0 0.0
        %1340 = vmatprep.subr.mxu0 0.0
        %1341 = vmatpush1.msra.mxu0 0.0
        %1342 = vmatprep.subr.mxu0 0.0
        %1343 = vmatpush1.msra.mxu0 0.0
        %1344 = vmatprep.mubr.f32.mxu0 0.0
        %1345 = vmatmul.mubr.f32.gmra.mrb[0].mxu0 %v900
        %v1346 = vpop.f32.mrb[0].mxu0
        %v1347 = vadd.f32 0.0, %v1346
        %v1348 = vpop.f32.mrb[0].mxu0
        %1349 = vmatprep.mubr.f32.mxu0 0.0
        %1350 = vmatmul.mubr.f32.gmra.mrb[0].mxu0 %v903
        %v1351 = vpop.f32.mrb[0].mxu0
        %v1352 = vadd.f32 0.0, %v1351
        %v1353 = vpop.f32.mrb[0].mxu0
        %1354 = vdwg.mxu0
        %1355 = vmatprep.subr.mxu0 0.0
        %1356 = vmatpush1.msra.mxu0 %v843
        %1357 = vmatprep.subr.mxu0 0.0
        %1358 = vmatpush1.msra.mxu0 %v844
        %1359 = vmatprep.subr.mxu0 0.0
        %1360 = vmatpush1.msra.mxu0 %v845
        %1361 = vmatprep.subr.mxu0 0.0
        %1362 = vmatpush1.msra.mxu0 %v846
        %1363 = vmatprep.subr.mxu0 0.0
        %1364 = vmatpush1.msra.mxu0 %v847
        %1365 = vmatprep.subr.mxu0 0.0
        %1366 = vmatpush1.msra.mxu0 %v848
        %1367 = vmatprep.subr.mxu0 0.0
        %1368 = vmatpush1.msra.mxu0 %v849
        %1369 = vmatprep.subr.mxu0 0.0
        %1370 = vmatpush1.msra.mxu0 %v850
        %1371 = vmatprep.subr.mxu0 0.0
        %1372 = vmatpush1.msra.mxu0 0.0
        %1373 = vmatprep.subr.mxu0 0.0
        %1374 = vmatpush1.msra.mxu0 0.0
        %1375 = vmatprep.subr.mxu0 0.0
        %1376 = vmatpush1.msra.mxu0 0.0
        %1377 = vmatprep.subr.mxu0 0.0
        %1378 = vmatpush1.msra.mxu0 0.0
        %1379 = vmatprep.subr.mxu0 0.0
        %1380 = vmatpush1.msra.mxu0 0.0
        %1381 = vmatprep.subr.mxu0 0.0
        %1382 = vmatpush1.msra.mxu0 0.0
        %1383 = vmatprep.subr.mxu0 0.0
        %1384 = vmatpush1.msra.mxu0 0.0
        %1385 = vmatprep.subr.mxu0 0.0
        %1386 = vmatpush1.msra.mxu0 0.0
        %1387 = vmatprep.subr.mxu0 0.0
        %1388 = vmatpush1.msra.mxu0 0.0
        %1389 = vmatprep.subr.mxu0 0.0
        %1390 = vmatpush1.msra.mxu0 0.0
        %1391 = vmatprep.subr.mxu0 0.0
        %1392 = vmatpush1.msra.mxu0 0.0
        %1393 = vmatprep.subr.mxu0 0.0
        %1394 = vmatpush1.msra.mxu0 0.0
        %1395 = vmatprep.subr.mxu0 0.0
        %1396 = vmatpush1.msra.mxu0 0.0
        %1397 = vmatprep.subr.mxu0 0.0
        %1398 = vmatpush1.msra.mxu0 0.0
        %1399 = vmatprep.subr.mxu0 0.0
        %1400 = vmatpush1.msra.mxu0 0.0
        %1401 = vmatprep.subr.mxu0 0.0
        %1402 = vmatpush1.msra.mxu0 0.0
        %1403 = vmatprep.subr.mxu0 0.0
        %1404 = vmatpush1.msra.mxu0 0.0
        %1405 = vmatprep.subr.mxu0 0.0
        %1406 = vmatpush1.msra.mxu0 0.0
        %1407 = vmatprep.subr.mxu0 0.0
        %1408 = vmatpush1.msra.mxu0 0.0
        %1409 = vmatprep.subr.mxu0 0.0
        %1410 = vmatpush1.msra.mxu0 0.0
        %1411 = vmatprep.subr.mxu0 0.0
        %1412 = vmatpush1.msra.mxu0 0.0
        %1413 = vmatprep.subr.mxu0 0.0
        %1414 = vmatpush1.msra.mxu0 0.0
        %1415 = vmatprep.subr.mxu0 0.0
        %1416 = vmatpush1.msra.mxu0 0.0
        %1417 = vmatprep.subr.mxu0 0.0
        %1418 = vmatpush1.msra.mxu0 0.0
        %1419 = vmatprep.mubr.f32.mxu0 0.0
        %1420 = vmatmul.mubr.f32.gmra.mrb[0].mxu0 %v900
        %v1421 = vpop.f32.mrb[0].mxu0
        %v1422 = vadd.f32 0.0, %v1421
        %v1423 = vpop.f32.mrb[0].mxu0
        %1424 = vmatprep.mubr.f32.mxu0 0.0
        %1425 = vmatmul.mubr.f32.gmra.mrb[0].mxu0 %v903
        %v1426 = vpop.f32.mrb[0].mxu0
        %v1427 = vadd.f32 0.0, %v1426
        %v1428 = vpop.f32.mrb[0].mxu0
        %1429 = vdwg.mxu0
        %1430 = vmatprep.subr.mxu0 0.0
        %1431 = vmatpush1.msra.mxu0 %v851
        %1432 = vmatprep.subr.mxu0 0.0
        %1433 = vmatpush1.msra.mxu0 %v852
        %1434 = vmatprep.subr.mxu0 0.0
        %1435 = vmatpush1.msra.mxu0 %v853
        %1436 = vmatprep.subr.mxu0 0.0
        %1437 = vmatpush1.msra.mxu0 %v854
        %1438 = vmatprep.subr.mxu0 0.0
        %1439 = vmatpush1.msra.mxu0 %v855
        %1440 = vmatprep.subr.mxu0 0.0
        %1441 = vmatpush1.msra.mxu0 %v856
        %1442 = vmatprep.subr.mxu0 0.0
        %1443 = vmatpush1.msra.mxu0 %v857
        %1444 = vmatprep.subr.mxu0 0.0
        %1445 = vmatpush1.msra.mxu0 %v858
        %1446 = vmatprep.subr.mxu0 0.0
        %1447 = vmatpush1.msra.mxu0 0.0
        %1448 = vmatprep.subr.mxu0 0.0
        %1449 = vmatpush1.msra.mxu0 0.0
        %1450 = vmatprep.subr.mxu0 0.0
        %1451 = vmatpush1.msra.mxu0 0.0
        %1452 = vmatprep.subr.mxu0 0.0
        %1453 = vmatpush1.msra.mxu0 0.0
        %1454 = vmatprep.subr.mxu0 0.0
        %1455 = vmatpush1.msra.mxu0 0.0
        %1456 = vmatprep.subr.mxu0 0.0
        %1457 = vmatpush1.msra.mxu0 0.0
        %1458 = vmatprep.subr.mxu0 0.0
        %1459 = vmatpush1.msra.mxu0 0.0
        %1460 = vmatprep.subr.mxu0 0.0
        %1461 = vmatpush1.msra.mxu0 0.0
        %1462 = vmatprep.subr.mxu0 0.0
        %1463 = vmatpush1.msra.mxu0 0.0
        %1464 = vmatprep.subr.mxu0 0.0
        %1465 = vmatpush1.msra.mxu0 0.0
        %1466 = vmatprep.subr.mxu0 0.0
        %1467 = vmatpush1.msra.mxu0 0.0
        %1468 = vmatprep.subr.mxu0 0.0
        %1469 = vmatpush1.msra.mxu0 0.0
        %1470 = vmatprep.subr.mxu0 0.0
        %1471 = vmatpush1.msra.mxu0 0.0
        %1472 = vmatprep.subr.mxu0 0.0
        %1473 = vmatpush1.msra.mxu0 0.0
        %1474 = vmatprep.subr.mxu0 0.0
        %1475 = vmatpush1.msra.mxu0 0.0
        %1476 = vmatprep.subr.mxu0 0.0
        %1477 = vmatpush1.msra.mxu0 0.0
        %1478 = vmatprep.subr.mxu0 0.0
        %1479 = vmatpush1.msra.mxu0 0.0
        %1480 = vmatprep.subr.mxu0 0.0
        %1481 = vmatpush1.msra.mxu0 0.0
        %1482 = vmatprep.subr.mxu0 0.0
        %1483 = vmatpush1.msra.mxu0 0.0
        %1484 = vmatprep.subr.mxu0 0.0
        %1485 = vmatpush1.msra.mxu0 0.0
        %1486 = vmatprep.subr.mxu0 0.0
        %1487 = vmatpush1.msra.mxu0 0.0
        %1488 = vmatprep.subr.mxu0 0.0
        %1489 = vmatpush1.msra.mxu0 0.0
        %1490 = vmatprep.subr.mxu0 0.0
        %1491 = vmatpush1.msra.mxu0 0.0
        %1492 = vmatprep.subr.mxu0 0.0
        %1493 = vmatpush1.msra.mxu0 0.0
        %1494 = vmatprep.mubr.f32.mxu0 0.0
        %1495 = vmatmul.mubr.f32.gmra.mrb[0].mxu0 %v900
        %v1496 = vpop.f32.mrb[0].mxu0
        %v1497 = vadd.f32 0.0, %v1496
        %v1498 = vpop.f32.mrb[0].mxu0
        %1499 = vmatprep.mubr.f32.mxu0 0.0
        %1500 = vmatmul.mubr.f32.gmra.mrb[0].mxu0 %v903
        %v1501 = vpop.f32.mrb[0].mxu0
        %v1502 = vadd.f32 0.0, %v1501
        %v1503 = vpop.f32.mrb[0].mxu0
        %1504 = vdwg.mxu0
        %1505 = vmatprep.subr.mxu0 0.0
        %1506 = vmatpush1.msra.mxu0 %v859
        %1507 = vmatprep.subr.mxu0 0.0
        %1508 = vmatpush1.msra.mxu0 %v860
        %1509 = vmatprep.subr.mxu0 0.0
        %1510 = vmatpush1.msra.mxu0 %v861
        %1511 = vmatprep.subr.mxu0 0.0
        %1512 = vmatpush1.msra.mxu0 %v862
        %1513 = vmatprep.subr.mxu0 0.0
        %1514 = vmatpush1.msra.mxu0 %v863
        %1515 = vmatprep.subr.mxu0 0.0
        %1516 = vmatpush1.msra.mxu0 %v864
        %1517 = vmatprep.subr.mxu0 0.0
        %1518 = vmatpush1.msra.mxu0 %v865
        %1519 = vmatprep.subr.mxu0 0.0
        %1520 = vmatpush1.msra.mxu0 %v866
        %1521 = vmatprep.subr.mxu0 0.0
        %1522 = vmatpush1.msra.mxu0 0.0
        %1523 = vmatprep.subr.mxu0 0.0
        %1524 = vmatpush1.msra.mxu0 0.0
        %1525 = vmatprep.subr.mxu0 0.0
        %1526 = vmatpush1.msra.mxu0 0.0
        %1527 = vmatprep.subr.mxu0 0.0
        %1528 = vmatpush1.msra.mxu0 0.0
        %1529 = vmatprep.subr.mxu0 0.0
        %1530 = vmatpush1.msra.mxu0 0.0
        %1531 = vmatprep.subr.mxu0 0.0
        %1532 = vmatpush1.msra.mxu0 0.0
        %1533 = vmatprep.subr.mxu0 0.0
        %1534 = vmatpush1.msra.mxu0 0.0
        %1535 = vmatprep.subr.mxu0 0.0
        %1536 = vmatpush1.msra.mxu0 0.0
        %1537 = vmatprep.subr.mxu0 0.0
        %1538 = vmatpush1.msra.mxu0 0.0
        %1539 = vmatprep.subr.mxu0 0.0
        %1540 = vmatpush1.msra.mxu0 0.0
        %1541 = vmatprep.subr.mxu0 0.0
        %1542 = vmatpush1.msra.mxu0 0.0
        %1543 = vmatprep.subr.mxu0 0.0
        %1544 = vmatpush1.msra.mxu0 0.0
        %1545 = vmatprep.subr.mxu0 0.0
        %1546 = vmatpush1.msra.mxu0 0.0
        %1547 = vmatprep.subr.mxu0 0.0
        %1548 = vmatpush1.msra.mxu0 0.0
        %1549 = vmatprep.subr.mxu0 0.0
        %1550 = vmatpush1.msra.mxu0 0.0
        %1551 = vmatprep.subr.mxu0 0.0
        %1552 = vmatpush1.msra.mxu0 0.0
        %1553 = vmatprep.subr.mxu0 0.0
        %1554 = vmatpush1.msra.mxu0 0.0
        %1555 = vmatprep.subr.mxu0 0.0
        %1556 = vmatpush1.msra.mxu0 0.0
        %1557 = vmatprep.subr.mxu0 0.0
        %1558 = vmatpush1.msra.mxu0 0.0
        %1559 = vmatprep.subr.mxu0 0.0
        %1560 = vmatpush1.msra.mxu0 0.0
        %1561 = vmatprep.subr.mxu0 0.0
        %1562 = vmatpush1.msra.mxu0 0.0
        %1563 = vmatprep.subr.mxu0 0.0
        %1564 = vmatpush1.msra.mxu0 0.0
        %1565 = vmatprep.subr.mxu0 0.0
        %1566 = vmatpush1.msra.mxu0 0.0
        %1567 = vmatprep.subr.mxu0 0.0
        %1568 = vmatpush1.msra.mxu0 0.0
        %1569 = vmatprep.mubr.f32.mxu0 0.0
        %1570 = vmatmul.mubr.f32.gmra.mrb[0].mxu0 %v900
        %v1571 = vpop.f32.mrb[0].mxu0
        %v1572 = vadd.f32 0.0, %v1571
        %v1573 = vpop.f32.mrb[0].mxu0
        %1574 = vmatprep.mubr.f32.mxu0 0.0
        %1575 = vmatmul.mubr.f32.gmra.mrb[0].mxu0 %v903
        %v1576 = vpop.f32.mrb[0].mxu0
        %v1577 = vadd.f32 0.0, %v1576
        %v1578 = vpop.f32.mrb[0].mxu0
        %1579 = vdwg.mxu0
        %1580 = vmatprep.subr.mxu0 0.0
        %1581 = vmatpush1.msra.mxu0 %v867
        %1582 = vmatprep.subr.mxu0 0.0
        %1583 = vmatpush1.msra.mxu0 %v868
        %1584 = vmatprep.subr.mxu0 0.0
        %1585 = vmatpush1.msra.mxu0 %v869
        %1586 = vmatprep.subr.mxu0 0.0
        %1587 = vmatpush1.msra.mxu0 %v870
        %1588 = vmatprep.subr.mxu0 0.0
        %1589 = vmatpush1.msra.mxu0 %v871
        %1590 = vmatprep.subr.mxu0 0.0
        %1591 = vmatpush1.msra.mxu0 %v872
        %1592 = vmatprep.subr.mxu0 0.0
        %1593 = vmatpush1.msra.mxu0 %v873
        %1594 = vmatprep.subr.mxu0 0.0
        %1595 = vmatpush1.msra.mxu0 %v874
        %1596 = vmatprep.subr.mxu0 0.0
        %1597 = vmatpush1.msra.mxu0 0.0
        %1598 = vmatprep.subr.mxu0 0.0
        %1599 = vmatpush1.msra.mxu0 0.0
        %1600 = vmatprep.subr.mxu0 0.0
        %1601 = vmatpush1.msra.mxu0 0.0
        %1602 = vmatprep.subr.mxu0 0.0
        %1603 = vmatpush1.msra.mxu0 0.0
        %1604 = vmatprep.subr.mxu0 0.0
        %1605 = vmatpush1.msra.mxu0 0.0
        %1606 = vmatprep.subr.mxu0 0.0
        %1607 = vmatpush1.msra.mxu0 0.0
        %1608 = vmatprep.subr.mxu0 0.0
        %1609 = vmatpush1.msra.mxu0 0.0
        %1610 = vmatprep.subr.mxu0 0.0
        %1611 = vmatpush1.msra.mxu0 0.0
        %1612 = vmatprep.subr.mxu0 0.0
        %1613 = vmatpush1.msra.mxu0 0.0
        %1614 = vmatprep.subr.mxu0 0.0
        %1615 = vmatpush1.msra.mxu0 0.0
        %1616 = vmatprep.subr.mxu0 0.0
        %1617 = vmatpush1.msra.mxu0 0.0
        %1618 = vmatprep.subr.mxu0 0.0
        %1619 = vmatpush1.msra.mxu0 0.0
        %1620 = vmatprep.subr.mxu0 0.0
        %1621 = vmatpush1.msra.mxu0 0.0
        %1622 = vmatprep.subr.mxu0 0.0
        %1623 = vmatpush1.msra.mxu0 0.0
        %1624 = vmatprep.subr.mxu0 0.0
        %1625 = vmatpush1.msra.mxu0 0.0
        %1626 = vmatprep.subr.mxu0 0.0
        %1627 = vmatpush1.msra.mxu0 0.0
        %1628 = vmatprep.subr.mxu0 0.0
        %1629 = vmatpush1.msra.mxu0 0.0
        %1630 = vmatprep.subr.mxu0 0.0
        %1631 = vmatpush1.msra.mxu0 0.0
        %1632 = vmatprep.subr.mxu0 0.0
        %1633 = vmatpush1.msra.mxu0 0.0
        %1634 = vmatprep.subr.mxu0 0.0
        %1635 = vmatpush1.msra.mxu0 0.0
        %1636 = vmatprep.subr.mxu0 0.0
        %1637 = vmatpush1.msra.mxu0 0.0
        %1638 = vmatprep.subr.mxu0 0.0
        %1639 = vmatpush1.msra.mxu0 0.0
        %1640 = vmatprep.subr.mxu0 0.0
        %1641 = vmatpush1.msra.mxu0 0.0
        %1642 = vmatprep.subr.mxu0 0.0
        %1643 = vmatpush1.msra.mxu0 0.0
        %1644 = vmatprep.mubr.f32.mxu0 0.0
        %1645 = vmatmul.mubr.f32.gmra.mrb[0].mxu0 %v900
        %v1646 = vpop.f32.mrb[0].mxu0
        %v1647 = vadd.f32 0.0, %v1646
        %v1648 = vpop.f32.mrb[0].mxu0
        %1649 = vmatprep.mubr.f32.mxu0 0.0
        %1650 = vmatmul.mubr.f32.gmra.mrb[0].mxu0 %v903
        %v1651 = vpop.f32.mrb[0].mxu0
        %v1652 = vadd.f32 0.0, %v1651
        %v1653 = vpop.f32.mrb[0].mxu0
        %1654 = vdwg.mxu0
        %1655 = vmatprep.subr.mxu0 0.0
        %1656 = vmatpush1.msra.mxu0 %v875
        %1657 = vmatprep.subr.mxu0 0.0
        %1658 = vmatpush1.msra.mxu0 %v876
        %1659 = vmatprep.subr.mxu0 0.0
        %1660 = vmatpush1.msra.mxu0 %v877
        %1661 = vmatprep.subr.mxu0 0.0
        %1662 = vmatpush1.msra.mxu0 %v878
        %1663 = vmatprep.subr.mxu0 0.0
        %1664 = vmatpush1.msra.mxu0 %v879
        %1665 = vmatprep.subr.mxu0 0.0
        %1666 = vmatpush1.msra.mxu0 %v880
        %1667 = vmatprep.subr.mxu0 0.0
        %1668 = vmatpush1.msra.mxu0 %v881
        %1669 = vmatprep.subr.mxu0 0.0
        %1670 = vmatpush1.msra.mxu0 %v882
        %1671 = vmatprep.subr.mxu0 0.0
        %1672 = vmatpush1.msra.mxu0 0.0
        %1673 = vmatprep.subr.mxu0 0.0
        %1674 = vmatpush1.msra.mxu0 0.0
        %1675 = vmatprep.subr.mxu0 0.0
        %1676 = vmatpush1.msra.mxu0 0.0
        %1677 = vmatprep.subr.mxu0 0.0
        %1678 = vmatpush1.msra.mxu0 0.0
        %1679 = vmatprep.subr.mxu0 0.0
        %1680 = vmatpush1.msra.mxu0 0.0
        %1681 = vmatprep.subr.mxu0 0.0
        %1682 = vmatpush1.msra.mxu0 0.0
        %1683 = vmatprep.subr.mxu0 0.0
        %1684 = vmatpush1.msra.mxu0 0.0
        %1685 = vmatprep.subr.mxu0 0.0
        %1686 = vmatpush1.msra.mxu0 0.0
        %1687 = vmatprep.subr.mxu0 0.0
        %1688 = vmatpush1.msra.mxu0 0.0
        %1689 = vmatprep.subr.mxu0 0.0
        %1690 = vmatpush1.msra.mxu0 0.0
        %1691 = vmatprep.subr.mxu0 0.0
        %1692 = vmatpush1.msra.mxu0 0.0
        %1693 = vmatprep.subr.mxu0 0.0
        %1694 = vmatpush1.msra.mxu0 0.0
        %1695 = vmatprep.subr.mxu0 0.0
        %1696 = vmatpush1.msra.mxu0 0.0
        %1697 = vmatprep.subr.mxu0 0.0
        %1698 = vmatpush1.msra.mxu0 0.0
        %1699 = vmatprep.subr.mxu0 0.0
        %1700 = vmatpush1.msra.mxu0 0.0
        %1701 = vmatprep.subr.mxu0 0.0
        %1702 = vmatpush1.msra.mxu0 0.0
        %1703 = vmatprep.subr.mxu0 0.0
        %1704 = vmatpush1.msra.mxu0 0.0
        %1705 = vmatprep.subr.mxu0 0.0
        %1706 = vmatpush1.msra.mxu0 0.0
        %1707 = vmatprep.subr.mxu0 0.0
        %1708 = vmatpush1.msra.mxu0 0.0
        %1709 = vmatprep.subr.mxu0 0.0
        %1710 = vmatpush1.msra.mxu0 0.0
        %1711 = vmatprep.subr.mxu0 0.0
        %1712 = vmatpush1.msra.mxu0 0.0
        %1713 = vmatprep.subr.mxu0 0.0
        %1714 = vmatpush1.msra.mxu0 0.0
        %1715 = vmatprep.subr.mxu0 0.0
        %1716 = vmatpush1.msra.mxu0 0.0
        %1717 = vmatprep.subr.mxu0 0.0
        %1718 = vmatpush1.msra.mxu0 0.0
        %1719 = vmatprep.mubr.f32.mxu0 0.0
        %1720 = vmatmul.mubr.f32.gmra.mrb[0].mxu0 %v900
        %v1721 = vpop.f32.mrb[0].mxu0
        %v1722 = vadd.f32 0.0, %v1721
        %v1723 = vpop.f32.mrb[0].mxu0
        %1724 = vmatprep.mubr.f32.mxu0 0.0
        %1725 = vmatmul.mubr.f32.gmra.mrb[0].mxu0 %v903
        %v1726 = vpop.f32.mrb[0].mxu0
        %v1727 = vadd.f32 0.0, %v1726
        %v1728 = vpop.f32.mrb[0].mxu0
        %1729 = vdwg.mxu0
        %1730 = vmatprep.subr.mxu0 0.0
        %1731 = vmatpush1.msra.mxu0 %v883
        %1732 = vmatprep.subr.mxu0 0.0
        %1733 = vmatpush1.msra.mxu0 %v884
        %1734 = vmatprep.subr.mxu0 0.0
        %1735 = vmatpush1.msra.mxu0 %v885
        %1736 = vmatprep.subr.mxu0 0.0
        %1737 = vmatpush1.msra.mxu0 %v886
        %1738 = vmatprep.subr.mxu0 0.0
        %1739 = vmatpush1.msra.mxu0 %v887
        %1740 = vmatprep.subr.mxu0 0.0
        %1741 = vmatpush1.msra.mxu0 %v888
        %1742 = vmatprep.subr.mxu0 0.0
        %1743 = vmatpush1.msra.mxu0 %v889
        %1744 = vmatprep.subr.mxu0 0.0
        %1745 = vmatpush1.msra.mxu0 %v890
        %1746 = vmatprep.subr.mxu0 0.0
        %1747 = vmatpush1.msra.mxu0 0.0
        %1748 = vmatprep.subr.mxu0 0.0
        %1749 = vmatpush1.msra.mxu0 0.0
        %1750 = vmatprep.subr.mxu0 0.0
        %1751 = vmatpush1.msra.mxu0 0.0
        %1752 = vmatprep.subr.mxu0 0.0
        %1753 = vmatpush1.msra.mxu0 0.0
        %1754 = vmatprep.subr.mxu0 0.0
        %1755 = vmatpush1.msra.mxu0 0.0
        %1756 = vmatprep.subr.mxu0 0.0
        %1757 = vmatpush1.msra.mxu0 0.0
        %1758 = vmatprep.subr.mxu0 0.0
        %1759 = vmatpush1.msra.mxu0 0.0
        %1760 = vmatprep.subr.mxu0 0.0
        %1761 = vmatpush1.msra.mxu0 0.0
        %1762 = vmatprep.subr.mxu0 0.0
        %1763 = vmatpush1.msra.mxu0 0.0
        %1764 = vmatprep.subr.mxu0 0.0
        %1765 = vmatpush1.msra.mxu0 0.0
        %1766 = vmatprep.subr.mxu0 0.0
        %1767 = vmatpush1.msra.mxu0 0.0
        %1768 = vmatprep.subr.mxu0 0.0
        %1769 = vmatpush1.msra.mxu0 0.0
        %1770 = vmatprep.subr.mxu0 0.0
        %1771 = vmatpush1.msra.mxu0 0.0
        %1772 = vmatprep.subr.mxu0 0.0
        %1773 = vmatpush1.msra.mxu0 0.0
        %1774 = vmatprep.subr.mxu0 0.0
        %1775 = vmatpush1.msra.mxu0 0.0
        %1776 = vmatprep.subr.mxu0 0.0
        %1777 = vmatpush1.msra.mxu0 0.0
        %1778 = vmatprep.subr.mxu0 0.0
        %1779 = vmatpush1.msra.mxu0 0.0
        %1780 = vmatprep.subr.mxu0 0.0
        %1781 = vmatpush1.msra.mxu0 0.0
        %1782 = vmatprep.subr.mxu0 0.0
        %1783 = vmatpush1.msra.mxu0 0.0
        %1784 = vmatprep.subr.mxu0 0.0
        %1785 = vmatpush1.msra.mxu0 0.0
        %1786 = vmatprep.subr.mxu0 0.0
        %1787 = vmatpush1.msra.mxu0 0.0
        %1788 = vmatprep.subr.mxu0 0.0
        %1789 = vmatpush1.msra.mxu0 0.0
        %1790 = vmatprep.subr.mxu0 0.0
        %1791 = vmatpush1.msra.mxu0 0.0
        %1792 = vmatprep.subr.mxu0 0.0
        %1793 = vmatpush1.msra.mxu0 0.0
        %1794 = vmatprep.mubr.f32.mxu0 0.0
        %1795 = vmatmul.mubr.f32.gmra.mrb[0].mxu0 %v900
        %v1796 = vpop.f32.mrb[0].mxu0
        %v1797 = vadd.f32 0.0, %v1796
        %v1798 = vpop.f32.mrb[0].mxu0
        %1799 = vmatprep.mubr.f32.mxu0 0.0
        %1800 = vmatmul.mubr.f32.gmra.mrb[0].mxu0 %v903
        %v1801 = vpop.f32.mrb[0].mxu0
        %v1802 = vadd.f32 0.0, %v1801
        %v1803 = vpop.f32.mrb[0].mxu0
        %1804 = vdwg.mxu0
        %vm1805 = vcmask 130048
        %v1807 = vsel %vm1805, %v972, 0
        %v1810 = vsel %vm1805, %v977, 0
        %v1813 = vsel %vm1805, %v1272, 0
        %v1816 = vsel %vm1805, %v1277, 0
        %1818 = vmatprep.subr.mxu0 0.0
        %1819 = vmatpush1.xpose.msra.mxu0 %v1813
        %1820 = vmatprep.subr.mxu0 0.0
        %1821 = vmatpush1.xpose.msra.mxu0 %v1816
        %1822 = vmatprep.subr.mxu0 0.0
        %1823 = vmatpush1.xpose.msra.mxu0 0.0
        %1824 = vmatprep.subr.mxu0 0.0
        %1825 = vmatpush1.xpose.msra.mxu0 0.0
        %1826 = vmatprep.subr.mxu0 0.0
        %1827 = vmatpush1.xpose.msra.mxu0 0.0
        %1828 = vmatprep.subr.mxu0 0.0
        %1829 = vmatpush1.xpose.msra.mxu0 0.0
        %1830 = vmatprep.subr.mxu0 0.0
        %1831 = vmatpush1.xpose.msra.mxu0 0.0
        %1832 = vmatprep.subr.mxu0 0.0
        %1833 = vmatpush1.xpose.msra.mxu0 0.0
        %1834 = vmatprep.subr.mxu0 0.0
        %1835 = vmatpush1.xpose.msra.mxu0 0.0
        %1836 = vmatprep.subr.mxu0 0.0
        %1837 = vmatpush1.xpose.msra.mxu0 0.0
        %1838 = vmatprep.subr.mxu0 0.0
        %1839 = vmatpush1.xpose.msra.mxu0 0.0
        %1840 = vmatprep.subr.mxu0 0.0
        %1841 = vmatpush1.xpose.msra.mxu0 0.0
        %1842 = vmatprep.subr.mxu0 0.0
        %1843 = vmatpush1.xpose.msra.mxu0 0.0
        %1844 = vmatprep.subr.mxu0 0.0
        %1845 = vmatpush1.xpose.msra.mxu0 0.0
        %1846 = vmatprep.subr.mxu0 0.0
        %1847 = vmatpush1.xpose.msra.mxu0 0.0
        %1848 = vmatprep.subr.mxu0 0.0
        %1849 = vmatpush1.xpose.msra.mxu0 0.0
        %1850 = vmatprep.subr.mxu0 0.0
        %1851 = vmatpush1.xpose.msra.mxu0 0.0
        %1852 = vmatprep.subr.mxu0 0.0
        %1853 = vmatpush1.xpose.msra.mxu0 0.0
        %1854 = vmatprep.subr.mxu0 0.0
        %1855 = vmatpush1.xpose.msra.mxu0 0.0
        %1856 = vmatprep.subr.mxu0 0.0
        %1857 = vmatpush1.xpose.msra.mxu0 0.0
        %1858 = vmatprep.subr.mxu0 0.0
        %1859 = vmatpush1.xpose.msra.mxu0 0.0
        %1860 = vmatprep.subr.mxu0 0.0
        %1861 = vmatpush1.xpose.msra.mxu0 0.0
        %1862 = vmatprep.subr.mxu0 0.0
        %1863 = vmatpush1.xpose.msra.mxu0 0.0
        %1864 = vmatprep.subr.mxu0 0.0
        %1865 = vmatpush1.xpose.msra.mxu0 0.0
        %1866 = vmatprep.subr.mxu0 0.0
        %1867 = vmatpush1.xpose.msra.mxu0 0.0
        %1868 = vmatprep.subr.mxu0 0.0
        %1869 = vmatpush1.xpose.msra.mxu0 0.0
        %1870 = vmatprep.subr.mxu0 0.0
        %1871 = vmatpush1.xpose.msra.mxu0 0.0
        %1872 = vmatprep.subr.mxu0 0.0
        %1873 = vmatpush1.xpose.msra.mxu0 0.0
        %1874 = vmatprep.subr.mxu0 0.0
        %1875 = vmatpush1.xpose.msra.mxu0 0.0
        %1876 = vmatprep.subr.mxu0 0.0
        %1877 = vmatpush1.xpose.msra.mxu0 0.0
        %1878 = vmatprep.subr.mxu0 0.0
        %1879 = vmatpush1.xpose.msra.mxu0 0.0
        %1880 = vmatprep.subr.mxu0 0.0
        %1881 = vmatpush1.xpose.msra.mxu0 0.0
        %1882 = vmatprep.mubr.f32.mxu0 0.0
        %1883 = vmatmul.mubr.f32.gmra.mrb[0].mxu0 %v1807
        %v1884 = vpop.f32.mrb[0].mxu0
        %v1885 = vadd.f32 0.0, %v1884
        %v1886 = vpop.f32.mrb[0].mxu0
        %1887 = vmatprep.mubr.f32.mxu0 0.0
        %1888 = vmatmul.mubr.f32.gmra.mrb[0].mxu0 %v1810
        %v1889 = vpop.f32.mrb[0].mxu0
        %v1890 = vadd.f32 0.0, %v1889
        %v1891 = vpop.f32.mrb[0].mxu0
        %1892 = vdwg.mxu0
        %v1894 = vsel %vm1805, %v1047, 0
        %v1897 = vsel %vm1805, %v1052, 0
        %v1900 = vsel %vm1805, %v1347, 0
        %v1903 = vsel %vm1805, %v1352, 0
        %1905 = vmatprep.subr.mxu0 0.0
        %1906 = vmatpush1.xpose.msra.mxu0 %v1900
        %1907 = vmatprep.subr.mxu0 0.0
        %1908 = vmatpush1.xpose.msra.mxu0 %v1903
        %1909 = vmatprep.subr.mxu0 0.0
        %1910 = vmatpush1.xpose.msra.mxu0 0.0
        %1911 = vmatprep.subr.mxu0 0.0
        %1912 = vmatpush1.xpose.msra.mxu0 0.0
        %1913 = vmatprep.subr.mxu0 0.0
        %1914 = vmatpush1.xpose.msra.mxu0 0.0
        %1915 = vmatprep.subr.mxu0 0.0
        %1916 = vmatpush1.xpose.msra.mxu0 0.0
        %1917 = vmatprep.subr.mxu0 0.0
        %1918 = vmatpush1.xpose.msra.mxu0 0.0
        %1919 = vmatprep.subr.mxu0 0.0
        %1920 = vmatpush1.xpose.msra.mxu0 0.0
        %1921 = vmatprep.subr.mxu0 0.0
        %1922 = vmatpush1.xpose.msra.mxu0 0.0
        %1923 = vmatprep.subr.mxu0 0.0
        %1924 = vmatpush1.xpose.msra.mxu0 0.0
        %1925 = vmatprep.subr.mxu0 0.0
        %1926 = vmatpush1.xpose.msra.mxu0 0.0
        %1927 = vmatprep.subr.mxu0 0.0
        %1928 = vmatpush1.xpose.msra.mxu0 0.0
        %1929 = vmatprep.subr.mxu0 0.0
        %1930 = vmatpush1.xpose.msra.mxu0 0.0
        %1931 = vmatprep.subr.mxu0 0.0
        %1932 = vmatpush1.xpose.msra.mxu0 0.0
        %1933 = vmatprep.subr.mxu0 0.0
        %1934 = vmatpush1.xpose.msra.mxu0 0.0
        %1935 = vmatprep.subr.mxu0 0.0
        %1936 = vmatpush1.xpose.msra.mxu0 0.0
        %1937 = vmatprep.subr.mxu0 0.0
        %1938 = vmatpush1.xpose.msra.mxu0 0.0
        %1939 = vmatprep.subr.mxu0 0.0
        %1940 = vmatpush1.xpose.msra.mxu0 0.0
        %1941 = vmatprep.subr.mxu0 0.0
        %1942 = vmatpush1.xpose.msra.mxu0 0.0
        %1943 = vmatprep.subr.mxu0 0.0
        %1944 = vmatpush1.xpose.msra.mxu0 0.0
        %1945 = vmatprep.subr.mxu0 0.0
        %1946 = vmatpush1.xpose.msra.mxu0 0.0
        %1947 = vmatprep.subr.mxu0 0.0
        %1948 = vmatpush1.xpose.msra.mxu0 0.0
        %1949 = vmatprep.subr.mxu0 0.0
        %1950 = vmatpush1.xpose.msra.mxu0 0.0
        %1951 = vmatprep.subr.mxu0 0.0
        %1952 = vmatpush1.xpose.msra.mxu0 0.0
        %1953 = vmatprep.subr.mxu0 0.0
        %1954 = vmatpush1.xpose.msra.mxu0 0.0
        %1955 = vmatprep.subr.mxu0 0.0
        %1956 = vmatpush1.xpose.msra.mxu0 0.0
        %1957 = vmatprep.subr.mxu0 0.0
        %1958 = vmatpush1.xpose.msra.mxu0 0.0
        %1959 = vmatprep.subr.mxu0 0.0
        %1960 = vmatpush1.xpose.msra.mxu0 0.0
        %1961 = vmatprep.subr.mxu0 0.0
        %1962 = vmatpush1.xpose.msra.mxu0 0.0
        %1963 = vmatprep.subr.mxu0 0.0
        %1964 = vmatpush1.xpose.msra.mxu0 0.0
        %1965 = vmatprep.subr.mxu0 0.0
        %1966 = vmatpush1.xpose.msra.mxu0 0.0
        %1967 = vmatprep.subr.mxu0 0.0
        %1968 = vmatpush1.xpose.msra.mxu0 0.0
        %1969 = vmatprep.mubr.f32.mxu0 0.0
        %1970 = vmatmul.mubr.f32.gmra.mrb[0].mxu0 %v1894
        %v1971 = vpop.f32.mrb[0].mxu0
        %v1972 = vadd.f32 0.0, %v1971
        %v1973 = vpop.f32.mrb[0].mxu0
        %1974 = vmatprep.mubr.f32.mxu0 0.0
        %1975 = vmatmul.mubr.f32.gmra.mrb[0].mxu0 %v1897
        %v1976 = vpop.f32.mrb[0].mxu0
        %v1977 = vadd.f32 0.0, %v1976
        %v1978 = vpop.f32.mrb[0].mxu0
        %1979 = vdwg.mxu0
        %v1981 = vsel %vm1805, %v1122, 0
        %v1984 = vsel %vm1805, %v1127, 0
        %v1987 = vsel %vm1805, %v1422, 0
        %v1990 = vsel %vm1805, %v1427, 0
        %1992 = vmatprep.subr.mxu0 0.0
        %1993 = vmatpush1.xpose.msra.mxu0 %v1987
        %1994 = vmatprep.subr.mxu0 0.0
        %1995 = vmatpush1.xpose.msra.mxu0 %v1990
        %1996 = vmatprep.subr.mxu0 0.0
        %1997 = vmatpush1.xpose.msra.mxu0 0.0
        %1998 = vmatprep.subr.mxu0 0.0
        %1999 = vmatpush1.xpose.msra.mxu0 0.0
        %2000 = vmatprep.subr.mxu0 0.0
        %2001 = vmatpush1.xpose.msra.mxu0 0.0
        %2002 = vmatprep.subr.mxu0 0.0
        %2003 = vmatpush1.xpose.msra.mxu0 0.0
        %2004 = vmatprep.subr.mxu0 0.0
        %2005 = vmatpush1.xpose.msra.mxu0 0.0
        %2006 = vmatprep.subr.mxu0 0.0
        %2007 = vmatpush1.xpose.msra.mxu0 0.0
        %2008 = vmatprep.subr.mxu0 0.0
        %2009 = vmatpush1.xpose.msra.mxu0 0.0
        %2010 = vmatprep.subr.mxu0 0.0
        %2011 = vmatpush1.xpose.msra.mxu0 0.0
        %2012 = vmatprep.subr.mxu0 0.0
        %2013 = vmatpush1.xpose.msra.mxu0 0.0
        %2014 = vmatprep.subr.mxu0 0.0
        %2015 = vmatpush1.xpose.msra.mxu0 0.0
        %2016 = vmatprep.subr.mxu0 0.0
        %2017 = vmatpush1.xpose.msra.mxu0 0.0
        %2018 = vmatprep.subr.mxu0 0.0
        %2019 = vmatpush1.xpose.msra.mxu0 0.0
        %2020 = vmatprep.subr.mxu0 0.0
        %2021 = vmatpush1.xpose.msra.mxu0 0.0
        %2022 = vmatprep.subr.mxu0 0.0
        %2023 = vmatpush1.xpose.msra.mxu0 0.0
        %2024 = vmatprep.subr.mxu0 0.0
        %2025 = vmatpush1.xpose.msra.mxu0 0.0
        %2026 = vmatprep.subr.mxu0 0.0
        %2027 = vmatpush1.xpose.msra.mxu0 0.0
        %2028 = vmatprep.subr.mxu0 0.0
        %2029 = vmatpush1.xpose.msra.mxu0 0.0
        %2030 = vmatprep.subr.mxu0 0.0
        %2031 = vmatpush1.xpose.msra.mxu0 0.0
        %2032 = vmatprep.subr.mxu0 0.0
        %2033 = vmatpush1.xpose.msra.mxu0 0.0
        %2034 = vmatprep.subr.mxu0 0.0
        %2035 = vmatpush1.xpose.msra.mxu0 0.0
        %2036 = vmatprep.subr.mxu0 0.0
        %2037 = vmatpush1.xpose.msra.mxu0 0.0
        %2038 = vmatprep.subr.mxu0 0.0
        %2039 = vmatpush1.xpose.msra.mxu0 0.0
        %2040 = vmatprep.subr.mxu0 0.0
        %2041 = vmatpush1.xpose.msra.mxu0 0.0
        %2042 = vmatprep.subr.mxu0 0.0
        %2043 = vmatpush1.xpose.msra.mxu0 0.0
        %2044 = vmatprep.subr.mxu0 0.0
        %2045 = vmatpush1.xpose.msra.mxu0 0.0
        %2046 = vmatprep.subr.mxu0 0.0
        %2047 = vmatpush1.xpose.msra.mxu0 0.0
        %2048 = vmatprep.subr.mxu0 0.0
        %2049 = vmatpush1.xpose.msra.mxu0 0.0
        %2050 = vmatprep.subr.mxu0 0.0
        %2051 = vmatpush1.xpose.msra.mxu0 0.0
        %2052 = vmatprep.subr.mxu0 0.0
        %2053 = vmatpush1.xpose.msra.mxu0 0.0
        %2054 = vmatprep.subr.mxu0 0.0
        %2055 = vmatpush1.xpose.msra.mxu0 0.0
        %2056 = vmatprep.mubr.f32.mxu0 0.0
        %2057 = vmatmul.mubr.f32.gmra.mrb[0].mxu0 %v1981
        %v2058 = vpop.f32.mrb[0].mxu0
        %v2059 = vadd.f32 0.0, %v2058
        %v2060 = vpop.f32.mrb[0].mxu0
        %2061 = vmatprep.mubr.f32.mxu0 0.0
        %2062 = vmatmul.mubr.f32.gmra.mrb[0].mxu0 %v1984
        %v2063 = vpop.f32.mrb[0].mxu0
        %v2064 = vadd.f32 0.0, %v2063
        %v2065 = vpop.f32.mrb[0].mxu0
        %2066 = vdwg.mxu0
        %v2068 = vsel %vm1805, %v1197, 0
        %v2071 = vsel %vm1805, %v1202, 0
        %v2074 = vsel %vm1805, %v1497, 0
        %v2077 = vsel %vm1805, %v1502, 0
        %2079 = vmatprep.subr.mxu0 0.0
        %2080 = vmatpush1.xpose.msra.mxu0 %v2074
        %2081 = vmatprep.subr.mxu0 0.0
        %2082 = vmatpush1.xpose.msra.mxu0 %v2077
        %2083 = vmatprep.subr.mxu0 0.0
        %2084 = vmatpush1.xpose.msra.mxu0 0.0
        %2085 = vmatprep.subr.mxu0 0.0
        %2086 = vmatpush1.xpose.msra.mxu0 0.0
        %2087 = vmatprep.subr.mxu0 0.0
        %2088 = vmatpush1.xpose.msra.mxu0 0.0
        %2089 = vmatprep.subr.mxu0 0.0
        %2090 = vmatpush1.xpose.msra.mxu0 0.0
        %2091 = vmatprep.subr.mxu0 0.0
        %2092 = vmatpush1.xpose.msra.mxu0 0.0
        %2093 = vmatprep.subr.mxu0 0.0
        %2094 = vmatpush1.xpose.msra.mxu0 0.0
        %2095 = vmatprep.subr.mxu0 0.0
        %2096 = vmatpush1.xpose.msra.mxu0 0.0
        %2097 = vmatprep.subr.mxu0 0.0
        %2098 = vmatpush1.xpose.msra.mxu0 0.0
        %2099 = vmatprep.subr.mxu0 0.0
        %2100 = vmatpush1.xpose.msra.mxu0 0.0
        %2101 = vmatprep.subr.mxu0 0.0
        %2102 = vmatpush1.xpose.msra.mxu0 0.0
        %2103 = vmatprep.subr.mxu0 0.0
        %2104 = vmatpush1.xpose.msra.mxu0 0.0
        %2105 = vmatprep.subr.mxu0 0.0
        %2106 = vmatpush1.xpose.msra.mxu0 0.0
        %2107 = vmatprep.subr.mxu0 0.0
        %2108 = vmatpush1.xpose.msra.mxu0 0.0
        %2109 = vmatprep.subr.mxu0 0.0
        %2110 = vmatpush1.xpose.msra.mxu0 0.0
        %2111 = vmatprep.subr.mxu0 0.0
        %2112 = vmatpush1.xpose.msra.mxu0 0.0
        %2113 = vmatprep.subr.mxu0 0.0
        %2114 = vmatpush1.xpose.msra.mxu0 0.0
        %2115 = vmatprep.subr.mxu0 0.0
        %2116 = vmatpush1.xpose.msra.mxu0 0.0
        %2117 = vmatprep.subr.mxu0 0.0
        %2118 = vmatpush1.xpose.msra.mxu0 0.0
        %2119 = vmatprep.subr.mxu0 0.0
        %2120 = vmatpush1.xpose.msra.mxu0 0.0
        %2121 = vmatprep.subr.mxu0 0.0
        %2122 = vmatpush1.xpose.msra.mxu0 0.0
        %2123 = vmatprep.subr.mxu0 0.0
        %2124 = vmatpush1.xpose.msra.mxu0 0.0
        %2125 = vmatprep.subr.mxu0 0.0
        %2126 = vmatpush1.xpose.msra.mxu0 0.0
        %2127 = vmatprep.subr.mxu0 0.0
        %2128 = vmatpush1.xpose.msra.mxu0 0.0
        %2129 = vmatprep.subr.mxu0 0.0
        %2130 = vmatpush1.xpose.msra.mxu0 0.0
        %2131 = vmatprep.subr.mxu0 0.0
        %2132 = vmatpush1.xpose.msra.mxu0 0.0
        %2133 = vmatprep.subr.mxu0 0.0
        %2134 = vmatpush1.xpose.msra.mxu0 0.0
        %2135 = vmatprep.subr.mxu0 0.0
        %2136 = vmatpush1.xpose.msra.mxu0 0.0
        %2137 = vmatprep.subr.mxu0 0.0
        %2138 = vmatpush1.xpose.msra.mxu0 0.0
        %2139 = vmatprep.subr.mxu0 0.0
        %2140 = vmatpush1.xpose.msra.mxu0 0.0
        %2141 = vmatprep.subr.mxu0 0.0
        %2142 = vmatpush1.xpose.msra.mxu0 0.0
        %2143 = vmatprep.mubr.f32.mxu0 0.0
        %2144 = vmatmul.mubr.f32.gmra.mrb[0].mxu0 %v2068
        %v2145 = vpop.f32.mrb[0].mxu0
        %v2146 = vadd.f32 0.0, %v2145
        %v2147 = vpop.f32.mrb[0].mxu0
        %2148 = vmatprep.mubr.f32.mxu0 0.0
        %2149 = vmatmul.mubr.f32.gmra.mrb[0].mxu0 %v2071
        %v2150 = vpop.f32.mrb[0].mxu0
        %v2151 = vadd.f32 0.0, %v2150
        %v2152 = vpop.f32.mrb[0].mxu0
        %2153 = vdwg.mxu0
        %v2154 = vsel %vm1805, %v1885, -inf
        %2155 = vmax.xlane.f32.xlu0 %v2154
        %v2156 = vpop.xlane.xlu0 %2155
        %v2157 = vsel %vm1805, %v1890, -inf
        %2158 = vmax.xlane.f32.xlu0 %v2157
        %v2159 = vpop.xlane.xlu0 %2158
        %v2160 = vsel %vm1805, %v1972, -inf
        %2161 = vmax.xlane.f32.xlu0 %v2160
        %v2162 = vpop.xlane.xlu0 %2161
        %v2163 = vsel %vm1805, %v1977, -inf
        %2164 = vmax.xlane.f32.xlu0 %v2163
        %v2165 = vpop.xlane.xlu0 %2164
        %v2166 = vsel %vm1805, %v2059, -inf
        %2167 = vmax.xlane.f32.xlu0 %v2166
        %v2168 = vpop.xlane.xlu0 %2167
        %v2169 = vsel %vm1805, %v2064, -inf
        %2170 = vmax.xlane.f32.xlu0 %v2169
        %v2171 = vpop.xlane.xlu0 %2170
        %v2172 = vsel %vm1805, %v2146, -inf
        %2173 = vmax.xlane.f32.xlu0 %v2172
        %v2174 = vpop.xlane.xlu0 %2173
        %v2175 = vsel %vm1805, %v2151, -inf
        %2176 = vmax.xlane.f32.xlu0 %v2175
        %v2177 = vpop.xlane.xlu0 %2176
        %v2178 = vsub.f32 %v1885, %v2156
        %v2179 = vsub.f32 %v1890, %v2159
        %v2180 = vsub.f32 %v1972, %v2162
        %v2181 = vsub.f32 %v1977, %v2165
        %v2182 = vsub.f32 %v2059, %v2168
        %v2183 = vsub.f32 %v2064, %v2171
        %v2184 = vsub.f32 %v2146, %v2174
        %v2185 = vsub.f32 %v2151, %v2177
        %v2186 = vmul.f32 %v2178, 1.442695
        %v2187 = vpow.pop %v2186
        %v2188 = vmul.f32 %v2179, 1.442695
        %v2189 = vpow.pop %v2188
        %v2190 = vmul.f32 %v2180, 1.442695
        %v2191 = vpow.pop %v2190
        %v2192 = vmul.f32 %v2181, 1.442695
        %v2193 = vpow.pop %v2192
        %v2194 = vmul.f32 %v2182, 1.442695
        %v2195 = vpow.pop %v2194
        %v2196 = vmul.f32 %v2183, 1.442695
        %v2197 = vpow.pop %v2196
        %v2198 = vmul.f32 %v2184, 1.442695
        %v2199 = vpow.pop %v2198
        %v2200 = vmul.f32 %v2185, 1.442695
        %v2201 = vpow.pop %v2200
        %v2202 = vsel %vm1805, %v2187, 0.0
        %2203 = vadd.xlane.f32.xlu0 %v2202
        %v2204 = vpop.xlane.xlu0 %2203
        %v2205 = vsel %vm1805, %v2189, 0.0
        %2206 = vadd.xlane.f32.xlu0 %v2205
        %v2207 = vpop.xlane.xlu0 %2206
        %v2208 = vsel %vm1805, %v2191, 0.0
        %2209 = vadd.xlane.f32.xlu0 %v2208
        %v2210 = vpop.xlane.xlu0 %2209
        %v2211 = vsel %vm1805, %v2193, 0.0
        %2212 = vadd.xlane.f32.xlu0 %v2211
        %v2213 = vpop.xlane.xlu0 %2212
        %v2214 = vsel %vm1805, %v2195, 0.0
        %2215 = vadd.xlane.f32.xlu0 %v2214
        %v2216 = vpop.xlane.xlu0 %2215
        %v2217 = vsel %vm1805, %v2197, 0.0
        %2218 = vadd.xlane.f32.xlu0 %v2217
        %v2219 = vpop.xlane.xlu0 %2218
        %v2220 = vsel %vm1805, %v2199, 0.0
        %2221 = vadd.xlane.f32.xlu0 %v2220
        %v2222 = vpop.xlane.xlu0 %2221
        %v2223 = vsel %vm1805, %v2201, 0.0
        %2224 = vadd.xlane.f32.xlu0 %v2223
        %v2225 = vpop.xlane.xlu0 %2224
        %v2226 = vrcp.pop %v2204
        %v2227 = vrcp.pop %v2207
        %v2228 = vrcp.pop %v2210
        %v2229 = vrcp.pop %v2213
        %v2230 = vrcp.pop %v2216
        %v2231 = vrcp.pop %v2219
        %v2232 = vrcp.pop %v2222
        %v2233 = vrcp.pop %v2225
        %v2234 = vmul.f32 %v2187, %v2226
        %v2235 = vmul.f32 %v2189, %v2227
        %v2236 = vmul.f32 %v2191, %v2228
        %v2237 = vmul.f32 %v2193, %v2229
        %v2238 = vmul.f32 %v2195, %v2230
        %v2239 = vmul.f32 %v2197, %v2231
        %v2240 = vmul.f32 %v2199, %v2232
        %v2241 = vmul.f32 %v2201, %v2233
        %v2243 = vsel %vm1805, %v2234, 0
        %v2246 = vsel %vm1805, %v2235, 0
        %2248 = vmatprep.subr.mxu0 0.0
        %2249 = vmatpush1.msra.mxu0 %v1572
        %2250 = vmatprep.subr.mxu0 0.0
        %2251 = vmatpush1.msra.mxu0 %v1577
        %2252 = vmatprep.subr.mxu0 0.0
        %2253 = vmatpush1.msra.mxu0 0.0
        %2254 = vmatprep.subr.mxu0 0.0
        %2255 = vmatpush1.msra.mxu0 0.0
        %2256 = vmatprep.subr.mxu0 0.0
        %2257 = vmatpush1.msra.mxu0 0.0
        %2258 = vmatprep.subr.mxu0 0.0
        %2259 = vmatpush1.msra.mxu0 0.0
        %2260 = vmatprep.subr.mxu0 0.0
        %2261 = vmatpush1.msra.mxu0 0.0
        %2262 = vmatprep.subr.mxu0 0.0
        %2263 = vmatpush1.msra.mxu0 0.0
        %2264 = vmatprep.subr.mxu0 0.0
        %2265 = vmatpush1.msra.mxu0 0.0
        %2266 = vmatprep.subr.mxu0 0.0
        %2267 = vmatpush1.msra.mxu0 0.0
        %2268 = vmatprep.subr.mxu0 0.0
        %2269 = vmatpush1.msra.mxu0 0.0
        %2270 = vmatprep.subr.mxu0 0.0
        %2271 = vmatpush1.msra.mxu0 0.0
        %2272 = vmatprep.subr.mxu0 0.0
        %2273 = vmatpush1.msra.mxu0 0.0
        %2274 = vmatprep.subr.mxu0 0.0
        %2275 = vmatpush1.msra.mxu0 0.0
        %2276 = vmatprep.subr.mxu0 0.0
        %2277 = vmatpush1.msra.mxu0 0.0
        %2278 = vmatprep.subr.mxu0 0.0
        %2279 = vmatpush1.msra.mxu0 0.0
        %2280 = vmatprep.subr.mxu0 0.0
        %2281 = vmatpush1.msra.mxu0 0.0
        %2282 = vmatprep.subr.mxu0 0.0
        %2283 = vmatpush1.msra.mxu0 0.0
        %2284 = vmatprep.subr.mxu0 0.0
        %2285 = vmatpush1.msra.mxu0 0.0
        %2286 = vmatprep.subr.mxu0 0.0
        %2287 = vmatpush1.msra.mxu0 0.0
        %2288 = vmatprep.subr.mxu0 0.0
        %2289 = vmatpush1.msra.mxu0 0.0
        %2290 = vmatprep.subr.mxu0 0.0
        %2291 = vmatpush1.msra.mxu0 0.0
        %2292 = vmatprep.subr.mxu0 0.0
        %2293 = vmatpush1.msra.mxu0 0.0
        %2294 = vmatprep.subr.mxu0 0.0
        %2295 = vmatpush1.msra.mxu0 0.0
        %2296 = vmatprep.subr.mxu0 0.0
        %2297 = vmatpush1.msra.mxu0 0.0
        %2298 = vmatprep.subr.mxu0 0.0
        %2299 = vmatpush1.msra.mxu0 0.0
        %2300 = vmatprep.subr.mxu0 0.0
        %2301 = vmatpush1.msra.mxu0 0.0
        %2302 = vmatprep.subr.mxu0 0.0
        %2303 = vmatpush1.msra.mxu0 0.0
        %2304 = vmatprep.subr.mxu0 0.0
        %2305 = vmatpush1.msra.mxu0 0.0
        %2306 = vmatprep.subr.mxu0 0.0
        %2307 = vmatpush1.msra.mxu0 0.0
        %2308 = vmatprep.subr.mxu0 0.0
        %2309 = vmatpush1.msra.mxu0 0.0
        %2310 = vmatprep.subr.mxu0 0.0
        %2311 = vmatpush1.msra.mxu0 0.0
        %2312 = vmatprep.mubr.f32.mxu0 0.0
        %2313 = vmatmul.mubr.f32.gmra.mrb[0].mxu0 %v2243
        %v2314 = vpop.f32.mrb[0].mxu0
        %v2315 = vadd.f32 0.0, %v2314
        %v2316 = vpop.f32.mrb[0].mxu0
        %2317 = vmatprep.mubr.f32.mxu0 0.0
        %2318 = vmatmul.mubr.f32.gmra.mrb[0].mxu0 %v2246
        %v2319 = vpop.f32.mrb[0].mxu0
        %v2320 = vadd.f32 0.0, %v2319
        %v2321 = vpop.f32.mrb[0].mxu0
        %2322 = vdwg.mxu0
        %v2324 = vsel %vm1805, %v2236, 0
        %v2327 = vsel %vm1805, %v2237, 0
        %2329 = vmatprep.subr.mxu0 0.0
        %2330 = vmatpush1.msra.mxu0 %v1647
        %2331 = vmatprep.subr.mxu0 0.0
        %2332 = vmatpush1.msra.mxu0 %v1652
        %2333 = vmatprep.subr.mxu0 0.0
        %2334 = vmatpush1.msra.mxu0 0.0
        %2335 = vmatprep.subr.mxu0 0.0
        %2336 = vmatpush1.msra.mxu0 0.0
        %2337 = vmatprep.subr.mxu0 0.0
        %2338 = vmatpush1.msra.mxu0 0.0
        %2339 = vmatprep.subr.mxu0 0.0
        %2340 = vmatpush1.msra.mxu0 0.0
        %2341 = vmatprep.subr.mxu0 0.0
        %2342 = vmatpush1.msra.mxu0 0.0
        %2343 = vmatprep.subr.mxu0 0.0
        %2344 = vmatpush1.msra.mxu0 0.0
        %2345 = vmatprep.subr.mxu0 0.0
        %2346 = vmatpush1.msra.mxu0 0.0
        %2347 = vmatprep.subr.mxu0 0.0
        %2348 = vmatpush1.msra.mxu0 0.0
        %2349 = vmatprep.subr.mxu0 0.0
        %2350 = vmatpush1.msra.mxu0 0.0
        %2351 = vmatprep.subr.mxu0 0.0
        %2352 = vmatpush1.msra.mxu0 0.0
        %2353 = vmatprep.subr.mxu0 0.0
        %2354 = vmatpush1.msra.mxu0 0.0
        %2355 = vmatprep.subr.mxu0 0.0
        %2356 = vmatpush1.msra.mxu0 0.0
        %2357 = vmatprep.subr.mxu0 0.0
        %2358 = vmatpush1.msra.mxu0 0.0
        %2359 = vmatprep.subr.mxu0 0.0
        %2360 = vmatpush1.msra.mxu0 0.0
        %2361 = vmatprep.subr.mxu0 0.0
        %2362 = vmatpush1.msra.mxu0 0.0
        %2363 = vmatprep.subr.mxu0 0.0
        %2364 = vmatpush1.msra.mxu0 0.0
        %2365 = vmatprep.subr.mxu0 0.0
        %2366 = vmatpush1.msra.mxu0 0.0
        %2367 = vmatprep.subr.mxu0 0.0
        %2368 = vmatpush1.msra.mxu0 0.0
        %2369 = vmatprep.subr.mxu0 0.0
        %2370 = vmatpush1.msra.mxu0 0.0
        %2371 = vmatprep.subr.mxu0 0.0
        %2372 = vmatpush1.msra.mxu0 0.0
        %2373 = vmatprep.subr.mxu0 0.0
        %2374 = vmatpush1.msra.mxu0 0.0
        %2375 = vmatprep.subr.mxu0 0.0
        %2376 = vmatpush1.msra.mxu0 0.0
        %2377 = vmatprep.subr.mxu0 0.0
        %2378 = vmatpush1.msra.mxu0 0.0
        %2379 = vmatprep.subr.mxu0 0.0
        %2380 = vmatpush1.msra.mxu0 0.0
        %2381 = vmatprep.subr.mxu0 0.0
        %2382 = vmatpush1.msra.mxu0 0.0
        %2383 = vmatprep.subr.mxu0 0.0
        %2384 = vmatpush1.msra.mxu0 0.0
        %2385 = vmatprep.subr.mxu0 0.0
        %2386 = vmatpush1.msra.mxu0 0.0
        %2387 = vmatprep.subr.mxu0 0.0
        %2388 = vmatpush1.msra.mxu0 0.0
        %2389 = vmatprep.subr.mxu0 0.0
        %2390 = vmatpush1.msra.mxu0 0.0
        %2391 = vmatprep.subr.mxu0 0.0
        %2392 = vmatpush1.msra.mxu0 0.0
        %2393 = vmatprep.mubr.f32.mxu0 0.0
        %2394 = vmatmul.mubr.f32.gmra.mrb[0].mxu0 %v2324
        %v2395 = vpop.f32.mrb[0].mxu0
        %v2396 = vadd.f32 0.0, %v2395
        %v2397 = vpop.f32.mrb[0].mxu0
        %2398 = vmatprep.mubr.f32.mxu0 0.0
        %2399 = vmatmul.mubr.f32.gmra.mrb[0].mxu0 %v2327
        %v2400 = vpop.f32.mrb[0].mxu0
        %v2401 = vadd.f32 0.0, %v2400
        %v2402 = vpop.f32.mrb[0].mxu0
        %2403 = vdwg.mxu0
        %v2405 = vsel %vm1805, %v2238, 0
        %v2408 = vsel %vm1805, %v2239, 0
        %2410 = vmatprep.subr.mxu0 0.0
        %2411 = vmatpush1.msra.mxu0 %v1722
        %2412 = vmatprep.subr.mxu0 0.0
        %2413 = vmatpush1.msra.mxu0 %v1727
        %2414 = vmatprep.subr.mxu0 0.0
        %2415 = vmatpush1.msra.mxu0 0.0
        %2416 = vmatprep.subr.mxu0 0.0
        %2417 = vmatpush1.msra.mxu0 0.0
        %2418 = vmatprep.subr.mxu0 0.0
        %2419 = vmatpush1.msra.mxu0 0.0
        %2420 = vmatprep.subr.mxu0 0.0
        %2421 = vmatpush1.msra.mxu0 0.0
        %2422 = vmatprep.subr.mxu0 0.0
        %2423 = vmatpush1.msra.mxu0 0.0
        %2424 = vmatprep.subr.mxu0 0.0
        %2425 = vmatpush1.msra.mxu0 0.0
        %2426 = vmatprep.subr.mxu0 0.0
        %2427 = vmatpush1.msra.mxu0 0.0
        %2428 = vmatprep.subr.mxu0 0.0
        %2429 = vmatpush1.msra.mxu0 0.0
        %2430 = vmatprep.subr.mxu0 0.0
        %2431 = vmatpush1.msra.mxu0 0.0
        %2432 = vmatprep.subr.mxu0 0.0
        %2433 = vmatpush1.msra.mxu0 0.0
        %2434 = vmatprep.subr.mxu0 0.0
        %2435 = vmatpush1.msra.mxu0 0.0
        %2436 = vmatprep.subr.mxu0 0.0
        %2437 = vmatpush1.msra.mxu0 0.0
        %2438 = vmatprep.subr.mxu0 0.0
        %2439 = vmatpush1.msra.mxu0 0.0
        %2440 = vmatprep.subr.mxu0 0.0
        %2441 = vmatpush1.msra.mxu0 0.0
        %2442 = vmatprep.subr.mxu0 0.0
        %2443 = vmatpush1.msra.mxu0 0.0
        %2444 = vmatprep.subr.mxu0 0.0
        %2445 = vmatpush1.msra.mxu0 0.0
        %2446 = vmatprep.subr.mxu0 0.0
        %2447 = vmatpush1.msra.mxu0 0.0
        %2448 = vmatprep.subr.mxu0 0.0
        %2449 = vmatpush1.msra.mxu0 0.0
        %2450 = vmatprep.subr.mxu0 0.0
        %2451 = vmatpush1.msra.mxu0 0.0
        %2452 = vmatprep.subr.mxu0 0.0
        %2453 = vmatpush1.msra.mxu0 0.0
        %2454 = vmatprep.subr.mxu0 0.0
        %2455 = vmatpush1.msra.mxu0 0.0
        %2456 = vmatprep.subr.mxu0 0.0
        %2457 = vmatpush1.msra.mxu0 0.0
        %2458 = vmatprep.subr.mxu0 0.0
        %2459 = vmatpush1.msra.mxu0 0.0
        %2460 = vmatprep.subr.mxu0 0.0
        %2461 = vmatpush1.msra.mxu0 0.0
        %2462 = vmatprep.subr.mxu0 0.0
        %2463 = vmatpush1.msra.mxu0 0.0
        %2464 = vmatprep.subr.mxu0 0.0
        %2465 = vmatpush1.msra.mxu0 0.0
        %2466 = vmatprep.subr.mxu0 0.0
        %2467 = vmatpush1.msra.mxu0 0.0
        %2468 = vmatprep.subr.mxu0 0.0
        %2469 = vmatpush1.msra.mxu0 0.0
        %2470 = vmatprep.subr.mxu0 0.0
        %2471 = vmatpush1.msra.mxu0 0.0
        %2472 = vmatprep.subr.mxu0 0.0
        %2473 = vmatpush1.msra.mxu0 0.0
        %2474 = vmatprep.mubr.f32.mxu0 0.0
        %2475 = vmatmul.mubr.f32.gmra.mrb[0].mxu0 %v2405
        %v2476 = vpop.f32.mrb[0].mxu0
        %v2477 = vadd.f32 0.0, %v2476
        %v2478 = vpop.f32.mrb[0].mxu0
        %2479 = vmatprep.mubr.f32.mxu0 0.0
        %2480 = vmatmul.mubr.f32.gmra.mrb[0].mxu0 %v2408
        %v2481 = vpop.f32.mrb[0].mxu0
        %v2482 = vadd.f32 0.0, %v2481
        %v2483 = vpop.f32.mrb[0].mxu0
        %2484 = vdwg.mxu0
        %v2486 = vsel %vm1805, %v2240, 0
        %v2489 = vsel %vm1805, %v2241, 0
        %2491 = vmatprep.subr.mxu0 0.0
        %2492 = vmatpush1.msra.mxu0 %v1797
        %2493 = vmatprep.subr.mxu0 0.0
        %2494 = vmatpush1.msra.mxu0 %v1802
        %2495 = vmatprep.subr.mxu0 0.0
        %2496 = vmatpush1.msra.mxu0 0.0
        %2497 = vmatprep.subr.mxu0 0.0
        %2498 = vmatpush1.msra.mxu0 0.0
        %2499 = vmatprep.subr.mxu0 0.0
        %2500 = vmatpush1.msra.mxu0 0.0
        %2501 = vmatprep.subr.mxu0 0.0
        %2502 = vmatpush1.msra.mxu0 0.0
        %2503 = vmatprep.subr.mxu0 0.0
        %2504 = vmatpush1.msra.mxu0 0.0
        %2505 = vmatprep.subr.mxu0 0.0
        %2506 = vmatpush1.msra.mxu0 0.0
        %2507 = vmatprep.subr.mxu0 0.0
        %2508 = vmatpush1.msra.mxu0 0.0
        %2509 = vmatprep.subr.mxu0 0.0
        %2510 = vmatpush1.msra.mxu0 0.0
        %2511 = vmatprep.subr.mxu0 0.0
        %2512 = vmatpush1.msra.mxu0 0.0
        %2513 = vmatprep.subr.mxu0 0.0
        %2514 = vmatpush1.msra.mxu0 0.0
        %2515 = vmatprep.subr.mxu0 0.0
        %2516 = vmatpush1.msra.mxu0 0.0
        %2517 = vmatprep.subr.mxu0 0.0
        %2518 = vmatpush1.msra.mxu0 0.0
        %2519 = vmatprep.subr.mxu0 0.0
        %2520 = vmatpush1.msra.mxu0 0.0
        %2521 = vmatprep.subr.mxu0 0.0
        %2522 = vmatpush1.msra.mxu0 0.0
        %2523 = vmatprep.subr.mxu0 0.0
        %2524 = vmatpush1.msra.mxu0 0.0
        %2525 = vmatprep.subr.mxu0 0.0
        %2526 = vmatpush1.msra.mxu0 0.0
        %2527 = vmatprep.subr.mxu0 0.0
        %2528 = vmatpush1.msra.mxu0 0.0
        %2529 = vmatprep.subr.mxu0 0.0
        %2530 = vmatpush1.msra.mxu0 0.0
        %2531 = vmatprep.subr.mxu0 0.0
        %2532 = vmatpush1.msra.mxu0 0.0
        %2533 = vmatprep.subr.mxu0 0.0
        %2534 = vmatpush1.msra.mxu0 0.0
        %2535 = vmatprep.subr.mxu0 0.0
        %2536 = vmatpush1.msra.mxu0 0.0
        %2537 = vmatprep.subr.mxu0 0.0
        %2538 = vmatpush1.msra.mxu0 0.0
        %2539 = vmatprep.subr.mxu0 0.0
        %2540 = vmatpush1.msra.mxu0 0.0
        %2541 = vmatprep.subr.mxu0 0.0
        %2542 = vmatpush1.msra.mxu0 0.0
        %2543 = vmatprep.subr.mxu0 0.0
        %2544 = vmatpush1.msra.mxu0 0.0
        %2545 = vmatprep.subr.mxu0 0.0
        %2546 = vmatpush1.msra.mxu0 0.0
        %2547 = vmatprep.subr.mxu0 0.0
        %2548 = vmatpush1.msra.mxu0 0.0
        %2549 = vmatprep.subr.mxu0 0.0
        %2550 = vmatpush1.msra.mxu0 0.0
        %2551 = vmatprep.subr.mxu0 0.0
        %2552 = vmatpush1.msra.mxu0 0.0
        %2553 = vmatprep.subr.mxu0 0.0
        %2554 = vmatpush1.msra.mxu0 0.0
        %2555 = vmatprep.mubr.f32.mxu0 0.0
        %2556 = vmatmul.mubr.f32.gmra.mrb[0].mxu0 %v2486
        %v2557 = vpop.f32.mrb[0].mxu0
        %v2558 = vadd.f32 0.0, %v2557
        %v2559 = vpop.f32.mrb[0].mxu0
        %2560 = vmatprep.mubr.f32.mxu0 0.0
        %2561 = vmatmul.mubr.f32.gmra.mrb[0].mxu0 %v2489
        %v2562 = vpop.f32.mrb[0].mxu0
        %v2563 = vadd.f32 0.0, %v2562
        %v2564 = vpop.f32.mrb[0].mxu0
        %2565 = vdwg.mxu0
        %v2567 = vsel %vm1805, %v2315, 0
        %v2570 = vsel %vm1805, %v2320, 0
        %2572 = vmatprep.subr.mxu0 0.0
        %2573 = vmatpush1.msra.mxu0 %v891
        %2574 = vmatprep.subr.mxu0 0.0
        %2575 = vmatpush1.msra.mxu0 %v892
        %2576 = vmatprep.subr.mxu0 0.0
        %2577 = vmatpush1.msra.mxu0 0.0
        %2578 = vmatprep.subr.mxu0 0.0
        %2579 = vmatpush1.msra.mxu0 0.0
        %2580 = vmatprep.subr.mxu0 0.0
        %2581 = vmatpush1.msra.mxu0 0.0
        %2582 = vmatprep.subr.mxu0 0.0
        %2583 = vmatpush1.msra.mxu0 0.0
        %2584 = vmatprep.subr.mxu0 0.0
        %2585 = vmatpush1.msra.mxu0 0.0
        %2586 = vmatprep.subr.mxu0 0.0
        %2587 = vmatpush1.msra.mxu0 0.0
        %2588 = vmatprep.subr.mxu0 0.0
        %2589 = vmatpush1.msra.mxu0 0.0
        %2590 = vmatprep.subr.mxu0 0.0
        %2591 = vmatpush1.msra.mxu0 0.0
        %2592 = vmatprep.subr.mxu0 0.0
        %2593 = vmatpush1.msra.mxu0 0.0
        %2594 = vmatprep.subr.mxu0 0.0
        %2595 = vmatpush1.msra.mxu0 0.0
        %2596 = vmatprep.subr.mxu0 0.0
        %2597 = vmatpush1.msra.mxu0 0.0
        %2598 = vmatprep.subr.mxu0 0.0
        %2599 = vmatpush1.msra.mxu0 0.0
        %2600 = vmatprep.subr.mxu0 0.0
        %2601 = vmatpush1.msra.mxu0 0.0
        %2602 = vmatprep.subr.mxu0 0.0
        %2603 = vmatpush1.msra.mxu0 0.0
        %2604 = vmatprep.subr.mxu0 0.0
        %2605 = vmatpush1.msra.mxu0 0.0
        %2606 = vmatprep.subr.mxu0 0.0
        %2607 = vmatpush1.msra.mxu0 0.0
        %2608 = vmatprep.subr.mxu0 0.0
        %2609 = vmatpush1.msra.mxu0 0.0
        %2610 = vmatprep.subr.mxu0 0.0
        %2611 = vmatpush1.msra.mxu0 0.0
        %2612 = vmatprep.subr.mxu0 0.0
        %2613 = vmatpush1.msra.mxu0 0.0
        %2614 = vmatprep.subr.mxu0 0.0
        %2615 = vmatpush1.msra.mxu0 0.0
        %2616 = vmatprep.subr.mxu0 0.0
        %2617 = vmatpush1.msra.mxu0 0.0
        %2618 = vmatprep.subr.mxu0 0.0
        %2619 = vmatpush1.msra.mxu0 0.0
        %2620 = vmatprep.subr.mxu0 0.0
        %2621 = vmatpush1.msra.mxu0 0.0
        %2622 = vmatprep.subr.mxu0 0.0
        %2623 = vmatpush1.msra.mxu0 0.0
        %2624 = vmatprep.subr.mxu0 0.0
        %2625 = vmatpush1.msra.mxu0 0.0
        %2626 = vmatprep.subr.mxu0 0.0
        %2627 = vmatpush1.msra.mxu0 0.0
        %2628 = vmatprep.subr.mxu0 0.0
        %2629 = vmatpush1.msra.mxu0 0.0
        %2630 = vmatprep.subr.mxu0 0.0
        %2631 = vmatpush1.msra.mxu0 0.0
        %2632 = vmatprep.subr.mxu0 0.0
        %2633 = vmatpush1.msra.mxu0 0.0
        %2634 = vmatprep.subr.mxu0 0.0
        %2635 = vmatpush1.msra.mxu0 0.0
        %2636 = vmatprep.mubr.f32.mxu0 0.0
        %2637 = vmatmul.mubr.f32.gmra.mrb[0].mxu0 %v2567
        %v2638 = vpop.f32.mrb[0].mxu0
        %v2639 = vadd.f32 0.0, %v2638
        %v2640 = vpop.f32.mrb[0].mxu0
        %2641 = vmatprep.mubr.f32.mxu0 0.0
        %2642 = vmatmul.mubr.f32.gmra.mrb[0].mxu0 %v2570
        %v2643 = vpop.f32.mrb[0].mxu0
        %v2644 = vadd.f32 0.0, %v2643
        %v2645 = vpop.f32.mrb[0].mxu0
        %2646 = vdwg.mxu0
        %v2648 = vsel %vm1805, %v2396, 0
        %v2651 = vsel %vm1805, %v2401, 0
        %2653 = vmatprep.subr.mxu0 0.0
        %2654 = vmatpush1.msra.mxu0 %v893
        %2655 = vmatprep.subr.mxu0 0.0
        %2656 = vmatpush1.msra.mxu0 %v894
        %2657 = vmatprep.subr.mxu0 0.0
        %2658 = vmatpush1.msra.mxu0 0.0
        %2659 = vmatprep.subr.mxu0 0.0
        %2660 = vmatpush1.msra.mxu0 0.0
        %2661 = vmatprep.subr.mxu0 0.0
        %2662 = vmatpush1.msra.mxu0 0.0
        %2663 = vmatprep.subr.mxu0 0.0
        %2664 = vmatpush1.msra.mxu0 0.0
        %2665 = vmatprep.subr.mxu0 0.0
        %2666 = vmatpush1.msra.mxu0 0.0
        %2667 = vmatprep.subr.mxu0 0.0
        %2668 = vmatpush1.msra.mxu0 0.0
        %2669 = vmatprep.subr.mxu0 0.0
        %2670 = vmatpush1.msra.mxu0 0.0
        %2671 = vmatprep.subr.mxu0 0.0
        %2672 = vmatpush1.msra.mxu0 0.0
        %2673 = vmatprep.subr.mxu0 0.0
        %2674 = vmatpush1.msra.mxu0 0.0
        %2675 = vmatprep.subr.mxu0 0.0
        %2676 = vmatpush1.msra.mxu0 0.0
        %2677 = vmatprep.subr.mxu0 0.0
        %2678 = vmatpush1.msra.mxu0 0.0
        %2679 = vmatprep.subr.mxu0 0.0
        %2680 = vmatpush1.msra.mxu0 0.0
        %2681 = vmatprep.subr.mxu0 0.0
        %2682 = vmatpush1.msra.mxu0 0.0
        %2683 = vmatprep.subr.mxu0 0.0
        %2684 = vmatpush1.msra.mxu0 0.0
        %2685 = vmatprep.subr.mxu0 0.0
        %2686 = vmatpush1.msra.mxu0 0.0
        %2687 = vmatprep.subr.mxu0 0.0
        %2688 = vmatpush1.msra.mxu0 0.0
        %2689 = vmatprep.subr.mxu0 0.0
        %2690 = vmatpush1.msra.mxu0 0.0
        %2691 = vmatprep.subr.mxu0 0.0
        %2692 = vmatpush1.msra.mxu0 0.0
        %2693 = vmatprep.subr.mxu0 0.0
        %2694 = vmatpush1.msra.mxu0 0.0
        %2695 = vmatprep.subr.mxu0 0.0
        %2696 = vmatpush1.msra.mxu0 0.0
        %2697 = vmatprep.subr.mxu0 0.0
        %2698 = vmatpush1.msra.mxu0 0.0
        %2699 = vmatprep.subr.mxu0 0.0
        %2700 = vmatpush1.msra.mxu0 0.0
        %2701 = vmatprep.subr.mxu0 0.0
        %2702 = vmatpush1.msra.mxu0 0.0
        %2703 = vmatprep.subr.mxu0 0.0
        %2704 = vmatpush1.msra.mxu0 0.0
        %2705 = vmatprep.subr.mxu0 0.0
        %2706 = vmatpush1.msra.mxu0 0.0
        %2707 = vmatprep.subr.mxu0 0.0
        %2708 = vmatpush1.msra.mxu0 0.0
        %2709 = vmatprep.subr.mxu0 0.0
        %2710 = vmatpush1.msra.mxu0 0.0
        %2711 = vmatprep.subr.mxu0 0.0
        %2712 = vmatpush1.msra.mxu0 0.0
        %2713 = vmatprep.subr.mxu0 0.0
        %2714 = vmatpush1.msra.mxu0 0.0
        %2715 = vmatprep.subr.mxu0 0.0
        %2716 = vmatpush1.msra.mxu0 0.0
        %2717 = vmatprep.mubr.f32.mxu0 0.0
        %2718 = vmatmul.mubr.f32.gmra.mrb[0].mxu0 %v2648
        %v2719 = vpop.f32.mrb[0].mxu0
        %v2720 = vadd.f32 0.0, %v2719
        %v2721 = vpop.f32.mrb[0].mxu0
        %2722 = vmatprep.mubr.f32.mxu0 0.0
        %2723 = vmatmul.mubr.f32.gmra.mrb[0].mxu0 %v2651
        %v2724 = vpop.f32.mrb[0].mxu0
        %v2725 = vadd.f32 0.0, %v2724
        %v2726 = vpop.f32.mrb[0].mxu0
        %2727 = vdwg.mxu0
        %v2729 = vsel %vm1805, %v2477, 0
        %v2732 = vsel %vm1805, %v2482, 0
        %2734 = vmatprep.subr.mxu0 0.0
        %2735 = vmatpush1.msra.mxu0 %v895
        %2736 = vmatprep.subr.mxu0 0.0
        %2737 = vmatpush1.msra.mxu0 %v896
        %2738 = vmatprep.subr.mxu0 0.0
        %2739 = vmatpush1.msra.mxu0 0.0
        %2740 = vmatprep.subr.mxu0 0.0
        %2741 = vmatpush1.msra.mxu0 0.0
        %2742 = vmatprep.subr.mxu0 0.0
        %2743 = vmatpush1.msra.mxu0 0.0
        %2744 = vmatprep.subr.mxu0 0.0
        %2745 = vmatpush1.msra.mxu0 0.0
        %2746 = vmatprep.subr.mxu0 0.0
        %2747 = vmatpush1.msra.mxu0 0.0
        %2748 = vmatprep.subr.mxu0 0.0
        %2749 = vmatpush1.msra.mxu0 0.0
        %2750 = vmatprep.subr.mxu0 0.0
        %2751 = vmatpush1.msra.mxu0 0.0
        %2752 = vmatprep.subr.mxu0 0.0
        %2753 = vmatpush1.msra.mxu0 0.0
        %2754 = vmatprep.subr.mxu0 0.0
        %2755 = vmatpush1.msra.mxu0 0.0
        %2756 = vmatprep.subr.mxu0 0.0
        %2757 = vmatpush1.msra.mxu0 0.0
        %2758 = vmatprep.subr.mxu0 0.0
        %2759 = vmatpush1.msra.mxu0 0.0
        %2760 = vmatprep.subr.mxu0 0.0
        %2761 = vmatpush1.msra.mxu0 0.0
        %2762 = vmatprep.subr.mxu0 0.0
        %2763 = vmatpush1.msra.mxu0 0.0
        %2764 = vmatprep.subr.mxu0 0.0
        %2765 = vmatpush1.msra.mxu0 0.0
        %2766 = vmatprep.subr.mxu0 0.0
        %2767 = vmatpush1.msra.mxu0 0.0
        %2768 = vmatprep.subr.mxu0 0.0
        %2769 = vmatpush1.msra.mxu0 0.0
        %2770 = vmatprep.subr.mxu0 0.0
        %2771 = vmatpush1.msra.mxu0 0.0
        %2772 = vmatprep.subr.mxu0 0.0
        %2773 = vmatpush1.msra.mxu0 0.0
        %2774 = vmatprep.subr.mxu0 0.0
        %2775 = vmatpush1.msra.mxu0 0.0
        %2776 = vmatprep.subr.mxu0 0.0
        %2777 = vmatpush1.msra.mxu0 0.0
        %2778 = vmatprep.subr.mxu0 0.0
        %2779 = vmatpush1.msra.mxu0 0.0
        %2780 = vmatprep.subr.mxu0 0.0
        %2781 = vmatpush1.msra.mxu0 0.0
        %2782 = vmatprep.subr.mxu0 0.0
        %2783 = vmatpush1.msra.mxu0 0.0
        %2784 = vmatprep.subr.mxu0 0.0
        %2785 = vmatpush1.msra.mxu0 0.0
        %2786 = vmatprep.subr.mxu0 0.0
        %2787 = vmatpush1.msra.mxu0 0.0
        %2788 = vmatprep.subr.mxu0 0.0
        %2789 = vmatpush1.msra.mxu0 0.0
        %2790 = vmatprep.subr.mxu0 0.0
        %2791 = vmatpush1.msra.mxu0 0.0
        %2792 = vmatprep.subr.mxu0 0.0
        %2793 = vmatpush1.msra.mxu0 0.0
        %2794 = vmatprep.subr.mxu0 0.0
        %2795 = vmatpush1.msra.mxu0 0.0
        %2796 = vmatprep.subr.mxu0 0.0
        %2797 = vmatpush1.msra.mxu0 0.0
        %2798 = vmatprep.mubr.f32.mxu0 0.0
        %2799 = vmatmul.mubr.f32.gmra.mrb[0].mxu0 %v2729
        %v2800 = vpop.f32.mrb[0].mxu0
        %v2801 = vadd.f32 0.0, %v2800
        %v2802 = vpop.f32.mrb[0].mxu0
        %2803 = vmatprep.mubr.f32.mxu0 0.0
        %2804 = vmatmul.mubr.f32.gmra.mrb[0].mxu0 %v2732
        %v2805 = vpop.f32.mrb[0].mxu0
        %v2806 = vadd.f32 0.0, %v2805
        %v2807 = vpop.f32.mrb[0].mxu0
        %2808 = vdwg.mxu0
        %v2810 = vsel %vm1805, %v2558, 0
        %v2813 = vsel %vm1805, %v2563, 0
        %2815 = vmatprep.subr.mxu0 0.0
        %2816 = vmatpush1.msra.mxu0 %v897
        %2817 = vmatprep.subr.mxu0 0.0
        %2818 = vmatpush1.msra.mxu0 %v898
        %2819 = vmatprep.subr.mxu0 0.0
        %2820 = vmatpush1.msra.mxu0 0.0
        %2821 = vmatprep.subr.mxu0 0.0
        %2822 = vmatpush1.msra.mxu0 0.0
        %2823 = vmatprep.subr.mxu0 0.0
        %2824 = vmatpush1.msra.mxu0 0.0
        %2825 = vmatprep.subr.mxu0 0.0
        %2826 = vmatpush1.msra.mxu0 0.0
        %2827 = vmatprep.subr.mxu0 0.0
        %2828 = vmatpush1.msra.mxu0 0.0
        %2829 = vmatprep.subr.mxu0 0.0
        %2830 = vmatpush1.msra.mxu0 0.0
        %2831 = vmatprep.subr.mxu0 0.0
        %2832 = vmatpush1.msra.mxu0 0.0
        %2833 = vmatprep.subr.mxu0 0.0
        %2834 = vmatpush1.msra.mxu0 0.0
        %2835 = vmatprep.subr.mxu0 0.0
        %2836 = vmatpush1.msra.mxu0 0.0
        %2837 = vmatprep.subr.mxu0 0.0
        %2838 = vmatpush1.msra.mxu0 0.0
        %2839 = vmatprep.subr.mxu0 0.0
        %2840 = vmatpush1.msra.mxu0 0.0
        %2841 = vmatprep.subr.mxu0 0.0
        %2842 = vmatpush1.msra.mxu0 0.0
        %2843 = vmatprep.subr.mxu0 0.0
        %2844 = vmatpush1.msra.mxu0 0.0
        %2845 = vmatprep.subr.mxu0 0.0
        %2846 = vmatpush1.msra.mxu0 0.0
        %2847 = vmatprep.subr.mxu0 0.0
        %2848 = vmatpush1.msra.mxu0 0.0
        %2849 = vmatprep.subr.mxu0 0.0
        %2850 = vmatpush1.msra.mxu0 0.0
        %2851 = vmatprep.subr.mxu0 0.0
        %2852 = vmatpush1.msra.mxu0 0.0
        %2853 = vmatprep.subr.mxu0 0.0
        %2854 = vmatpush1.msra.mxu0 0.0
        %2855 = vmatprep.subr.mxu0 0.0
        %2856 = vmatpush1.msra.mxu0 0.0
        %2857 = vmatprep.subr.mxu0 0.0
        %2858 = vmatpush1.msra.mxu0 0.0
        %2859 = vmatprep.subr.mxu0 0.0
        %2860 = vmatpush1.msra.mxu0 0.0
        %2861 = vmatprep.subr.mxu0 0.0
        %2862 = vmatpush1.msra.mxu0 0.0
        %2863 = vmatprep.subr.mxu0 0.0
        %2864 = vmatpush1.msra.mxu0 0.0
        %2865 = vmatprep.subr.mxu0 0.0
        %2866 = vmatpush1.msra.mxu0 0.0
        %2867 = vmatprep.subr.mxu0 0.0
        %2868 = vmatpush1.msra.mxu0 0.0
        %2869 = vmatprep.subr.mxu0 0.0
        %2870 = vmatpush1.msra.mxu0 0.0
        %2871 = vmatprep.subr.mxu0 0.0
        %2872 = vmatpush1.msra.mxu0 0.0
        %2873 = vmatprep.subr.mxu0 0.0
        %2874 = vmatpush1.msra.mxu0 0.0
        %2875 = vmatprep.subr.mxu0 0.0
        %2876 = vmatpush1.msra.mxu0 0.0
        %2877 = vmatprep.subr.mxu0 0.0
        %2878 = vmatpush1.msra.mxu0 0.0
        %2879 = vmatprep.mubr.f32.mxu0 0.0
        %2880 = vmatmul.mubr.f32.gmra.mrb[0].mxu0 %v2810
        %v2881 = vpop.f32.mrb[0].mxu0
        %v2882 = vadd.f32 0.0, %v2881
        %v2883 = vpop.f32.mrb[0].mxu0
        %2884 = vmatprep.mubr.f32.mxu0 0.0
        %2885 = vmatmul.mubr.f32.gmra.mrb[0].mxu0 %v2813
        %v2886 = vpop.f32.mrb[0].mxu0
        %v2887 = vadd.f32 0.0, %v2886
        %v2888 = vpop.f32.mrb[0].mxu0
        %2889 = vdwg.mxu0
        %v2890 = vsel %vm721, %v2639, 0.0
        %v2891 = vsel %vm721, %v2720, 0.0
        %v2892 = vadd.f32 %v2890, %v2891
        %v2893 = vsel %vm721, %v2801, 0.0
        %v2894 = vadd.f32 %v2892, %v2893
        %v2895 = vsel %vm721, %v2882, 0.0
        %v2896 = vadd.f32 %v2894, %v2895
        %v2897 = vsel %vm721, %v2644, 0.0
        %v2898 = vsel %vm721, %v2725, 0.0
        %v2899 = vadd.f32 %v2897, %v2898
        %v2900 = vsel %vm721, %v2806, 0.0
        %v2901 = vadd.f32 %v2899, %v2900
        %v2902 = vsel %vm721, %v2887, 0.0
        %v2903 = vadd.f32 %v2901, %v2902
        %v2905 = vsel %vm721, %v793, 0
        %v2908 = vsel %vm721, %v794, 0
        %2910 = vmatprep.subr.mxu0 0.0
        %2911 = vmatpush1.msra.mxu0 %v795
        %2912 = vmatprep.subr.mxu0 0.0
        %2913 = vmatpush1.msra.mxu0 %v796
        %2914 = vmatprep.subr.mxu0 0.0
        %2915 = vmatpush1.msra.mxu0 %v797
        %2916 = vmatprep.subr.mxu0 0.0
        %2917 = vmatpush1.msra.mxu0 %v798
        %2918 = vmatprep.subr.mxu0 0.0
        %2919 = vmatpush1.msra.mxu0 %v799
        %2920 = vmatprep.subr.mxu0 0.0
        %2921 = vmatpush1.msra.mxu0 %v800
        %2922 = vmatprep.subr.mxu0 0.0
        %2923 = vmatpush1.msra.mxu0 %v801
        %2924 = vmatprep.subr.mxu0 0.0
        %2925 = vmatpush1.msra.mxu0 %v802
        %2926 = vmatprep.subr.mxu0 0.0
        %2927 = vmatpush1.msra.mxu0 0.0
        %2928 = vmatprep.subr.mxu0 0.0
        %2929 = vmatpush1.msra.mxu0 0.0
        %2930 = vmatprep.subr.mxu0 0.0
        %2931 = vmatpush1.msra.mxu0 0.0
        %2932 = vmatprep.subr.mxu0 0.0
        %2933 = vmatpush1.msra.mxu0 0.0
        %2934 = vmatprep.subr.mxu0 0.0
        %2935 = vmatpush1.msra.mxu0 0.0
        %2936 = vmatprep.subr.mxu0 0.0
        %2937 = vmatpush1.msra.mxu0 0.0
        %2938 = vmatprep.subr.mxu0 0.0
        %2939 = vmatpush1.msra.mxu0 0.0
        %2940 = vmatprep.subr.mxu0 0.0
        %2941 = vmatpush1.msra.mxu0 0.0
        %2942 = vmatprep.subr.mxu0 0.0
        %2943 = vmatpush1.msra.mxu0 0.0
        %2944 = vmatprep.subr.mxu0 0.0
        %2945 = vmatpush1.msra.mxu0 0.0
        %2946 = vmatprep.subr.mxu0 0.0
        %2947 = vmatpush1.msra.mxu0 0.0
        %2948 = vmatprep.subr.mxu0 0.0
        %2949 = vmatpush1.msra.mxu0 0.0
        %2950 = vmatprep.subr.mxu0 0.0
        %2951 = vmatpush1.msra.mxu0 0.0
        %2952 = vmatprep.subr.mxu0 0.0
        %2953 = vmatpush1.msra.mxu0 0.0
        %2954 = vmatprep.subr.mxu0 0.0
        %2955 = vmatpush1.msra.mxu0 0.0
        %2956 = vmatprep.subr.mxu0 0.0
        %2957 = vmatpush1.msra.mxu0 0.0
        %2958 = vmatprep.subr.mxu0 0.0
        %2959 = vmatpush1.msra.mxu0 0.0
        %2960 = vmatprep.subr.mxu0 0.0
        %2961 = vmatpush1.msra.mxu0 0.0
        %2962 = vmatprep.subr.mxu0 0.0
        %2963 = vmatpush1.msra.mxu0 0.0
        %2964 = vmatprep.subr.mxu0 0.0
        %2965 = vmatpush1.msra.mxu0 0.0
        %2966 = vmatprep.subr.mxu0 0.0
        %2967 = vmatpush1.msra.mxu0 0.0
        %2968 = vmatprep.subr.mxu0 0.0
        %2969 = vmatpush1.msra.mxu0 0.0
        %2970 = vmatprep.subr.mxu0 0.0
        %2971 = vmatpush1.msra.mxu0 0.0
        %2972 = vmatprep.subr.mxu0 0.0
        %2973 = vmatpush1.msra.mxu0 0.0
        %2974 = vmatprep.mubr.f32.mxu0 0.0
        %2975 = vmatmul.mubr.f32.gmra.mrb[0].mxu0 %v2905
        %v2976 = vpop.f32.mrb[0].mxu0
        %v2977 = vadd.f32 0.0, %v2976
        %v2978 = vpop.f32.mrb[0].mxu0
        %2979 = vmatprep.mubr.f32.mxu0 0.0
        %2980 = vmatmul.mubr.f32.gmra.mrb[0].mxu0 %v2908
        %v2981 = vpop.f32.mrb[0].mxu0
        %v2982 = vadd.f32 0.0, %v2981
        %v2983 = vpop.f32.mrb[0].mxu0
        %2984 = vdwg.mxu0
        %2985 = vmatprep.subr.mxu0 0.0
        %2986 = vmatpush1.msra.mxu0 %v803
        %2987 = vmatprep.subr.mxu0 0.0
        %2988 = vmatpush1.msra.mxu0 %v804
        %2989 = vmatprep.subr.mxu0 0.0
        %2990 = vmatpush1.msra.mxu0 %v805
        %2991 = vmatprep.subr.mxu0 0.0
        %2992 = vmatpush1.msra.mxu0 %v806
        %2993 = vmatprep.subr.mxu0 0.0
        %2994 = vmatpush1.msra.mxu0 %v807
        %2995 = vmatprep.subr.mxu0 0.0
        %2996 = vmatpush1.msra.mxu0 %v808
        %2997 = vmatprep.subr.mxu0 0.0
        %2998 = vmatpush1.msra.mxu0 %v809
        %2999 = vmatprep.subr.mxu0 0.0
        %3000 = vmatpush1.msra.mxu0 %v810
        %3001 = vmatprep.subr.mxu0 0.0
        %3002 = vmatpush1.msra.mxu0 0.0
        %3003 = vmatprep.subr.mxu0 0.0
        %3004 = vmatpush1.msra.mxu0 0.0
        %3005 = vmatprep.subr.mxu0 0.0
        %3006 = vmatpush1.msra.mxu0 0.0
        %3007 = vmatprep.subr.mxu0 0.0
        %3008 = vmatpush1.msra.mxu0 0.0
        %3009 = vmatprep.subr.mxu0 0.0
        %3010 = vmatpush1.msra.mxu0 0.0
        %3011 = vmatprep.subr.mxu0 0.0
        %3012 = vmatpush1.msra.mxu0 0.0
        %3013 = vmatprep.subr.mxu0 0.0
        %3014 = vmatpush1.msra.mxu0 0.0
        %3015 = vmatprep.subr.mxu0 0.0
        %3016 = vmatpush1.msra.mxu0 0.0
        %3017 = vmatprep.subr.mxu0 0.0
        %3018 = vmatpush1.msra.mxu0 0.0
        %3019 = vmatprep.subr.mxu0 0.0
        %3020 = vmatpush1.msra.mxu0 0.0
        %3021 = vmatprep.subr.mxu0 0.0
        %3022 = vmatpush1.msra.mxu0 0.0
        %3023 = vmatprep.subr.mxu0 0.0
        %3024 = vmatpush1.msra.mxu0 0.0
        %3025 = vmatprep.subr.mxu0 0.0
        %3026 = vmatpush1.msra.mxu0 0.0
        %3027 = vmatprep.subr.mxu0 0.0
        %3028 = vmatpush1.msra.mxu0 0.0
        %3029 = vmatprep.subr.mxu0 0.0
        %3030 = vmatpush1.msra.mxu0 0.0
        %3031 = vmatprep.subr.mxu0 0.0
        %3032 = vmatpush1.msra.mxu0 0.0
        %3033 = vmatprep.subr.mxu0 0.0
        %3034 = vmatpush1.msra.mxu0 0.0
        %3035 = vmatprep.subr.mxu0 0.0
        %3036 = vmatpush1.msra.mxu0 0.0
        %3037 = vmatprep.subr.mxu0 0.0
        %3038 = vmatpush1.msra.mxu0 0.0
        %3039 = vmatprep.subr.mxu0 0.0
        %3040 = vmatpush1.msra.mxu0 0.0
        %3041 = vmatprep.subr.mxu0 0.0
        %3042 = vmatpush1.msra.mxu0 0.0
        %3043 = vmatprep.subr.mxu0 0.0
        %3044 = vmatpush1.msra.mxu0 0.0
        %3045 = vmatprep.subr.mxu0 0.0
        %3046 = vmatpush1.msra.mxu0 0.0
        %3047 = vmatprep.subr.mxu0 0.0
        %3048 = vmatpush1.msra.mxu0 0.0
        %3049 = vmatprep.mubr.f32.mxu0 0.0
        %3050 = vmatmul.mubr.f32.gmra.mrb[0].mxu0 %v2905
        %v3051 = vpop.f32.mrb[0].mxu0
        %v3052 = vadd.f32 0.0, %v3051
        %v3053 = vpop.f32.mrb[0].mxu0
        %3054 = vmatprep.mubr.f32.mxu0 0.0
        %3055 = vmatmul.mubr.f32.gmra.mrb[0].mxu0 %v2908
        %v3056 = vpop.f32.mrb[0].mxu0
        %v3057 = vadd.f32 0.0, %v3056
        %v3058 = vpop.f32.mrb[0].mxu0
        %3059 = vdwg.mxu0
        %3060 = vmatprep.subr.mxu0 0.0
        %3061 = vmatpush1.msra.mxu0 %v811
        %3062 = vmatprep.subr.mxu0 0.0
        %3063 = vmatpush1.msra.mxu0 %v812
        %3064 = vmatprep.subr.mxu0 0.0
        %3065 = vmatpush1.msra.mxu0 %v813
        %3066 = vmatprep.subr.mxu0 0.0
        %3067 = vmatpush1.msra.mxu0 %v814
        %3068 = vmatprep.subr.mxu0 0.0
        %3069 = vmatpush1.msra.mxu0 %v815
        %3070 = vmatprep.subr.mxu0 0.0
        %3071 = vmatpush1.msra.mxu0 %v816
        %3072 = vmatprep.subr.mxu0 0.0
        %3073 = vmatpush1.msra.mxu0 %v817
        %3074 = vmatprep.subr.mxu0 0.0
        %3075 = vmatpush1.msra.mxu0 %v818
        %3076 = vmatprep.subr.mxu0 0.0
        %3077 = vmatpush1.msra.mxu0 0.0
        %3078 = vmatprep.subr.mxu0 0.0
        %3079 = vmatpush1.msra.mxu0 0.0
        %3080 = vmatprep.subr.mxu0 0.0
        %3081 = vmatpush1.msra.mxu0 0.0
        %3082 = vmatprep.subr.mxu0 0.0
        %3083 = vmatpush1.msra.mxu0 0.0
        %3084 = vmatprep.subr.mxu0 0.0
        %3085 = vmatpush1.msra.mxu0 0.0
        %3086 = vmatprep.subr.mxu0 0.0
        %3087 = vmatpush1.msra.mxu0 0.0
        %3088 = vmatprep.subr.mxu0 0.0
        %3089 = vmatpush1.msra.mxu0 0.0
        %3090 = vmatprep.subr.mxu0 0.0
        %3091 = vmatpush1.msra.mxu0 0.0
        %3092 = vmatprep.subr.mxu0 0.0
        %3093 = vmatpush1.msra.mxu0 0.0
        %3094 = vmatprep.subr.mxu0 0.0
        %3095 = vmatpush1.msra.mxu0 0.0
        %3096 = vmatprep.subr.mxu0 0.0
        %3097 = vmatpush1.msra.mxu0 0.0
        %3098 = vmatprep.subr.mxu0 0.0
        %3099 = vmatpush1.msra.mxu0 0.0
        %3100 = vmatprep.subr.mxu0 0.0
        %3101 = vmatpush1.msra.mxu0 0.0
        %3102 = vmatprep.subr.mxu0 0.0
        %3103 = vmatpush1.msra.mxu0 0.0
        %3104 = vmatprep.subr.mxu0 0.0
        %3105 = vmatpush1.msra.mxu0 0.0
        %3106 = vmatprep.subr.mxu0 0.0
        %3107 = vmatpush1.msra.mxu0 0.0
        %3108 = vmatprep.subr.mxu0 0.0
        %3109 = vmatpush1.msra.mxu0 0.0
        %3110 = vmatprep.subr.mxu0 0.0
        %3111 = vmatpush1.msra.mxu0 0.0
        %3112 = vmatprep.subr.mxu0 0.0
        %3113 = vmatpush1.msra.mxu0 0.0
        %3114 = vmatprep.subr.mxu0 0.0
        %3115 = vmatpush1.msra.mxu0 0.0
        %3116 = vmatprep.subr.mxu0 0.0
        %3117 = vmatpush1.msra.mxu0 0.0
        %3118 = vmatprep.subr.mxu0 0.0
        %3119 = vmatpush1.msra.mxu0 0.0
        %3120 = vmatprep.subr.mxu0 0.0
        %3121 = vmatpush1.msra.mxu0 0.0
        %3122 = vmatprep.subr.mxu0 0.0
        %3123 = vmatpush1.msra.mxu0 0.0
        %3124 = vmatprep.mubr.f32.mxu0 0.0
        %3125 = vmatmul.mubr.f32.gmra.mrb[0].mxu0 %v2905
        %v3126 = vpop.f32.mrb[0].mxu0
        %v3127 = vadd.f32 0.0, %v3126
        %v3128 = vpop.f32.mrb[0].mxu0
        %3129 = vmatprep.mubr.f32.mxu0 0.0
        %3130 = vmatmul.mubr.f32.gmra.mrb[0].mxu0 %v2908
        %v3131 = vpop.f32.mrb[0].mxu0
        %v3132 = vadd.f32 0.0, %v3131
        %v3133 = vpop.f32.mrb[0].mxu0
        %3134 = vdwg.mxu0
        %3135 = vmatprep.subr.mxu0 0.0
        %3136 = vmatpush1.msra.mxu0 %v819
        %3137 = vmatprep.subr.mxu0 0.0
        %3138 = vmatpush1.msra.mxu0 %v820
        %3139 = vmatprep.subr.mxu0 0.0
        %3140 = vmatpush1.msra.mxu0 %v821
        %3141 = vmatprep.subr.mxu0 0.0
        %3142 = vmatpush1.msra.mxu0 %v822
        %3143 = vmatprep.subr.mxu0 0.0
        %3144 = vmatpush1.msra.mxu0 %v823
        %3145 = vmatprep.subr.mxu0 0.0
        %3146 = vmatpush1.msra.mxu0 %v824
        %3147 = vmatprep.subr.mxu0 0.0
        %3148 = vmatpush1.msra.mxu0 %v825
        %3149 = vmatprep.subr.mxu0 0.0
        %3150 = vmatpush1.msra.mxu0 %v826
        %3151 = vmatprep.subr.mxu0 0.0
        %3152 = vmatpush1.msra.mxu0 0.0
        %3153 = vmatprep.subr.mxu0 0.0
        %3154 = vmatpush1.msra.mxu0 0.0
        %3155 = vmatprep.subr.mxu0 0.0
        %3156 = vmatpush1.msra.mxu0 0.0
        %3157 = vmatprep.subr.mxu0 0.0
        %3158 = vmatpush1.msra.mxu0 0.0
        %3159 = vmatprep.subr.mxu0 0.0
        %3160 = vmatpush1.msra.mxu0 0.0
        %3161 = vmatprep.subr.mxu0 0.0
        %3162 = vmatpush1.msra.mxu0 0.0
        %3163 = vmatprep.subr.mxu0 0.0
        %3164 = vmatpush1.msra.mxu0 0.0
        %3165 = vmatprep.subr.mxu0 0.0
        %3166 = vmatpush1.msra.mxu0 0.0
        %3167 = vmatprep.subr.mxu0 0.0
        %3168 = vmatpush1.msra.mxu0 0.0
        %3169 = vmatprep.subr.mxu0 0.0
        %3170 = vmatpush1.msra.mxu0 0.0
        %3171 = vmatprep.subr.mxu0 0.0
        %3172 = vmatpush1.msra.mxu0 0.0
        %3173 = vmatprep.subr.mxu0 0.0
        %3174 = vmatpush1.msra.mxu0 0.0
        %3175 = vmatprep.subr.mxu0 0.0
        %3176 = vmatpush1.msra.mxu0 0.0
        %3177 = vmatprep.subr.mxu0 0.0
        %3178 = vmatpush1.msra.mxu0 0.0
        %3179 = vmatprep.subr.mxu0 0.0
        %3180 = vmatpush1.msra.mxu0 0.0
        %3181 = vmatprep.subr.mxu0 0.0
        %3182 = vmatpush1.msra.mxu0 0.0
        %3183 = vmatprep.subr.mxu0 0.0
        %3184 = vmatpush1.msra.mxu0 0.0
        %3185 = vmatprep.subr.mxu0 0.0
        %3186 = vmatpush1.msra.mxu0 0.0
        %3187 = vmatprep.subr.mxu0 0.0
        %3188 = vmatpush1.msra.mxu0 0.0
        %3189 = vmatprep.subr.mxu0 0.0
        %3190 = vmatpush1.msra.mxu0 0.0
        %3191 = vmatprep.subr.mxu0 0.0
        %3192 = vmatpush1.msra.mxu0 0.0
        %3193 = vmatprep.subr.mxu0 0.0
        %3194 = vmatpush1.msra.mxu0 0.0
        %3195 = vmatprep.subr.mxu0 0.0
        %3196 = vmatpush1.msra.mxu0 0.0
        %3197 = vmatprep.subr.mxu0 0.0
        %3198 = vmatpush1.msra.mxu0 0.0
        %3199 = vmatprep.mubr.f32.mxu0 0.0
        %3200 = vmatmul.mubr.f32.gmra.mrb[0].mxu0 %v2905
        %v3201 = vpop.f32.mrb[0].mxu0
        %v3202 = vadd.f32 0.0, %v3201
        %v3203 = vpop.f32.mrb[0].mxu0
        %3204 = vmatprep.mubr.f32.mxu0 0.0
        %3205 = vmatmul.mubr.f32.gmra.mrb[0].mxu0 %v2908
        %v3206 = vpop.f32.mrb[0].mxu0
        %v3207 = vadd.f32 0.0, %v3206
        %v3208 = vpop.f32.mrb[0].mxu0
        %3209 = vdwg.mxu0
        %3210 = vmatprep.subr.mxu0 0.0
        %3211 = vmatpush1.msra.mxu0 %v827
        %3212 = vmatprep.subr.mxu0 0.0
        %3213 = vmatpush1.msra.mxu0 %v828
        %3214 = vmatprep.subr.mxu0 0.0
        %3215 = vmatpush1.msra.mxu0 %v829
        %3216 = vmatprep.subr.mxu0 0.0
        %3217 = vmatpush1.msra.mxu0 %v830
        %3218 = vmatprep.subr.mxu0 0.0
        %3219 = vmatpush1.msra.mxu0 %v831
        %3220 = vmatprep.subr.mxu0 0.0
        %3221 = vmatpush1.msra.mxu0 %v832
        %3222 = vmatprep.subr.mxu0 0.0
        %3223 = vmatpush1.msra.mxu0 %v833
        %3224 = vmatprep.subr.mxu0 0.0
        %3225 = vmatpush1.msra.mxu0 %v834
        %3226 = vmatprep.subr.mxu0 0.0
        %3227 = vmatpush1.msra.mxu0 0.0
        %3228 = vmatprep.subr.mxu0 0.0
        %3229 = vmatpush1.msra.mxu0 0.0
        %3230 = vmatprep.subr.mxu0 0.0
        %3231 = vmatpush1.msra.mxu0 0.0
        %3232 = vmatprep.subr.mxu0 0.0
        %3233 = vmatpush1.msra.mxu0 0.0
        %3234 = vmatprep.subr.mxu0 0.0
        %3235 = vmatpush1.msra.mxu0 0.0
        %3236 = vmatprep.subr.mxu0 0.0
        %3237 = vmatpush1.msra.mxu0 0.0
        %3238 = vmatprep.subr.mxu0 0.0
        %3239 = vmatpush1.msra.mxu0 0.0
        %3240 = vmatprep.subr.mxu0 0.0
        %3241 = vmatpush1.msra.mxu0 0.0
        %3242 = vmatprep.subr.mxu0 0.0
        %3243 = vmatpush1.msra.mxu0 0.0
        %3244 = vmatprep.subr.mxu0 0.0
        %3245 = vmatpush1.msra.mxu0 0.0
        %3246 = vmatprep.subr.mxu0 0.0
        %3247 = vmatpush1.msra.mxu0 0.0
        %3248 = vmatprep.subr.mxu0 0.0
        %3249 = vmatpush1.msra.mxu0 0.0
        %3250 = vmatprep.subr.mxu0 0.0
        %3251 = vmatpush1.msra.mxu0 0.0
        %3252 = vmatprep.subr.mxu0 0.0
        %3253 = vmatpush1.msra.mxu0 0.0
        %3254 = vmatprep.subr.mxu0 0.0
        %3255 = vmatpush1.msra.mxu0 0.0
        %3256 = vmatprep.subr.mxu0 0.0
        %3257 = vmatpush1.msra.mxu0 0.0
        %3258 = vmatprep.subr.mxu0 0.0
        %3259 = vmatpush1.msra.mxu0 0.0
        %3260 = vmatprep.subr.mxu0 0.0
        %3261 = vmatpush1.msra.mxu0 0.0
        %3262 = vmatprep.subr.mxu0 0.0
        %3263 = vmatpush1.msra.mxu0 0.0
        %3264 = vmatprep.subr.mxu0 0.0
        %3265 = vmatpush1.msra.mxu0 0.0
        %3266 = vmatprep.subr.mxu0 0.0
        %3267 = vmatpush1.msra.mxu0 0.0
        %3268 = vmatprep.subr.mxu0 0.0
        %3269 = vmatpush1.msra.mxu0 0.0
        %3270 = vmatprep.subr.mxu0 0.0
        %3271 = vmatpush1.msra.mxu0 0.0
        %3272 = vmatprep.subr.mxu0 0.0
        %3273 = vmatpush1.msra.mxu0 0.0
        %3274 = vmatprep.mubr.f32.mxu0 0.0
        %3275 = vmatmul.mubr.f32.gmra.mrb[0].mxu0 %v2905
        %v3276 = vpop.f32.mrb[0].mxu0
        %v3277 = vadd.f32 0.0, %v3276
        %v3278 = vpop.f32.mrb[0].mxu0
        %3279 = vmatprep.mubr.f32.mxu0 0.0
        %3280 = vmatmul.mubr.f32.gmra.mrb[0].mxu0 %v2908
        %v3281 = vpop.f32.mrb[0].mxu0
        %v3282 = vadd.f32 0.0, %v3281
        %v3283 = vpop.f32.mrb[0].mxu0
        %3284 = vdwg.mxu0
        %3285 = vmatprep.subr.mxu0 0.0
        %3286 = vmatpush1.msra.mxu0 %v835
        %3287 = vmatprep.subr.mxu0 0.0
        %3288 = vmatpush1.msra.mxu0 %v836
        %3289 = vmatprep.subr.mxu0 0.0
        %3290 = vmatpush1.msra.mxu0 %v837
        %3291 = vmatprep.subr.mxu0 0.0
        %3292 = vmatpush1.msra.mxu0 %v838
        %3293 = vmatprep.subr.mxu0 0.0
        %3294 = vmatpush1.msra.mxu0 %v839
        %3295 = vmatprep.subr.mxu0 0.0
        %3296 = vmatpush1.msra.mxu0 %v840
        %3297 = vmatprep.subr.mxu0 0.0
        %3298 = vmatpush1.msra.mxu0 %v841
        %3299 = vmatprep.subr.mxu0 0.0
        %3300 = vmatpush1.msra.mxu0 %v842
        %3301 = vmatprep.subr.mxu0 0.0
        %3302 = vmatpush1.msra.mxu0 0.0
        %3303 = vmatprep.subr.mxu0 0.0
        %3304 = vmatpush1.msra.mxu0 0.0
        %3305 = vmatprep.subr.mxu0 0.0
        %3306 = vmatpush1.msra.mxu0 0.0
        %3307 = vmatprep.subr.mxu0 0.0
        %3308 = vmatpush1.msra.mxu0 0.0
        %3309 = vmatprep.subr.mxu0 0.0
        %3310 = vmatpush1.msra.mxu0 0.0
        %3311 = vmatprep.subr.mxu0 0.0
        %3312 = vmatpush1.msra.mxu0 0.0
        %3313 = vmatprep.subr.mxu0 0.0
        %3314 = vmatpush1.msra.mxu0 0.0
        %3315 = vmatprep.subr.mxu0 0.0
        %3316 = vmatpush1.msra.mxu0 0.0
        %3317 = vmatprep.subr.mxu0 0.0
        %3318 = vmatpush1.msra.mxu0 0.0
        %3319 = vmatprep.subr.mxu0 0.0
        %3320 = vmatpush1.msra.mxu0 0.0
        %3321 = vmatprep.subr.mxu0 0.0
        %3322 = vmatpush1.msra.mxu0 0.0
        %3323 = vmatprep.subr.mxu0 0.0
        %3324 = vmatpush1.msra.mxu0 0.0
        %3325 = vmatprep.subr.mxu0 0.0
        %3326 = vmatpush1.msra.mxu0 0.0
        %3327 = vmatprep.subr.mxu0 0.0
        %3328 = vmatpush1.msra.mxu0 0.0
        %3329 = vmatprep.subr.mxu0 0.0
        %3330 = vmatpush1.msra.mxu0 0.0
        %3331 = vmatprep.subr.mxu0 0.0
        %3332 = vmatpush1.msra.mxu0 0.0
        %3333 = vmatprep.subr.mxu0 0.0
        %3334 = vmatpush1.msra.mxu0 0.0
        %3335 = vmatprep.subr.mxu0 0.0
        %3336 = vmatpush1.msra.mxu0 0.0
        %3337 = vmatprep.subr.mxu0 0.0
        %3338 = vmatpush1.msra.mxu0 0.0
        %3339 = vmatprep.subr.mxu0 0.0
        %3340 = vmatpush1.msra.mxu0 0.0
        %3341 = vmatprep.subr.mxu0 0.0
        %3342 = vmatpush1.msra.mxu0 0.0
        %3343 = vmatprep.subr.mxu0 0.0
        %3344 = vmatpush1.msra.mxu0 0.0
        %3345 = vmatprep.subr.mxu0 0.0
        %3346 = vmatpush1.msra.mxu0 0.0
        %3347 = vmatprep.subr.mxu0 0.0
        %3348 = vmatpush1.msra.mxu0 0.0
        %3349 = vmatprep.mubr.f32.mxu0 0.0
        %3350 = vmatmul.mubr.f32.gmra.mrb[0].mxu0 %v2905
        %v3351 = vpop.f32.mrb[0].mxu0
        %v3352 = vadd.f32 0.0, %v3351
        %v3353 = vpop.f32.mrb[0].mxu0
        %3354 = vmatprep.mubr.f32.mxu0 0.0
        %3355 = vmatmul.mubr.f32.gmra.mrb[0].mxu0 %v2908
        %v3356 = vpop.f32.mrb[0].mxu0
        %v3357 = vadd.f32 0.0, %v3356
        %v3358 = vpop.f32.mrb[0].mxu0
        %3359 = vdwg.mxu0
        %3360 = vmatprep.subr.mxu0 0.0
        %3361 = vmatpush1.msra.mxu0 %v843
        %3362 = vmatprep.subr.mxu0 0.0
        %3363 = vmatpush1.msra.mxu0 %v844
        %3364 = vmatprep.subr.mxu0 0.0
        %3365 = vmatpush1.msra.mxu0 %v845
        %3366 = vmatprep.subr.mxu0 0.0
        %3367 = vmatpush1.msra.mxu0 %v846
        %3368 = vmatprep.subr.mxu0 0.0
        %3369 = vmatpush1.msra.mxu0 %v847
        %3370 = vmatprep.subr.mxu0 0.0
        %3371 = vmatpush1.msra.mxu0 %v848
        %3372 = vmatprep.subr.mxu0 0.0
        %3373 = vmatpush1.msra.mxu0 %v849
        %3374 = vmatprep.subr.mxu0 0.0
        %3375 = vmatpush1.msra.mxu0 %v850
        %3376 = vmatprep.subr.mxu0 0.0
        %3377 = vmatpush1.msra.mxu0 0.0
        %3378 = vmatprep.subr.mxu0 0.0
        %3379 = vmatpush1.msra.mxu0 0.0
        %3380 = vmatprep.subr.mxu0 0.0
        %3381 = vmatpush1.msra.mxu0 0.0
        %3382 = vmatprep.subr.mxu0 0.0
        %3383 = vmatpush1.msra.mxu0 0.0
        %3384 = vmatprep.subr.mxu0 0.0
        %3385 = vmatpush1.msra.mxu0 0.0
        %3386 = vmatprep.subr.mxu0 0.0
        %3387 = vmatpush1.msra.mxu0 0.0
        %3388 = vmatprep.subr.mxu0 0.0
        %3389 = vmatpush1.msra.mxu0 0.0
        %3390 = vmatprep.subr.mxu0 0.0
        %3391 = vmatpush1.msra.mxu0 0.0
        %3392 = vmatprep.subr.mxu0 0.0
        %3393 = vmatpush1.msra.mxu0 0.0
        %3394 = vmatprep.subr.mxu0 0.0
        %3395 = vmatpush1.msra.mxu0 0.0
        %3396 = vmatprep.subr.mxu0 0.0
        %3397 = vmatpush1.msra.mxu0 0.0
        %3398 = vmatprep.subr.mxu0 0.0
        %3399 = vmatpush1.msra.mxu0 0.0
        %3400 = vmatprep.subr.mxu0 0.0
        %3401 = vmatpush1.msra.mxu0 0.0
        %3402 = vmatprep.subr.mxu0 0.0
        %3403 = vmatpush1.msra.mxu0 0.0
        %3404 = vmatprep.subr.mxu0 0.0
        %3405 = vmatpush1.msra.mxu0 0.0
        %3406 = vmatprep.subr.mxu0 0.0
        %3407 = vmatpush1.msra.mxu0 0.0
        %3408 = vmatprep.subr.mxu0 0.0
        %3409 = vmatpush1.msra.mxu0 0.0
        %3410 = vmatprep.subr.mxu0 0.0
        %3411 = vmatpush1.msra.mxu0 0.0
        %3412 = vmatprep.subr.mxu0 0.0
        %3413 = vmatpush1.msra.mxu0 0.0
        %3414 = vmatprep.subr.mxu0 0.0
        %3415 = vmatpush1.msra.mxu0 0.0
        %3416 = vmatprep.subr.mxu0 0.0
        %3417 = vmatpush1.msra.mxu0 0.0
        %3418 = vmatprep.subr.mxu0 0.0
        %3419 = vmatpush1.msra.mxu0 0.0
        %3420 = vmatprep.subr.mxu0 0.0
        %3421 = vmatpush1.msra.mxu0 0.0
        %3422 = vmatprep.subr.mxu0 0.0
        %3423 = vmatpush1.msra.mxu0 0.0
        %3424 = vmatprep.mubr.f32.mxu0 0.0
        %3425 = vmatmul.mubr.f32.gmra.mrb[0].mxu0 %v2905
        %v3426 = vpop.f32.mrb[0].mxu0
        %v3427 = vadd.f32 0.0, %v3426
        %v3428 = vpop.f32.mrb[0].mxu0
        %3429 = vmatprep.mubr.f32.mxu0 0.0
        %3430 = vmatmul.mubr.f32.gmra.mrb[0].mxu0 %v2908
        %v3431 = vpop.f32.mrb[0].mxu0
        %v3432 = vadd.f32 0.0, %v3431
        %v3433 = vpop.f32.mrb[0].mxu0
        %3434 = vdwg.mxu0
        %3435 = vmatprep.subr.mxu0 0.0
        %3436 = vmatpush1.msra.mxu0 %v851
        %3437 = vmatprep.subr.mxu0 0.0
        %3438 = vmatpush1.msra.mxu0 %v852
        %3439 = vmatprep.subr.mxu0 0.0
        %3440 = vmatpush1.msra.mxu0 %v853
        %3441 = vmatprep.subr.mxu0 0.0
        %3442 = vmatpush1.msra.mxu0 %v854
        %3443 = vmatprep.subr.mxu0 0.0
        %3444 = vmatpush1.msra.mxu0 %v855
        %3445 = vmatprep.subr.mxu0 0.0
        %3446 = vmatpush1.msra.mxu0 %v856
        %3447 = vmatprep.subr.mxu0 0.0
        %3448 = vmatpush1.msra.mxu0 %v857
        %3449 = vmatprep.subr.mxu0 0.0
        %3450 = vmatpush1.msra.mxu0 %v858
        %3451 = vmatprep.subr.mxu0 0.0
        %3452 = vmatpush1.msra.mxu0 0.0
        %3453 = vmatprep.subr.mxu0 0.0
        %3454 = vmatpush1.msra.mxu0 0.0
        %3455 = vmatprep.subr.mxu0 0.0
        %3456 = vmatpush1.msra.mxu0 0.0
        %3457 = vmatprep.subr.mxu0 0.0
        %3458 = vmatpush1.msra.mxu0 0.0
        %3459 = vmatprep.subr.mxu0 0.0
        %3460 = vmatpush1.msra.mxu0 0.0
        %3461 = vmatprep.subr.mxu0 0.0
        %3462 = vmatpush1.msra.mxu0 0.0
        %3463 = vmatprep.subr.mxu0 0.0
        %3464 = vmatpush1.msra.mxu0 0.0
        %3465 = vmatprep.subr.mxu0 0.0
        %3466 = vmatpush1.msra.mxu0 0.0
        %3467 = vmatprep.subr.mxu0 0.0
        %3468 = vmatpush1.msra.mxu0 0.0
        %3469 = vmatprep.subr.mxu0 0.0
        %3470 = vmatpush1.msra.mxu0 0.0
        %3471 = vmatprep.subr.mxu0 0.0
        %3472 = vmatpush1.msra.mxu0 0.0
        %3473 = vmatprep.subr.mxu0 0.0
        %3474 = vmatpush1.msra.mxu0 0.0
        %3475 = vmatprep.subr.mxu0 0.0
        %3476 = vmatpush1.msra.mxu0 0.0
        %3477 = vmatprep.subr.mxu0 0.0
        %3478 = vmatpush1.msra.mxu0 0.0
        %3479 = vmatprep.subr.mxu0 0.0
        %3480 = vmatpush1.msra.mxu0 0.0
        %3481 = vmatprep.subr.mxu0 0.0
        %3482 = vmatpush1.msra.mxu0 0.0
        %3483 = vmatprep.subr.mxu0 0.0
        %3484 = vmatpush1.msra.mxu0 0.0
        %3485 = vmatprep.subr.mxu0 0.0
        %3486 = vmatpush1.msra.mxu0 0.0
        %3487 = vmatprep.subr.mxu0 0.0
        %3488 = vmatpush1.msra.mxu0 0.0
        %3489 = vmatprep.subr.mxu0 0.0
        %3490 = vmatpush1.msra.mxu0 0.0
        %3491 = vmatprep.subr.mxu0 0.0
        %3492 = vmatpush1.msra.mxu0 0.0
        %3493 = vmatprep.subr.mxu0 0.0
        %3494 = vmatpush1.msra.mxu0 0.0
        %3495 = vmatprep.subr.mxu0 0.0
        %3496 = vmatpush1.msra.mxu0 0.0
        %3497 = vmatprep.subr.mxu0 0.0
        %3498 = vmatpush1.msra.mxu0 0.0
        %3499 = vmatprep.mubr.f32.mxu0 0.0
        %3500 = vmatmul.mubr.f32.gmra.mrb[0].mxu0 %v2905
        %v3501 = vpop.f32.mrb[0].mxu0
        %v3502 = vadd.f32 0.0, %v3501
        %v3503 = vpop.f32.mrb[0].mxu0
        %3504 = vmatprep.mubr.f32.mxu0 0.0
        %3505 = vmatmul.mubr.f32.gmra.mrb[0].mxu0 %v2908
        %v3506 = vpop.f32.mrb[0].mxu0
        %v3507 = vadd.f32 0.0, %v3506
        %v3508 = vpop.f32.mrb[0].mxu0
        %3509 = vdwg.mxu0
        %3510 = vmatprep.subr.mxu0 0.0
        %3511 = vmatpush1.msra.mxu0 %v859
        %3512 = vmatprep.subr.mxu0 0.0
        %3513 = vmatpush1.msra.mxu0 %v860
        %3514 = vmatprep.subr.mxu0 0.0
        %3515 = vmatpush1.msra.mxu0 %v861
        %3516 = vmatprep.subr.mxu0 0.0
        %3517 = vmatpush1.msra.mxu0 %v862
        %3518 = vmatprep.subr.mxu0 0.0
        %3519 = vmatpush1.msra.mxu0 %v863
        %3520 = vmatprep.subr.mxu0 0.0
        %3521 = vmatpush1.msra.mxu0 %v864
        %3522 = vmatprep.subr.mxu0 0.0
        %3523 = vmatpush1.msra.mxu0 %v865
        %3524 = vmatprep.subr.mxu0 0.0
        %3525 = vmatpush1.msra.mxu0 %v866
        %3526 = vmatprep.subr.mxu0 0.0
        %3527 = vmatpush1.msra.mxu0 0.0
        %3528 = vmatprep.subr.mxu0 0.0
        %3529 = vmatpush1.msra.mxu0 0.0
        %3530 = vmatprep.subr.mxu0 0.0
        %3531 = vmatpush1.msra.mxu0 0.0
        %3532 = vmatprep.subr.mxu0 0.0
        %3533 = vmatpush1.msra.mxu0 0.0
        %3534 = vmatprep.subr.mxu0 0.0
        %3535 = vmatpush1.msra.mxu0 0.0
        %3536 = vmatprep.subr.mxu0 0.0
        %3537 = vmatpush1.msra.mxu0 0.0
        %3538 = vmatprep.subr.mxu0 0.0
        %3539 = vmatpush1.msra.mxu0 0.0
        %3540 = vmatprep.subr.mxu0 0.0
        %3541 = vmatpush1.msra.mxu0 0.0
        %3542 = vmatprep.subr.mxu0 0.0
        %3543 = vmatpush1.msra.mxu0 0.0
        %3544 = vmatprep.subr.mxu0 0.0
        %3545 = vmatpush1.msra.mxu0 0.0
        %3546 = vmatprep.subr.mxu0 0.0
        %3547 = vmatpush1.msra.mxu0 0.0
        %3548 = vmatprep.subr.mxu0 0.0
        %3549 = vmatpush1.msra.mxu0 0.0
        %3550 = vmatprep.subr.mxu0 0.0
        %3551 = vmatpush1.msra.mxu0 0.0
        %3552 = vmatprep.subr.mxu0 0.0
        %3553 = vmatpush1.msra.mxu0 0.0
        %3554 = vmatprep.subr.mxu0 0.0
        %3555 = vmatpush1.msra.mxu0 0.0
        %3556 = vmatprep.subr.mxu0 0.0
        %3557 = vmatpush1.msra.mxu0 0.0
        %3558 = vmatprep.subr.mxu0 0.0
        %3559 = vmatpush1.msra.mxu0 0.0
        %3560 = vmatprep.subr.mxu0 0.0
        %3561 = vmatpush1.msra.mxu0 0.0
        %3562 = vmatprep.subr.mxu0 0.0
        %3563 = vmatpush1.msra.mxu0 0.0
        %3564 = vmatprep.subr.mxu0 0.0
        %3565 = vmatpush1.msra.mxu0 0.0
        %3566 = vmatprep.subr.mxu0 0.0
        %3567 = vmatpush1.msra.mxu0 0.0
        %3568 = vmatprep.subr.mxu0 0.0
        %3569 = vmatpush1.msra.mxu0 0.0
        %3570 = vmatprep.subr.mxu0 0.0
        %3571 = vmatpush1.msra.mxu0 0.0
        %3572 = vmatprep.subr.mxu0 0.0
        %3573 = vmatpush1.msra.mxu0 0.0
        %3574 = vmatprep.mubr.f32.mxu0 0.0
        %3575 = vmatmul.mubr.f32.gmra.mrb[0].mxu0 %v2905
        %v3576 = vpop.f32.mrb[0].mxu0
        %v3577 = vadd.f32 0.0, %v3576
        %v3578 = vpop.f32.mrb[0].mxu0
        %3579 = vmatprep.mubr.f32.mxu0 0.0
        %3580 = vmatmul.mubr.f32.gmra.mrb[0].mxu0 %v2908
        %v3581 = vpop.f32.mrb[0].mxu0
        %v3582 = vadd.f32 0.0, %v3581
        %v3583 = vpop.f32.mrb[0].mxu0
        %3584 = vdwg.mxu0
        %3585 = vmatprep.subr.mxu0 0.0
        %3586 = vmatpush1.msra.mxu0 %v867
        %3587 = vmatprep.subr.mxu0 0.0
        %3588 = vmatpush1.msra.mxu0 %v868
        %3589 = vmatprep.subr.mxu0 0.0
        %3590 = vmatpush1.msra.mxu0 %v869
        %3591 = vmatprep.subr.mxu0 0.0
        %3592 = vmatpush1.msra.mxu0 %v870
        %3593 = vmatprep.subr.mxu0 0.0
        %3594 = vmatpush1.msra.mxu0 %v871
        %3595 = vmatprep.subr.mxu0 0.0
        %3596 = vmatpush1.msra.mxu0 %v872
        %3597 = vmatprep.subr.mxu0 0.0
        %3598 = vmatpush1.msra.mxu0 %v873
        %3599 = vmatprep.subr.mxu0 0.0
        %3600 = vmatpush1.msra.mxu0 %v874
        %3601 = vmatprep.subr.mxu0 0.0
        %3602 = vmatpush1.msra.mxu0 0.0
        %3603 = vmatprep.subr.mxu0 0.0
        %3604 = vmatpush1.msra.mxu0 0.0
        %3605 = vmatprep.subr.mxu0 0.0
        %3606 = vmatpush1.msra.mxu0 0.0
        %3607 = vmatprep.subr.mxu0 0.0
        %3608 = vmatpush1.msra.mxu0 0.0
        %3609 = vmatprep.subr.mxu0 0.0
        %3610 = vmatpush1.msra.mxu0 0.0
        %3611 = vmatprep.subr.mxu0 0.0
        %3612 = vmatpush1.msra.mxu0 0.0
        %3613 = vmatprep.subr.mxu0 0.0
        %3614 = vmatpush1.msra.mxu0 0.0
        %3615 = vmatprep.subr.mxu0 0.0
        %3616 = vmatpush1.msra.mxu0 0.0
        %3617 = vmatprep.subr.mxu0 0.0
        %3618 = vmatpush1.msra.mxu0 0.0
        %3619 = vmatprep.subr.mxu0 0.0
        %3620 = vmatpush1.msra.mxu0 0.0
        %3621 = vmatprep.subr.mxu0 0.0
        %3622 = vmatpush1.msra.mxu0 0.0
        %3623 = vmatprep.subr.mxu0 0.0
        %3624 = vmatpush1.msra.mxu0 0.0
        %3625 = vmatprep.subr.mxu0 0.0
        %3626 = vmatpush1.msra.mxu0 0.0
        %3627 = vmatprep.subr.mxu0 0.0
        %3628 = vmatpush1.msra.mxu0 0.0
        %3629 = vmatprep.subr.mxu0 0.0
        %3630 = vmatpush1.msra.mxu0 0.0
        %3631 = vmatprep.subr.mxu0 0.0
        %3632 = vmatpush1.msra.mxu0 0.0
        %3633 = vmatprep.subr.mxu0 0.0
        %3634 = vmatpush1.msra.mxu0 0.0
        %3635 = vmatprep.subr.mxu0 0.0
        %3636 = vmatpush1.msra.mxu0 0.0
        %3637 = vmatprep.subr.mxu0 0.0
        %3638 = vmatpush1.msra.mxu0 0.0
        %3639 = vmatprep.subr.mxu0 0.0
        %3640 = vmatpush1.msra.mxu0 0.0
        %3641 = vmatprep.subr.mxu0 0.0
        %3642 = vmatpush1.msra.mxu0 0.0
        %3643 = vmatprep.subr.mxu0 0.0
        %3644 = vmatpush1.msra.mxu0 0.0
        %3645 = vmatprep.subr.mxu0 0.0
        %3646 = vmatpush1.msra.mxu0 0.0
        %3647 = vmatprep.subr.mxu0 0.0
        %3648 = vmatpush1.msra.mxu0 0.0
        %3649 = vmatprep.mubr.f32.mxu0 0.0
        %3650 = vmatmul.mubr.f32.gmra.mrb[0].mxu0 %v2905
        %v3651 = vpop.f32.mrb[0].mxu0
        %v3652 = vadd.f32 0.0, %v3651
        %v3653 = vpop.f32.mrb[0].mxu0
        %3654 = vmatprep.mubr.f32.mxu0 0.0
        %3655 = vmatmul.mubr.f32.gmra.mrb[0].mxu0 %v2908
        %v3656 = vpop.f32.mrb[0].mxu0
        %v3657 = vadd.f32 0.0, %v3656
        %v3658 = vpop.f32.mrb[0].mxu0
        %3659 = vdwg.mxu0
        %3660 = vmatprep.subr.mxu0 0.0
        %3661 = vmatpush1.msra.mxu0 %v875
        %3662 = vmatprep.subr.mxu0 0.0
        %3663 = vmatpush1.msra.mxu0 %v876
        %3664 = vmatprep.subr.mxu0 0.0
        %3665 = vmatpush1.msra.mxu0 %v877
        %3666 = vmatprep.subr.mxu0 0.0
        %3667 = vmatpush1.msra.mxu0 %v878
        %3668 = vmatprep.subr.mxu0 0.0
        %3669 = vmatpush1.msra.mxu0 %v879
        %3670 = vmatprep.subr.mxu0 0.0
        %3671 = vmatpush1.msra.mxu0 %v880
        %3672 = vmatprep.subr.mxu0 0.0
        %3673 = vmatpush1.msra.mxu0 %v881
        %3674 = vmatprep.subr.mxu0 0.0
        %3675 = vmatpush1.msra.mxu0 %v882
        %3676 = vmatprep.subr.mxu0 0.0
        %3677 = vmatpush1.msra.mxu0 0.0
        %3678 = vmatprep.subr.mxu0 0.0
        %3679 = vmatpush1.msra.mxu0 0.0
        %3680 = vmatprep.subr.mxu0 0.0
        %3681 = vmatpush1.msra.mxu0 0.0
        %3682 = vmatprep.subr.mxu0 0.0
        %3683 = vmatpush1.msra.mxu0 0.0
        %3684 = vmatprep.subr.mxu0 0.0
        %3685 = vmatpush1.msra.mxu0 0.0
        %3686 = vmatprep.subr.mxu0 0.0
        %3687 = vmatpush1.msra.mxu0 0.0
        %3688 = vmatprep.subr.mxu0 0.0
        %3689 = vmatpush1.msra.mxu0 0.0
        %3690 = vmatprep.subr.mxu0 0.0
        %3691 = vmatpush1.msra.mxu0 0.0
        %3692 = vmatprep.subr.mxu0 0.0
        %3693 = vmatpush1.msra.mxu0 0.0
        %3694 = vmatprep.subr.mxu0 0.0
        %3695 = vmatpush1.msra.mxu0 0.0
        %3696 = vmatprep.subr.mxu0 0.0
        %3697 = vmatpush1.msra.mxu0 0.0
        %3698 = vmatprep.subr.mxu0 0.0
        %3699 = vmatpush1.msra.mxu0 0.0
        %3700 = vmatprep.subr.mxu0 0.0
        %3701 = vmatpush1.msra.mxu0 0.0
        %3702 = vmatprep.subr.mxu0 0.0
        %3703 = vmatpush1.msra.mxu0 0.0
        %3704 = vmatprep.subr.mxu0 0.0
        %3705 = vmatpush1.msra.mxu0 0.0
        %3706 = vmatprep.subr.mxu0 0.0
        %3707 = vmatpush1.msra.mxu0 0.0
        %3708 = vmatprep.subr.mxu0 0.0
        %3709 = vmatpush1.msra.mxu0 0.0
        %3710 = vmatprep.subr.mxu0 0.0
        %3711 = vmatpush1.msra.mxu0 0.0
        %3712 = vmatprep.subr.mxu0 0.0
        %3713 = vmatpush1.msra.mxu0 0.0
        %3714 = vmatprep.subr.mxu0 0.0
        %3715 = vmatpush1.msra.mxu0 0.0
        %3716 = vmatprep.subr.mxu0 0.0
        %3717 = vmatpush1.msra.mxu0 0.0
        %3718 = vmatprep.subr.mxu0 0.0
        %3719 = vmatpush1.msra.mxu0 0.0
        %3720 = vmatprep.subr.mxu0 0.0
        %3721 = vmatpush1.msra.mxu0 0.0
        %3722 = vmatprep.subr.mxu0 0.0
        %3723 = vmatpush1.msra.mxu0 0.0
        %3724 = vmatprep.mubr.f32.mxu0 0.0
        %3725 = vmatmul.mubr.f32.gmra.mrb[0].mxu0 %v2905
        %v3726 = vpop.f32.mrb[0].mxu0
        %v3727 = vadd.f32 0.0, %v3726
        %v3728 = vpop.f32.mrb[0].mxu0
        %3729 = vmatprep.mubr.f32.mxu0 0.0
        %3730 = vmatmul.mubr.f32.gmra.mrb[0].mxu0 %v2908
        %v3731 = vpop.f32.mrb[0].mxu0
        %v3732 = vadd.f32 0.0, %v3731
        %v3733 = vpop.f32.mrb[0].mxu0
        %3734 = vdwg.mxu0
        %3735 = vmatprep.subr.mxu0 0.0
        %3736 = vmatpush1.msra.mxu0 %v883
        %3737 = vmatprep.subr.mxu0 0.0
        %3738 = vmatpush1.msra.mxu0 %v884
        %3739 = vmatprep.subr.mxu0 0.0
        %3740 = vmatpush1.msra.mxu0 %v885
        %3741 = vmatprep.subr.mxu0 0.0
        %3742 = vmatpush1.msra.mxu0 %v886
        %3743 = vmatprep.subr.mxu0 0.0
        %3744 = vmatpush1.msra.mxu0 %v887
        %3745 = vmatprep.subr.mxu0 0.0
        %3746 = vmatpush1.msra.mxu0 %v888
        %3747 = vmatprep.subr.mxu0 0.0
        %3748 = vmatpush1.msra.mxu0 %v889
        %3749 = vmatprep.subr.mxu0 0.0
        %3750 = vmatpush1.msra.mxu0 %v890
        %3751 = vmatprep.subr.mxu0 0.0
        %3752 = vmatpush1.msra.mxu0 0.0
        %3753 = vmatprep.subr.mxu0 0.0
        %3754 = vmatpush1.msra.mxu0 0.0
        %3755 = vmatprep.subr.mxu0 0.0
        %3756 = vmatpush1.msra.mxu0 0.0
        %3757 = vmatprep.subr.mxu0 0.0
        %3758 = vmatpush1.msra.mxu0 0.0
        %3759 = vmatprep.subr.mxu0 0.0
        %3760 = vmatpush1.msra.mxu0 0.0
        %3761 = vmatprep.subr.mxu0 0.0
        %3762 = vmatpush1.msra.mxu0 0.0
        %3763 = vmatprep.subr.mxu0 0.0
        %3764 = vmatpush1.msra.mxu0 0.0
        %3765 = vmatprep.subr.mxu0 0.0
        %3766 = vmatpush1.msra.mxu0 0.0
        %3767 = vmatprep.subr.mxu0 0.0
        %3768 = vmatpush1.msra.mxu0 0.0
        %3769 = vmatprep.subr.mxu0 0.0
        %3770 = vmatpush1.msra.mxu0 0.0
        %3771 = vmatprep.subr.mxu0 0.0
        %3772 = vmatpush1.msra.mxu0 0.0
        %3773 = vmatprep.subr.mxu0 0.0
        %3774 = vmatpush1.msra.mxu0 0.0
        %3775 = vmatprep.subr.mxu0 0.0
        %3776 = vmatpush1.msra.mxu0 0.0
        %3777 = vmatprep.subr.mxu0 0.0
        %3778 = vmatpush1.msra.mxu0 0.0
        %3779 = vmatprep.subr.mxu0 0.0
        %3780 = vmatpush1.msra.mxu0 0.0
        %3781 = vmatprep.subr.mxu0 0.0
        %3782 = vmatpush1.msra.mxu0 0.0
        %3783 = vmatprep.subr.mxu0 0.0
        %3784 = vmatpush1.msra.mxu0 0.0
        %3785 = vmatprep.subr.mxu0 0.0
        %3786 = vmatpush1.msra.mxu0 0.0
        %3787 = vmatprep.subr.mxu0 0.0
        %3788 = vmatpush1.msra.mxu0 0.0
        %3789 = vmatprep.subr.mxu0 0.0
        %3790 = vmatpush1.msra.mxu0 0.0
        %3791 = vmatprep.subr.mxu0 0.0
        %3792 = vmatpush1.msra.mxu0 0.0
        %3793 = vmatprep.subr.mxu0 0.0
        %3794 = vmatpush1.msra.mxu0 0.0
        %3795 = vmatprep.subr.mxu0 0.0
        %3796 = vmatpush1.msra.mxu0 0.0
        %3797 = vmatprep.subr.mxu0 0.0
        %3798 = vmatpush1.msra.mxu0 0.0
        %3799 = vmatprep.mubr.f32.mxu0 0.0
        %3800 = vmatmul.mubr.f32.gmra.mrb[0].mxu0 %v2905
        %v3801 = vpop.f32.mrb[0].mxu0
        %v3802 = vadd.f32 0.0, %v3801
        %v3803 = vpop.f32.mrb[0].mxu0
        %3804 = vmatprep.mubr.f32.mxu0 0.0
        %3805 = vmatmul.mubr.f32.gmra.mrb[0].mxu0 %v2908
        %v3806 = vpop.f32.mrb[0].mxu0
        %v3807 = vadd.f32 0.0, %v3806
        %v3808 = vpop.f32.mrb[0].mxu0
        %3809 = vdwg.mxu0
        %v3811 = vsel %vm1805, %v2977, 0
        %v3814 = vsel %vm1805, %v2982, 0
        %v3817 = vsel %vm1805, %v3277, 0
        %v3820 = vsel %vm1805, %v3282, 0
        %3822 = vmatprep.subr.mxu0 0.0
        %3823 = vmatpush1.xpose.msra.mxu0 %v3817
        %3824 = vmatprep.subr.mxu0 0.0
        %3825 = vmatpush1.xpose.msra.mxu0 %v3820
        %3826 = vmatprep.subr.mxu0 0.0
        %3827 = vmatpush1.xpose.msra.mxu0 0.0
        %3828 = vmatprep.subr.mxu0 0.0
        %3829 = vmatpush1.xpose.msra.mxu0 0.0
        %3830 = vmatprep.subr.mxu0 0.0
        %3831 = vmatpush1.xpose.msra.mxu0 0.0
        %3832 = vmatprep.subr.mxu0 0.0
        %3833 = vmatpush1.xpose.msra.mxu0 0.0
        %3834 = vmatprep.subr.mxu0 0.0
        %3835 = vmatpush1.xpose.msra.mxu0 0.0
        %3836 = vmatprep.subr.mxu0 0.0
        %3837 = vmatpush1.xpose.msra.mxu0 0.0
        %3838 = vmatprep.subr.mxu0 0.0
        %3839 = vmatpush1.xpose.msra.mxu0 0.0
        %3840 = vmatprep.subr.mxu0 0.0
        %3841 = vmatpush1.xpose.msra.mxu0 0.0
        %3842 = vmatprep.subr.mxu0 0.0
        %3843 = vmatpush1.xpose.msra.mxu0 0.0
        %3844 = vmatprep.subr.mxu0 0.0
        %3845 = vmatpush1.xpose.msra.mxu0 0.0
        %3846 = vmatprep.subr.mxu0 0.0
        %3847 = vmatpush1.xpose.msra.mxu0 0.0
        %3848 = vmatprep.subr.mxu0 0.0
        %3849 = vmatpush1.xpose.msra.mxu0 0.0
        %3850 = vmatprep.subr.mxu0 0.0
        %3851 = vmatpush1.xpose.msra.mxu0 0.0
        %3852 = vmatprep.subr.mxu0 0.0
        %3853 = vmatpush1.xpose.msra.mxu0 0.0
        %3854 = vmatprep.subr.mxu0 0.0
        %3855 = vmatpush1.xpose.msra.mxu0 0.0
        %3856 = vmatprep.subr.mxu0 0.0
        %3857 = vmatpush1.xpose.msra.mxu0 0.0
        %3858 = vmatprep.subr.mxu0 0.0
        %3859 = vmatpush1.xpose.msra.mxu0 0.0
        %3860 = vmatprep.subr.mxu0 0.0
        %3861 = vmatpush1.xpose.msra.mxu0 0.0
        %3862 = vmatprep.subr.mxu0 0.0
        %3863 = vmatpush1.xpose.msra.mxu0 0.0
        %3864 = vmatprep.subr.mxu0 0.0
        %3865 = vmatpush1.xpose.msra.mxu0 0.0
        %3866 = vmatprep.subr.mxu0 0.0
        %3867 = vmatpush1.xpose.msra.mxu0 0.0
        %3868 = vmatprep.subr.mxu0 0.0
        %3869 = vmatpush1.xpose.msra.mxu0 0.0
        %3870 = vmatprep.subr.mxu0 0.0
        %3871 = vmatpush1.xpose.msra.mxu0 0.0
        %3872 = vmatprep.subr.mxu0 0.0
        %3873 = vmatpush1.xpose.msra.mxu0 0.0
        %3874 = vmatprep.subr.mxu0 0.0
        %3875 = vmatpush1.xpose.msra.mxu0 0.0
        %3876 = vmatprep.subr.mxu0 0.0
        %3877 = vmatpush1.xpose.msra.mxu0 0.0
        %3878 = vmatprep.subr.mxu0 0.0
        %3879 = vmatpush1.xpose.msra.mxu0 0.0
        %3880 = vmatprep.subr.mxu0 0.0
        %3881 = vmatpush1.xpose.msra.mxu0 0.0
        %3882 = vmatprep.subr.mxu0 0.0
        %3883 = vmatpush1.xpose.msra.mxu0 0.0
        %3884 = vmatprep.subr.mxu0 0.0
        %3885 = vmatpush1.xpose.msra.mxu0 0.0
        %3886 = vmatprep.mubr.f32.mxu0 0.0
        %3887 = vmatmul.mubr.f32.gmra.mrb[0].mxu0 %v3811
        %v3888 = vpop.f32.mrb[0].mxu0
        %v3889 = vadd.f32 0.0, %v3888
        %v3890 = vpop.f32.mrb[0].mxu0
        %3891 = vmatprep.mubr.f32.mxu0 0.0
        %3892 = vmatmul.mubr.f32.gmra.mrb[0].mxu0 %v3814
        %v3893 = vpop.f32.mrb[0].mxu0
        %v3894 = vadd.f32 0.0, %v3893
        %v3895 = vpop.f32.mrb[0].mxu0
        %3896 = vdwg.mxu0
        %v3898 = vsel %vm1805, %v3052, 0
        %v3901 = vsel %vm1805, %v3057, 0
        %v3904 = vsel %vm1805, %v3352, 0
        %v3907 = vsel %vm1805, %v3357, 0
        %3909 = vmatprep.subr.mxu0 0.0
        %3910 = vmatpush1.xpose.msra.mxu0 %v3904
        %3911 = vmatprep.subr.mxu0 0.0
        %3912 = vmatpush1.xpose.msra.mxu0 %v3907
        %3913 = vmatprep.subr.mxu0 0.0
        %3914 = vmatpush1.xpose.msra.mxu0 0.0
        %3915 = vmatprep.subr.mxu0 0.0
        %3916 = vmatpush1.xpose.msra.mxu0 0.0
        %3917 = vmatprep.subr.mxu0 0.0
        %3918 = vmatpush1.xpose.msra.mxu0 0.0
        %3919 = vmatprep.subr.mxu0 0.0
        %3920 = vmatpush1.xpose.msra.mxu0 0.0
        %3921 = vmatprep.subr.mxu0 0.0
        %3922 = vmatpush1.xpose.msra.mxu0 0.0
        %3923 = vmatprep.subr.mxu0 0.0
        %3924 = vmatpush1.xpose.msra.mxu0 0.0
        %3925 = vmatprep.subr.mxu0 0.0
        %3926 = vmatpush1.xpose.msra.mxu0 0.0
        %3927 = vmatprep.subr.mxu0 0.0
        %3928 = vmatpush1.xpose.msra.mxu0 0.0
        %3929 = vmatprep.subr.mxu0 0.0
        %3930 = vmatpush1.xpose.msra.mxu0 0.0
        %3931 = vmatprep.subr.mxu0 0.0
        %3932 = vmatpush1.xpose.msra.mxu0 0.0
        %3933 = vmatprep.subr.mxu0 0.0
        %3934 = vmatpush1.xpose.msra.mxu0 0.0
        %3935 = vmatprep.subr.mxu0 0.0
        %3936 = vmatpush1.xpose.msra.mxu0 0.0
        %3937 = vmatprep.subr.mxu0 0.0
        %3938 = vmatpush1.xpose.msra.mxu0 0.0
        %3939 = vmatprep.subr.mxu0 0.0
        %3940 = vmatpush1.xpose.msra.mxu0 0.0
        %3941 = vmatprep.subr.mxu0 0.0
        %3942 = vmatpush1.xpose.msra.mxu0 0.0
        %3943 = vmatprep.subr.mxu0 0.0
        %3944 = vmatpush1.xpose.msra.mxu0 0.0
        %3945 = vmatprep.subr.mxu0 0.0
        %3946 = vmatpush1.xpose.msra.mxu0 0.0
        %3947 = vmatprep.subr.mxu0 0.0
        %3948 = vmatpush1.xpose.msra.mxu0 0.0
        %3949 = vmatprep.subr.mxu0 0.0
        %3950 = vmatpush1.xpose.msra.mxu0 0.0
        %3951 = vmatprep.subr.mxu0 0.0
        %3952 = vmatpush1.xpose.msra.mxu0 0.0
        %3953 = vmatprep.subr.mxu0 0.0
        %3954 = vmatpush1.xpose.msra.mxu0 0.0
        %3955 = vmatprep.subr.mxu0 0.0
        %3956 = vmatpush1.xpose.msra.mxu0 0.0
        %3957 = vmatprep.subr.mxu0 0.0
        %3958 = vmatpush1.xpose.msra.mxu0 0.0
        %3959 = vmatprep.subr.mxu0 0.0
        %3960 = vmatpush1.xpose.msra.mxu0 0.0
        %3961 = vmatprep.subr.mxu0 0.0
        %3962 = vmatpush1.xpose.msra.mxu0 0.0
        %3963 = vmatprep.subr.mxu0 0.0
        %3964 = vmatpush1.xpose.msra.mxu0 0.0
        %3965 = vmatprep.subr.mxu0 0.0
        %3966 = vmatpush1.xpose.msra.mxu0 0.0
        %3967 = vmatprep.subr.mxu0 0.0
        %3968 = vmatpush1.xpose.msra.mxu0 0.0
        %3969 = vmatprep.subr.mxu0 0.0
        %3970 = vmatpush1.xpose.msra.mxu0 0.0
        %3971 = vmatprep.subr.mxu0 0.0
        %3972 = vmatpush1.xpose.msra.mxu0 0.0
        %3973 = vmatprep.mubr.f32.mxu0 0.0
        %3974 = vmatmul.mubr.f32.gmra.mrb[0].mxu0 %v3898
        %v3975 = vpop.f32.mrb[0].mxu0
        %v3976 = vadd.f32 0.0, %v3975
        %v3977 = vpop.f32.mrb[0].mxu0
        %3978 = vmatprep.mubr.f32.mxu0 0.0
        %3979 = vmatmul.mubr.f32.gmra.mrb[0].mxu0 %v3901
        %v3980 = vpop.f32.mrb[0].mxu0
        %v3981 = vadd.f32 0.0, %v3980
        %v3982 = vpop.f32.mrb[0].mxu0
        %3983 = vdwg.mxu0
        %v3985 = vsel %vm1805, %v3127, 0
        %v3988 = vsel %vm1805, %v3132, 0
        %v3991 = vsel %vm1805, %v3427, 0
        %v3994 = vsel %vm1805, %v3432, 0
        %3996 = vmatprep.subr.mxu0 0.0
        %3997 = vmatpush1.xpose.msra.mxu0 %v3991
        %3998 = vmatprep.subr.mxu0 0.0
        %3999 = vmatpush1.xpose.msra.mxu0 %v3994
        %4000 = vmatprep.subr.mxu0 0.0
        %4001 = vmatpush1.xpose.msra.mxu0 0.0
        %4002 = vmatprep.subr.mxu0 0.0
        %4003 = vmatpush1.xpose.msra.mxu0 0.0
        %4004 = vmatprep.subr.mxu0 0.0
        %4005 = vmatpush1.xpose.msra.mxu0 0.0
        %4006 = vmatprep.subr.mxu0 0.0
        %4007 = vmatpush1.xpose.msra.mxu0 0.0
        %4008 = vmatprep.subr.mxu0 0.0
        %4009 = vmatpush1.xpose.msra.mxu0 0.0
        %4010 = vmatprep.subr.mxu0 0.0
        %4011 = vmatpush1.xpose.msra.mxu0 0.0
        %4012 = vmatprep.subr.mxu0 0.0
        %4013 = vmatpush1.xpose.msra.mxu0 0.0
        %4014 = vmatprep.subr.mxu0 0.0
        %4015 = vmatpush1.xpose.msra.mxu0 0.0
        %4016 = vmatprep.subr.mxu0 0.0
        %4017 = vmatpush1.xpose.msra.mxu0 0.0
        %4018 = vmatprep.subr.mxu0 0.0
        %4019 = vmatpush1.xpose.msra.mxu0 0.0
        %4020 = vmatprep.subr.mxu0 0.0
        %4021 = vmatpush1.xpose.msra.mxu0 0.0
        %4022 = vmatprep.subr.mxu0 0.0
        %4023 = vmatpush1.xpose.msra.mxu0 0.0
        %4024 = vmatprep.subr.mxu0 0.0
        %4025 = vmatpush1.xpose.msra.mxu0 0.0
        %4026 = vmatprep.subr.mxu0 0.0
        %4027 = vmatpush1.xpose.msra.mxu0 0.0
        %4028 = vmatprep.subr.mxu0 0.0
        %4029 = vmatpush1.xpose.msra.mxu0 0.0
        %4030 = vmatprep.subr.mxu0 0.0
        %4031 = vmatpush1.xpose.msra.mxu0 0.0
        %4032 = vmatprep.subr.mxu0 0.0
        %4033 = vmatpush1.xpose.msra.mxu0 0.0
        %4034 = vmatprep.subr.mxu0 0.0
        %4035 = vmatpush1.xpose.msra.mxu0 0.0
        %4036 = vmatprep.subr.mxu0 0.0
        %4037 = vmatpush1.xpose.msra.mxu0 0.0
        %4038 = vmatprep.subr.mxu0 0.0
        %4039 = vmatpush1.xpose.msra.mxu0 0.0
        %4040 = vmatprep.subr.mxu0 0.0
        %4041 = vmatpush1.xpose.msra.mxu0 0.0
        %4042 = vmatprep.subr.mxu0 0.0
        %4043 = vmatpush1.xpose.msra.mxu0 0.0
        %4044 = vmatprep.subr.mxu0 0.0
        %4045 = vmatpush1.xpose.msra.mxu0 0.0
        %4046 = vmatprep.subr.mxu0 0.0
        %4047 = vmatpush1.xpose.msra.mxu0 0.0
        %4048 = vmatprep.subr.mxu0 0.0
        %4049 = vmatpush1.xpose.msra.mxu0 0.0
        %4050 = vmatprep.subr.mxu0 0.0
        %4051 = vmatpush1.xpose.msra.mxu0 0.0
        %4052 = vmatprep.subr.mxu0 0.0
        %4053 = vmatpush1.xpose.msra.mxu0 0.0
        %4054 = vmatprep.subr.mxu0 0.0
        %4055 = vmatpush1.xpose.msra.mxu0 0.0
        %4056 = vmatprep.subr.mxu0 0.0
        %4057 = vmatpush1.xpose.msra.mxu0 0.0
        %4058 = vmatprep.subr.mxu0 0.0
        %4059 = vmatpush1.xpose.msra.mxu0 0.0
        %4060 = vmatprep.mubr.f32.mxu0 0.0
        %4061 = vmatmul.mubr.f32.gmra.mrb[0].mxu0 %v3985
        %v4062 = vpop.f32.mrb[0].mxu0
        %v4063 = vadd.f32 0.0, %v4062
        %v4064 = vpop.f32.mrb[0].mxu0
        %4065 = vmatprep.mubr.f32.mxu0 0.0
        %4066 = vmatmul.mubr.f32.gmra.mrb[0].mxu0 %v3988
        %v4067 = vpop.f32.mrb[0].mxu0
        %v4068 = vadd.f32 0.0, %v4067
        %v4069 = vpop.f32.mrb[0].mxu0
        %4070 = vdwg.mxu0
        %v4072 = vsel %vm1805, %v3202, 0
        %v4075 = vsel %vm1805, %v3207, 0
        %v4078 = vsel %vm1805, %v3502, 0
        %v4081 = vsel %vm1805, %v3507, 0
        %4083 = vmatprep.subr.mxu0 0.0
        %4084 = vmatpush1.xpose.msra.mxu0 %v4078
        %4085 = vmatprep.subr.mxu0 0.0
        %4086 = vmatpush1.xpose.msra.mxu0 %v4081
        %4087 = vmatprep.subr.mxu0 0.0
        %4088 = vmatpush1.xpose.msra.mxu0 0.0
        %4089 = vmatprep.subr.mxu0 0.0
        %4090 = vmatpush1.xpose.msra.mxu0 0.0
        %4091 = vmatprep.subr.mxu0 0.0
        %4092 = vmatpush1.xpose.msra.mxu0 0.0
        %4093 = vmatprep.subr.mxu0 0.0
        %4094 = vmatpush1.xpose.msra.mxu0 0.0
        %4095 = vmatprep.subr.mxu0 0.0
        %4096 = vmatpush1.xpose.msra.mxu0 0.0
        %4097 = vmatprep.subr.mxu0 0.0
        %4098 = vmatpush1.xpose.msra.mxu0 0.0
        %4099 = vmatprep.subr.mxu0 0.0
        %4100 = vmatpush1.xpose.msra.mxu0 0.0
        %4101 = vmatprep.subr.mxu0 0.0
        %4102 = vmatpush1.xpose.msra.mxu0 0.0
        %4103 = vmatprep.subr.mxu0 0.0
        %4104 = vmatpush1.xpose.msra.mxu0 0.0
        %4105 = vmatprep.subr.mxu0 0.0
        %4106 = vmatpush1.xpose.msra.mxu0 0.0
        %4107 = vmatprep.subr.mxu0 0.0
        %4108 = vmatpush1.xpose.msra.mxu0 0.0
        %4109 = vmatprep.subr.mxu0 0.0
        %4110 = vmatpush1.xpose.msra.mxu0 0.0
        %4111 = vmatprep.subr.mxu0 0.0
        %4112 = vmatpush1.xpose.msra.mxu0 0.0
        %4113 = vmatprep.subr.mxu0 0.0
        %4114 = vmatpush1.xpose.msra.mxu0 0.0
        %4115 = vmatprep.subr.mxu0 0.0
        %4116 = vmatpush1.xpose.msra.mxu0 0.0
        %4117 = vmatprep.subr.mxu0 0.0
        %4118 = vmatpush1.xpose.msra.mxu0 0.0
        %4119 = vmatprep.subr.mxu0 0.0
        %4120 = vmatpush1.xpose.msra.mxu0 0.0
        %4121 = vmatprep.subr.mxu0 0.0
        %4122 = vmatpush1.xpose.msra.mxu0 0.0
        %4123 = vmatprep.subr.mxu0 0.0
        %4124 = vmatpush1.xpose.msra.mxu0 0.0
        %4125 = vmatprep.subr.mxu0 0.0
        %4126 = vmatpush1.xpose.msra.mxu0 0.0
        %4127 = vmatprep.subr.mxu0 0.0
        %4128 = vmatpush1.xpose.msra.mxu0 0.0
        %4129 = vmatprep.subr.mxu0 0.0
        %4130 = vmatpush1.xpose.msra.mxu0 0.0
        %4131 = vmatprep.subr.mxu0 0.0
        %4132 = vmatpush1.xpose.msra.mxu0 0.0
        %4133 = vmatprep.subr.mxu0 0.0
        %4134 = vmatpush1.xpose.msra.mxu0 0.0
        %4135 = vmatprep.subr.mxu0 0.0
        %4136 = vmatpush1.xpose.msra.mxu0 0.0
        %4137 = vmatprep.subr.mxu0 0.0
        %4138 = vmatpush1.xpose.msra.mxu0 0.0
        %4139 = vmatprep.subr.mxu0 0.0
        %4140 = vmatpush1.xpose.msra.mxu0 0.0
        %4141 = vmatprep.subr.mxu0 0.0
        %4142 = vmatpush1.xpose.msra.mxu0 0.0
        %4143 = vmatprep.subr.mxu0 0.0
        %4144 = vmatpush1.xpose.msra.mxu0 0.0
        %4145 = vmatprep.subr.mxu0 0.0
        %4146 = vmatpush1.xpose.msra.mxu0 0.0
        %4147 = vmatprep.mubr.f32.mxu0 0.0
        %4148 = vmatmul.mubr.f32.gmra.mrb[0].mxu0 %v4072
        %v4149 = vpop.f32.mrb[0].mxu0
        %v4150 = vadd.f32 0.0, %v4149
        %v4151 = vpop.f32.mrb[0].mxu0
        %4152 = vmatprep.mubr.f32.mxu0 0.0
        %4153 = vmatmul.mubr.f32.gmra.mrb[0].mxu0 %v4075
        %v4154 = vpop.f32.mrb[0].mxu0
        %v4155 = vadd.f32 0.0, %v4154
        %v4156 = vpop.f32.mrb[0].mxu0
        %4157 = vdwg.mxu0
        %v4158 = vsel %vm1805, %v3889, -inf
        %4159 = vmax.xlane.f32.xlu0 %v4158
        %v4160 = vpop.xlane.xlu0 %4159
        %v4161 = vsel %vm1805, %v3894, -inf
        %4162 = vmax.xlane.f32.xlu0 %v4161
        %v4163 = vpop.xlane.xlu0 %4162
        %v4164 = vsel %vm1805, %v3976, -inf
        %4165 = vmax.xlane.f32.xlu0 %v4164
        %v4166 = vpop.xlane.xlu0 %4165
        %v4167 = vsel %vm1805, %v3981, -inf
        %4168 = vmax.xlane.f32.xlu0 %v4167
        %v4169 = vpop.xlane.xlu0 %4168
        %v4170 = vsel %vm1805, %v4063, -inf
        %4171 = vmax.xlane.f32.xlu0 %v4170
        %v4172 = vpop.xlane.xlu0 %4171
        %v4173 = vsel %vm1805, %v4068, -inf
        %4174 = vmax.xlane.f32.xlu0 %v4173
        %v4175 = vpop.xlane.xlu0 %4174
        %v4176 = vsel %vm1805, %v4150, -inf
        %4177 = vmax.xlane.f32.xlu0 %v4176
        %v4178 = vpop.xlane.xlu0 %4177
        %v4179 = vsel %vm1805, %v4155, -inf
        %4180 = vmax.xlane.f32.xlu0 %v4179
        %v4181 = vpop.xlane.xlu0 %4180
        %v4182 = vsub.f32 %v3889, %v4160
        %v4183 = vsub.f32 %v3894, %v4163
        %v4184 = vsub.f32 %v3976, %v4166
        %v4185 = vsub.f32 %v3981, %v4169
        %v4186 = vsub.f32 %v4063, %v4172
        %v4187 = vsub.f32 %v4068, %v4175
        %v4188 = vsub.f32 %v4150, %v4178
        %v4189 = vsub.f32 %v4155, %v4181
        %v4190 = vmul.f32 %v4182, 1.442695
        %v4191 = vpow.pop %v4190
        %v4192 = vmul.f32 %v4183, 1.442695
        %v4193 = vpow.pop %v4192
        %v4194 = vmul.f32 %v4184, 1.442695
        %v4195 = vpow.pop %v4194
        %v4196 = vmul.f32 %v4185, 1.442695
        %v4197 = vpow.pop %v4196
        %v4198 = vmul.f32 %v4186, 1.442695
        %v4199 = vpow.pop %v4198
        %v4200 = vmul.f32 %v4187, 1.442695
        %v4201 = vpow.pop %v4200
        %v4202 = vmul.f32 %v4188, 1.442695
        %v4203 = vpow.pop %v4202
        %v4204 = vmul.f32 %v4189, 1.442695
        %v4205 = vpow.pop %v4204
        %v4206 = vsel %vm1805, %v4191, 0.0
        %4207 = vadd.xlane.f32.xlu0 %v4206
        %v4208 = vpop.xlane.xlu0 %4207
        %v4209 = vsel %vm1805, %v4193, 0.0
        %4210 = vadd.xlane.f32.xlu0 %v4209
        %v4211 = vpop.xlane.xlu0 %4210
        %v4212 = vsel %vm1805, %v4195, 0.0
        %4213 = vadd.xlane.f32.xlu0 %v4212
        %v4214 = vpop.xlane.xlu0 %4213
        %v4215 = vsel %vm1805, %v4197, 0.0
        %4216 = vadd.xlane.f32.xlu0 %v4215
        %v4217 = vpop.xlane.xlu0 %4216
        %v4218 = vsel %vm1805, %v4199, 0.0
        %4219 = vadd.xlane.f32.xlu0 %v4218
        %v4220 = vpop.xlane.xlu0 %4219
        %v4221 = vsel %vm1805, %v4201, 0.0
        %4222 = vadd.xlane.f32.xlu0 %v4221
        %v4223 = vpop.xlane.xlu0 %4222
        %v4224 = vsel %vm1805, %v4203, 0.0
        %4225 = vadd.xlane.f32.xlu0 %v4224
        %v4226 = vpop.xlane.xlu0 %4225
        %v4227 = vsel %vm1805, %v4205, 0.0
        %4228 = vadd.xlane.f32.xlu0 %v4227
        %v4229 = vpop.xlane.xlu0 %4228
        %v4230 = vrcp.pop %v4208
        %v4231 = vrcp.pop %v4211
        %v4232 = vrcp.pop %v4214
        %v4233 = vrcp.pop %v4217
        %v4234 = vrcp.pop %v4220
        %v4235 = vrcp.pop %v4223
        %v4236 = vrcp.pop %v4226
        %v4237 = vrcp.pop %v4229
        %v4238 = vmul.f32 %v4191, %v4230
        %v4239 = vmul.f32 %v4193, %v4231
        %v4240 = vmul.f32 %v4195, %v4232
        %v4241 = vmul.f32 %v4197, %v4233
        %v4242 = vmul.f32 %v4199, %v4234
        %v4243 = vmul.f32 %v4201, %v4235
        %v4244 = vmul.f32 %v4203, %v4236
        %v4245 = vmul.f32 %v4205, %v4237
        %v4247 = vsel %vm1805, %v4238, 0
        %v4250 = vsel %vm1805, %v4239, 0
        %4252 = vmatprep.subr.mxu0 0.0
        %4253 = vmatpush1.msra.mxu0 %v3577
        %4254 = vmatprep.subr.mxu0 0.0
        %4255 = vmatpush1.msra.mxu0 %v3582
        %4256 = vmatprep.subr.mxu0 0.0
        %4257 = vmatpush1.msra.mxu0 0.0
        %4258 = vmatprep.subr.mxu0 0.0
        %4259 = vmatpush1.msra.mxu0 0.0
        %4260 = vmatprep.subr.mxu0 0.0
        %4261 = vmatpush1.msra.mxu0 0.0
        %4262 = vmatprep.subr.mxu0 0.0
        %4263 = vmatpush1.msra.mxu0 0.0
        %4264 = vmatprep.subr.mxu0 0.0
        %4265 = vmatpush1.msra.mxu0 0.0
        %4266 = vmatprep.subr.mxu0 0.0
        %4267 = vmatpush1.msra.mxu0 0.0
        %4268 = vmatprep.subr.mxu0 0.0
        %4269 = vmatpush1.msra.mxu0 0.0
        %4270 = vmatprep.subr.mxu0 0.0
        %4271 = vmatpush1.msra.mxu0 0.0
        %4272 = vmatprep.subr.mxu0 0.0
        %4273 = vmatpush1.msra.mxu0 0.0
        %4274 = vmatprep.subr.mxu0 0.0
        %4275 = vmatpush1.msra.mxu0 0.0
        %4276 = vmatprep.subr.mxu0 0.0
        %4277 = vmatpush1.msra.mxu0 0.0
        %4278 = vmatprep.subr.mxu0 0.0
        %4279 = vmatpush1.msra.mxu0 0.0
        %4280 = vmatprep.subr.mxu0 0.0
        %4281 = vmatpush1.msra.mxu0 0.0
        %4282 = vmatprep.subr.mxu0 0.0
        %4283 = vmatpush1.msra.mxu0 0.0
        %4284 = vmatprep.subr.mxu0 0.0
        %4285 = vmatpush1.msra.mxu0 0.0
        %4286 = vmatprep.subr.mxu0 0.0
        %4287 = vmatpush1.msra.mxu0 0.0
        %4288 = vmatprep.subr.mxu0 0.0
        %4289 = vmatpush1.msra.mxu0 0.0
        %4290 = vmatprep.subr.mxu0 0.0
        %4291 = vmatpush1.msra.mxu0 0.0
        %4292 = vmatprep.subr.mxu0 0.0
        %4293 = vmatpush1.msra.mxu0 0.0
        %4294 = vmatprep.subr.mxu0 0.0
        %4295 = vmatpush1.msra.mxu0 0.0
        %4296 = vmatprep.subr.mxu0 0.0
        %4297 = vmatpush1.msra.mxu0 0.0
        %4298 = vmatprep.subr.mxu0 0.0
        %4299 = vmatpush1.msra.mxu0 0.0
        %4300 = vmatprep.subr.mxu0 0.0
        %4301 = vmatpush1.msra.mxu0 0.0
        %4302 = vmatprep.subr.mxu0 0.0
        %4303 = vmatpush1.msra.mxu0 0.0
        %4304 = vmatprep.subr.mxu0 0.0
        %4305 = vmatpush1.msra.mxu0 0.0
        %4306 = vmatprep.subr.mxu0 0.0
        %4307 = vmatpush1.msra.mxu0 0.0
        %4308 = vmatprep.subr.mxu0 0.0
        %4309 = vmatpush1.msra.mxu0 0.0
        %4310 = vmatprep.subr.mxu0 0.0
        %4311 = vmatpush1.msra.mxu0 0.0
        %4312 = vmatprep.subr.mxu0 0.0
        %4313 = vmatpush1.msra.mxu0 0.0
        %4314 = vmatprep.subr.mxu0 0.0
        %4315 = vmatpush1.msra.mxu0 0.0
        %4316 = vmatprep.mubr.f32.mxu0 0.0
        %4317 = vmatmul.mubr.f32.gmra.mrb[0].mxu0 %v4247
        %v4318 = vpop.f32.mrb[0].mxu0
        %v4319 = vadd.f32 0.0, %v4318
        %v4320 = vpop.f32.mrb[0].mxu0
        %4321 = vmatprep.mubr.f32.mxu0 0.0
        %4322 = vmatmul.mubr.f32.gmra.mrb[0].mxu0 %v4250
        %v4323 = vpop.f32.mrb[0].mxu0
        %v4324 = vadd.f32 0.0, %v4323
        %v4325 = vpop.f32.mrb[0].mxu0
        %4326 = vdwg.mxu0
        %v4328 = vsel %vm1805, %v4240, 0
        %v4331 = vsel %vm1805, %v4241, 0
        %4333 = vmatprep.subr.mxu0 0.0
        %4334 = vmatpush1.msra.mxu0 %v3652
        %4335 = vmatprep.subr.mxu0 0.0
        %4336 = vmatpush1.msra.mxu0 %v3657
        %4337 = vmatprep.subr.mxu0 0.0
        %4338 = vmatpush1.msra.mxu0 0.0
        %4339 = vmatprep.subr.mxu0 0.0
        %4340 = vmatpush1.msra.mxu0 0.0
        %4341 = vmatprep.subr.mxu0 0.0
        %4342 = vmatpush1.msra.mxu0 0.0
        %4343 = vmatprep.subr.mxu0 0.0
        %4344 = vmatpush1.msra.mxu0 0.0
        %4345 = vmatprep.subr.mxu0 0.0
        %4346 = vmatpush1.msra.mxu0 0.0
        %4347 = vmatprep.subr.mxu0 0.0
        %4348 = vmatpush1.msra.mxu0 0.0
        %4349 = vmatprep.subr.mxu0 0.0
        %4350 = vmatpush1.msra.mxu0 0.0
        %4351 = vmatprep.subr.mxu0 0.0
        %4352 = vmatpush1.msra.mxu0 0.0
        %4353 = vmatprep.subr.mxu0 0.0
        %4354 = vmatpush1.msra.mxu0 0.0
        %4355 = vmatprep.subr.mxu0 0.0
        %4356 = vmatpush1.msra.mxu0 0.0
        %4357 = vmatprep.subr.mxu0 0.0
        %4358 = vmatpush1.msra.mxu0 0.0
        %4359 = vmatprep.subr.mxu0 0.0
        %4360 = vmatpush1.msra.mxu0 0.0
        %4361 = vmatprep.subr.mxu0 0.0
        %4362 = vmatpush1.msra.mxu0 0.0
        %4363 = vmatprep.subr.mxu0 0.0
        %4364 = vmatpush1.msra.mxu0 0.0
        %4365 = vmatprep.subr.mxu0 0.0
        %4366 = vmatpush1.msra.mxu0 0.0
        %4367 = vmatprep.subr.mxu0 0.0
        %4368 = vmatpush1.msra.mxu0 0.0
        %4369 = vmatprep.subr.mxu0 0.0
        %4370 = vmatpush1.msra.mxu0 0.0
        %4371 = vmatprep.subr.mxu0 0.0
        %4372 = vmatpush1.msra.mxu0 0.0
        %4373 = vmatprep.subr.mxu0 0.0
        %4374 = vmatpush1.msra.mxu0 0.0
        %4375 = vmatprep.subr.mxu0 0.0
        %4376 = vmatpush1.msra.mxu0 0.0
        %4377 = vmatprep.subr.mxu0 0.0
        %4378 = vmatpush1.msra.mxu0 0.0
        %4379 = vmatprep.subr.mxu0 0.0
        %4380 = vmatpush1.msra.mxu0 0.0
        %4381 = vmatprep.subr.mxu0 0.0
        %4382 = vmatpush1.msra.mxu0 0.0
        %4383 = vmatprep.subr.mxu0 0.0
        %4384 = vmatpush1.msra.mxu0 0.0
        %4385 = vmatprep.subr.mxu0 0.0
        %4386 = vmatpush1.msra.mxu0 0.0
        %4387 = vmatprep.subr.mxu0 0.0
        %4388 = vmatpush1.msra.mxu0 0.0
        %4389 = vmatprep.subr.mxu0 0.0
        %4390 = vmatpush1.msra.mxu0 0.0
        %4391 = vmatprep.subr.mxu0 0.0
        %4392 = vmatpush1.msra.mxu0 0.0
        %4393 = vmatprep.subr.mxu0 0.0
        %4394 = vmatpush1.msra.mxu0 0.0
        %4395 = vmatprep.subr.mxu0 0.0
        %4396 = vmatpush1.msra.mxu0 0.0
        %4397 = vmatprep.mubr.f32.mxu0 0.0
        %4398 = vmatmul.mubr.f32.gmra.mrb[0].mxu0 %v4328
        %v4399 = vpop.f32.mrb[0].mxu0
        %v4400 = vadd.f32 0.0, %v4399
        %v4401 = vpop.f32.mrb[0].mxu0
        %4402 = vmatprep.mubr.f32.mxu0 0.0
        %4403 = vmatmul.mubr.f32.gmra.mrb[0].mxu0 %v4331
        %v4404 = vpop.f32.mrb[0].mxu0
        %v4405 = vadd.f32 0.0, %v4404
        %v4406 = vpop.f32.mrb[0].mxu0
        %4407 = vdwg.mxu0
        %v4409 = vsel %vm1805, %v4242, 0
        %v4412 = vsel %vm1805, %v4243, 0
        %4414 = vmatprep.subr.mxu0 0.0
        %4415 = vmatpush1.msra.mxu0 %v3727
        %4416 = vmatprep.subr.mxu0 0.0
        %4417 = vmatpush1.msra.mxu0 %v3732
        %4418 = vmatprep.subr.mxu0 0.0
        %4419 = vmatpush1.msra.mxu0 0.0
        %4420 = vmatprep.subr.mxu0 0.0
        %4421 = vmatpush1.msra.mxu0 0.0
        %4422 = vmatprep.subr.mxu0 0.0
        %4423 = vmatpush1.msra.mxu0 0.0
        %4424 = vmatprep.subr.mxu0 0.0
        %4425 = vmatpush1.msra.mxu0 0.0
        %4426 = vmatprep.subr.mxu0 0.0
        %4427 = vmatpush1.msra.mxu0 0.0
        %4428 = vmatprep.subr.mxu0 0.0
        %4429 = vmatpush1.msra.mxu0 0.0
        %4430 = vmatprep.subr.mxu0 0.0
        %4431 = vmatpush1.msra.mxu0 0.0
        %4432 = vmatprep.subr.mxu0 0.0
        %4433 = vmatpush1.msra.mxu0 0.0
        %4434 = vmatprep.subr.mxu0 0.0
        %4435 = vmatpush1.msra.mxu0 0.0
        %4436 = vmatprep.subr.mxu0 0.0
        %4437 = vmatpush1.msra.mxu0 0.0
        %4438 = vmatprep.subr.mxu0 0.0
        %4439 = vmatpush1.msra.mxu0 0.0
        %4440 = vmatprep.subr.mxu0 0.0
        %4441 = vmatpush1.msra.mxu0 0.0
        %4442 = vmatprep.subr.mxu0 0.0
        %4443 = vmatpush1.msra.mxu0 0.0
        %4444 = vmatprep.subr.mxu0 0.0
        %4445 = vmatpush1.msra.mxu0 0.0
        %4446 = vmatprep.subr.mxu0 0.0
        %4447 = vmatpush1.msra.mxu0 0.0
        %4448 = vmatprep.subr.mxu0 0.0
        %4449 = vmatpush1.msra.mxu0 0.0
        %4450 = vmatprep.subr.mxu0 0.0
        %4451 = vmatpush1.msra.mxu0 0.0
        %4452 = vmatprep.subr.mxu0 0.0
        %4453 = vmatpush1.msra.mxu0 0.0
        %4454 = vmatprep.subr.mxu0 0.0
        %4455 = vmatpush1.msra.mxu0 0.0
        %4456 = vmatprep.subr.mxu0 0.0
        %4457 = vmatpush1.msra.mxu0 0.0
        %4458 = vmatprep.subr.mxu0 0.0
        %4459 = vmatpush1.msra.mxu0 0.0
        %4460 = vmatprep.subr.mxu0 0.0
        %4461 = vmatpush1.msra.mxu0 0.0
        %4462 = vmatprep.subr.mxu0 0.0
        %4463 = vmatpush1.msra.mxu0 0.0
        %4464 = vmatprep.subr.mxu0 0.0
        %4465 = vmatpush1.msra.mxu0 0.0
        %4466 = vmatprep.subr.mxu0 0.0
        %4467 = vmatpush1.msra.mxu0 0.0
        %4468 = vmatprep.subr.mxu0 0.0
        %4469 = vmatpush1.msra.mxu0 0.0
        %4470 = vmatprep.subr.mxu0 0.0
        %4471 = vmatpush1.msra.mxu0 0.0
        %4472 = vmatprep.subr.mxu0 0.0
        %4473 = vmatpush1.msra.mxu0 0.0
        %4474 = vmatprep.subr.mxu0 0.0
        %4475 = vmatpush1.msra.mxu0 0.0
        %4476 = vmatprep.subr.mxu0 0.0
        %4477 = vmatpush1.msra.mxu0 0.0
        %4478 = vmatprep.mubr.f32.mxu0 0.0
        %4479 = vmatmul.mubr.f32.gmra.mrb[0].mxu0 %v4409
        %v4480 = vpop.f32.mrb[0].mxu0
        %v4481 = vadd.f32 0.0, %v4480
        %v4482 = vpop.f32.mrb[0].mxu0
        %4483 = vmatprep.mubr.f32.mxu0 0.0
        %4484 = vmatmul.mubr.f32.gmra.mrb[0].mxu0 %v4412
        %v4485 = vpop.f32.mrb[0].mxu0
        %v4486 = vadd.f32 0.0, %v4485
        %v4487 = vpop.f32.mrb[0].mxu0
        %4488 = vdwg.mxu0
        %v4490 = vsel %vm1805, %v4244, 0
        %v4493 = vsel %vm1805, %v4245, 0
        %4495 = vmatprep.subr.mxu0 0.0
        %4496 = vmatpush1.msra.mxu0 %v3802
        %4497 = vmatprep.subr.mxu0 0.0
        %4498 = vmatpush1.msra.mxu0 %v3807
        %4499 = vmatprep.subr.mxu0 0.0
        %4500 = vmatpush1.msra.mxu0 0.0
        %4501 = vmatprep.subr.mxu0 0.0
        %4502 = vmatpush1.msra.mxu0 0.0
        %4503 = vmatprep.subr.mxu0 0.0
        %4504 = vmatpush1.msra.mxu0 0.0
        %4505 = vmatprep.subr.mxu0 0.0
        %4506 = vmatpush1.msra.mxu0 0.0
        %4507 = vmatprep.subr.mxu0 0.0
        %4508 = vmatpush1.msra.mxu0 0.0
        %4509 = vmatprep.subr.mxu0 0.0
        %4510 = vmatpush1.msra.mxu0 0.0
        %4511 = vmatprep.subr.mxu0 0.0
        %4512 = vmatpush1.msra.mxu0 0.0
        %4513 = vmatprep.subr.mxu0 0.0
        %4514 = vmatpush1.msra.mxu0 0.0
        %4515 = vmatprep.subr.mxu0 0.0
        %4516 = vmatpush1.msra.mxu0 0.0
        %4517 = vmatprep.subr.mxu0 0.0
        %4518 = vmatpush1.msra.mxu0 0.0
        %4519 = vmatprep.subr.mxu0 0.0
        %4520 = vmatpush1.msra.mxu0 0.0
        %4521 = vmatprep.subr.mxu0 0.0
        %4522 = vmatpush1.msra.mxu0 0.0
        %4523 = vmatprep.subr.mxu0 0.0
        %4524 = vmatpush1.msra.mxu0 0.0
        %4525 = vmatprep.subr.mxu0 0.0
        %4526 = vmatpush1.msra.mxu0 0.0
        %4527 = vmatprep.subr.mxu0 0.0
        %4528 = vmatpush1.msra.mxu0 0.0
        %4529 = vmatprep.subr.mxu0 0.0
        %4530 = vmatpush1.msra.mxu0 0.0
        %4531 = vmatprep.subr.mxu0 0.0
        %4532 = vmatpush1.msra.mxu0 0.0
        %4533 = vmatprep.subr.mxu0 0.0
        %4534 = vmatpush1.msra.mxu0 0.0
        %4535 = vmatprep.subr.mxu0 0.0
        %4536 = vmatpush1.msra.mxu0 0.0
        %4537 = vmatprep.subr.mxu0 0.0
        %4538 = vmatpush1.msra.mxu0 0.0
        %4539 = vmatprep.subr.mxu0 0.0
        %4540 = vmatpush1.msra.mxu0 0.0
        %4541 = vmatprep.subr.mxu0 0.0
        %4542 = vmatpush1.msra.mxu0 0.0
        %4543 = vmatprep.subr.mxu0 0.0
        %4544 = vmatpush1.msra.mxu0 0.0
        %4545 = vmatprep.subr.mxu0 0.0
        %4546 = vmatpush1.msra.mxu0 0.0
        %4547 = vmatprep.subr.mxu0 0.0
        %4548 = vmatpush1.msra.mxu0 0.0
        %4549 = vmatprep.subr.mxu0 0.0
        %4550 = vmatpush1.msra.mxu0 0.0
        %4551 = vmatprep.subr.mxu0 0.0
        %4552 = vmatpush1.msra.mxu0 0.0
        %4553 = vmatprep.subr.mxu0 0.0
        %4554 = vmatpush1.msra.mxu0 0.0
        %4555 = vmatprep.subr.mxu0 0.0
        %4556 = vmatpush1.msra.mxu0 0.0
        %4557 = vmatprep.subr.mxu0 0.0
        %4558 = vmatpush1.msra.mxu0 0.0
        %4559 = vmatprep.mubr.f32.mxu0 0.0
        %4560 = vmatmul.mubr.f32.gmra.mrb[0].mxu0 %v4490
        %v4561 = vpop.f32.mrb[0].mxu0
        %v4562 = vadd.f32 0.0, %v4561
        %v4563 = vpop.f32.mrb[0].mxu0
        %4564 = vmatprep.mubr.f32.mxu0 0.0
        %4565 = vmatmul.mubr.f32.gmra.mrb[0].mxu0 %v4493
        %v4566 = vpop.f32.mrb[0].mxu0
        %v4567 = vadd.f32 0.0, %v4566
        %v4568 = vpop.f32.mrb[0].mxu0
        %4569 = vdwg.mxu0
        %v4571 = vsel %vm1805, %v4319, 0
        %v4574 = vsel %vm1805, %v4324, 0
        %4576 = vmatprep.subr.mxu0 0.0
        %4577 = vmatpush1.msra.mxu0 %v891
        %4578 = vmatprep.subr.mxu0 0.0
        %4579 = vmatpush1.msra.mxu0 %v892
        %4580 = vmatprep.subr.mxu0 0.0
        %4581 = vmatpush1.msra.mxu0 0.0
        %4582 = vmatprep.subr.mxu0 0.0
        %4583 = vmatpush1.msra.mxu0 0.0
        %4584 = vmatprep.subr.mxu0 0.0
        %4585 = vmatpush1.msra.mxu0 0.0
        %4586 = vmatprep.subr.mxu0 0.0
        %4587 = vmatpush1.msra.mxu0 0.0
        %4588 = vmatprep.subr.mxu0 0.0
        %4589 = vmatpush1.msra.mxu0 0.0
        %4590 = vmatprep.subr.mxu0 0.0
        %4591 = vmatpush1.msra.mxu0 0.0
        %4592 = vmatprep.subr.mxu0 0.0
        %4593 = vmatpush1.msra.mxu0 0.0
        %4594 = vmatprep.subr.mxu0 0.0
        %4595 = vmatpush1.msra.mxu0 0.0
        %4596 = vmatprep.subr.mxu0 0.0
        %4597 = vmatpush1.msra.mxu0 0.0
        %4598 = vmatprep.subr.mxu0 0.0
        %4599 = vmatpush1.msra.mxu0 0.0
        %4600 = vmatprep.subr.mxu0 0.0
        %4601 = vmatpush1.msra.mxu0 0.0
        %4602 = vmatprep.subr.mxu0 0.0
        %4603 = vmatpush1.msra.mxu0 0.0
        %4604 = vmatprep.subr.mxu0 0.0
        %4605 = vmatpush1.msra.mxu0 0.0
        %4606 = vmatprep.subr.mxu0 0.0
        %4607 = vmatpush1.msra.mxu0 0.0
        %4608 = vmatprep.subr.mxu0 0.0
        %4609 = vmatpush1.msra.mxu0 0.0
        %4610 = vmatprep.subr.mxu0 0.0
        %4611 = vmatpush1.msra.mxu0 0.0
        %4612 = vmatprep.subr.mxu0 0.0
        %4613 = vmatpush1.msra.mxu0 0.0
        %4614 = vmatprep.subr.mxu0 0.0
        %4615 = vmatpush1.msra.mxu0 0.0
        %4616 = vmatprep.subr.mxu0 0.0
        %4617 = vmatpush1.msra.mxu0 0.0
        %4618 = vmatprep.subr.mxu0 0.0
        %4619 = vmatpush1.msra.mxu0 0.0
        %4620 = vmatprep.subr.mxu0 0.0
        %4621 = vmatpush1.msra.mxu0 0.0
        %4622 = vmatprep.subr.mxu0 0.0
        %4623 = vmatpush1.msra.mxu0 0.0
        %4624 = vmatprep.subr.mxu0 0.0
        %4625 = vmatpush1.msra.mxu0 0.0
        %4626 = vmatprep.subr.mxu0 0.0
        %4627 = vmatpush1.msra.mxu0 0.0
        %4628 = vmatprep.subr.mxu0 0.0
        %4629 = vmatpush1.msra.mxu0 0.0
        %4630 = vmatprep.subr.mxu0 0.0
        %4631 = vmatpush1.msra.mxu0 0.0
        %4632 = vmatprep.subr.mxu0 0.0
        %4633 = vmatpush1.msra.mxu0 0.0
        %4634 = vmatprep.subr.mxu0 0.0
        %4635 = vmatpush1.msra.mxu0 0.0
        %4636 = vmatprep.subr.mxu0 0.0
        %4637 = vmatpush1.msra.mxu0 0.0
        %4638 = vmatprep.subr.mxu0 0.0
        %4639 = vmatpush1.msra.mxu0 0.0
        %4640 = vmatprep.mubr.f32.mxu0 0.0
        %4641 = vmatmul.mubr.f32.gmra.mrb[0].mxu0 %v4571
        %v4642 = vpop.f32.mrb[0].mxu0
        %v4643 = vadd.f32 0.0, %v4642
        %v4644 = vpop.f32.mrb[0].mxu0
        %4645 = vmatprep.mubr.f32.mxu0 0.0
        %4646 = vmatmul.mubr.f32.gmra.mrb[0].mxu0 %v4574
        %v4647 = vpop.f32.mrb[0].mxu0
        %v4648 = vadd.f32 0.0, %v4647
        %v4649 = vpop.f32.mrb[0].mxu0
        %4650 = vdwg.mxu0
        %v4652 = vsel %vm1805, %v4400, 0
        %v4655 = vsel %vm1805, %v4405, 0
        %4657 = vmatprep.subr.mxu0 0.0
        %4658 = vmatpush1.msra.mxu0 %v893
        %4659 = vmatprep.subr.mxu0 0.0
        %4660 = vmatpush1.msra.mxu0 %v894
        %4661 = vmatprep.subr.mxu0 0.0
        %4662 = vmatpush1.msra.mxu0 0.0
        %4663 = vmatprep.subr.mxu0 0.0
        %4664 = vmatpush1.msra.mxu0 0.0
        %4665 = vmatprep.subr.mxu0 0.0
        %4666 = vmatpush1.msra.mxu0 0.0
        %4667 = vmatprep.subr.mxu0 0.0
        %4668 = vmatpush1.msra.mxu0 0.0
        %4669 = vmatprep.subr.mxu0 0.0
        %4670 = vmatpush1.msra.mxu0 0.0
        %4671 = vmatprep.subr.mxu0 0.0
        %4672 = vmatpush1.msra.mxu0 0.0
        %4673 = vmatprep.subr.mxu0 0.0
        %4674 = vmatpush1.msra.mxu0 0.0
        %4675 = vmatprep.subr.mxu0 0.0
        %4676 = vmatpush1.msra.mxu0 0.0
        %4677 = vmatprep.subr.mxu0 0.0
        %4678 = vmatpush1.msra.mxu0 0.0
        %4679 = vmatprep.subr.mxu0 0.0
        %4680 = vmatpush1.msra.mxu0 0.0
        %4681 = vmatprep.subr.mxu0 0.0
        %4682 = vmatpush1.msra.mxu0 0.0
        %4683 = vmatprep.subr.mxu0 0.0
        %4684 = vmatpush1.msra.mxu0 0.0
        %4685 = vmatprep.subr.mxu0 0.0
        %4686 = vmatpush1.msra.mxu0 0.0
        %4687 = vmatprep.subr.mxu0 0.0
        %4688 = vmatpush1.msra.mxu0 0.0
        %4689 = vmatprep.subr.mxu0 0.0
        %4690 = vmatpush1.msra.mxu0 0.0
        %4691 = vmatprep.subr.mxu0 0.0
        %4692 = vmatpush1.msra.mxu0 0.0
        %4693 = vmatprep.subr.mxu0 0.0
        %4694 = vmatpush1.msra.mxu0 0.0
        %4695 = vmatprep.subr.mxu0 0.0
        %4696 = vmatpush1.msra.mxu0 0.0
        %4697 = vmatprep.subr.mxu0 0.0
        %4698 = vmatpush1.msra.mxu0 0.0
        %4699 = vmatprep.subr.mxu0 0.0
        %4700 = vmatpush1.msra.mxu0 0.0
        %4701 = vmatprep.subr.mxu0 0.0
        %4702 = vmatpush1.msra.mxu0 0.0
        %4703 = vmatprep.subr.mxu0 0.0
        %4704 = vmatpush1.msra.mxu0 0.0
        %4705 = vmatprep.subr.mxu0 0.0
        %4706 = vmatpush1.msra.mxu0 0.0
        %4707 = vmatprep.subr.mxu0 0.0
        %4708 = vmatpush1.msra.mxu0 0.0
        %4709 = vmatprep.subr.mxu0 0.0
        %4710 = vmatpush1.msra.mxu0 0.0
        %4711 = vmatprep.subr.mxu0 0.0
        %4712 = vmatpush1.msra.mxu0 0.0
        %4713 = vmatprep.subr.mxu0 0.0
        %4714 = vmatpush1.msra.mxu0 0.0
        %4715 = vmatprep.subr.mxu0 0.0
        %4716 = vmatpush1.msra.mxu0 0.0
        %4717 = vmatprep.subr.mxu0 0.0
        %4718 = vmatpush1.msra.mxu0 0.0
        %4719 = vmatprep.subr.mxu0 0.0
        %4720 = vmatpush1.msra.mxu0 0.0
        %4721 = vmatprep.mubr.f32.mxu0 0.0
        %4722 = vmatmul.mubr.f32.gmra.mrb[0].mxu0 %v4652
        %v4723 = vpop.f32.mrb[0].mxu0
        %v4724 = vadd.f32 0.0, %v4723
        %v4725 = vpop.f32.mrb[0].mxu0
        %4726 = vmatprep.mubr.f32.mxu0 0.0
        %4727 = vmatmul.mubr.f32.gmra.mrb[0].mxu0 %v4655
        %v4728 = vpop.f32.mrb[0].mxu0
        %v4729 = vadd.f32 0.0, %v4728
        %v4730 = vpop.f32.mrb[0].mxu0
        %4731 = vdwg.mxu0
        %v4733 = vsel %vm1805, %v4481, 0
        %v4736 = vsel %vm1805, %v4486, 0
        %4738 = vmatprep.subr.mxu0 0.0
        %4739 = vmatpush1.msra.mxu0 %v895
        %4740 = vmatprep.subr.mxu0 0.0
        %4741 = vmatpush1.msra.mxu0 %v896
        %4742 = vmatprep.subr.mxu0 0.0
        %4743 = vmatpush1.msra.mxu0 0.0
        %4744 = vmatprep.subr.mxu0 0.0
        %4745 = vmatpush1.msra.mxu0 0.0
        %4746 = vmatprep.subr.mxu0 0.0
        %4747 = vmatpush1.msra.mxu0 0.0
        %4748 = vmatprep.subr.mxu0 0.0
        %4749 = vmatpush1.msra.mxu0 0.0
        %4750 = vmatprep.subr.mxu0 0.0
        %4751 = vmatpush1.msra.mxu0 0.0
        %4752 = vmatprep.subr.mxu0 0.0
        %4753 = vmatpush1.msra.mxu0 0.0
        %4754 = vmatprep.subr.mxu0 0.0
        %4755 = vmatpush1.msra.mxu0 0.0
        %4756 = vmatprep.subr.mxu0 0.0
        %4757 = vmatpush1.msra.mxu0 0.0
        %4758 = vmatprep.subr.mxu0 0.0
        %4759 = vmatpush1.msra.mxu0 0.0
        %4760 = vmatprep.subr.mxu0 0.0
        %4761 = vmatpush1.msra.mxu0 0.0
        %4762 = vmatprep.subr.mxu0 0.0
        %4763 = vmatpush1.msra.mxu0 0.0
        %4764 = vmatprep.subr.mxu0 0.0
        %4765 = vmatpush1.msra.mxu0 0.0
        %4766 = vmatprep.subr.mxu0 0.0
        %4767 = vmatpush1.msra.mxu0 0.0
        %4768 = vmatprep.subr.mxu0 0.0
        %4769 = vmatpush1.msra.mxu0 0.0
        %4770 = vmatprep.subr.mxu0 0.0
        %4771 = vmatpush1.msra.mxu0 0.0
        %4772 = vmatprep.subr.mxu0 0.0
        %4773 = vmatpush1.msra.mxu0 0.0
        %4774 = vmatprep.subr.mxu0 0.0
        %4775 = vmatpush1.msra.mxu0 0.0
        %4776 = vmatprep.subr.mxu0 0.0
        %4777 = vmatpush1.msra.mxu0 0.0
        %4778 = vmatprep.subr.mxu0 0.0
        %4779 = vmatpush1.msra.mxu0 0.0
        %4780 = vmatprep.subr.mxu0 0.0
        %4781 = vmatpush1.msra.mxu0 0.0
        %4782 = vmatprep.subr.mxu0 0.0
        %4783 = vmatpush1.msra.mxu0 0.0
        %4784 = vmatprep.subr.mxu0 0.0
        %4785 = vmatpush1.msra.mxu0 0.0
        %4786 = vmatprep.subr.mxu0 0.0
        %4787 = vmatpush1.msra.mxu0 0.0
        %4788 = vmatprep.subr.mxu0 0.0
        %4789 = vmatpush1.msra.mxu0 0.0
        %4790 = vmatprep.subr.mxu0 0.0
        %4791 = vmatpush1.msra.mxu0 0.0
        %4792 = vmatprep.subr.mxu0 0.0
        %4793 = vmatpush1.msra.mxu0 0.0
        %4794 = vmatprep.subr.mxu0 0.0
        %4795 = vmatpush1.msra.mxu0 0.0
        %4796 = vmatprep.subr.mxu0 0.0
        %4797 = vmatpush1.msra.mxu0 0.0
        %4798 = vmatprep.subr.mxu0 0.0
        %4799 = vmatpush1.msra.mxu0 0.0
        %4800 = vmatprep.subr.mxu0 0.0
        %4801 = vmatpush1.msra.mxu0 0.0
        %4802 = vmatprep.mubr.f32.mxu0 0.0
        %4803 = vmatmul.mubr.f32.gmra.mrb[0].mxu0 %v4733
        %v4804 = vpop.f32.mrb[0].mxu0
        %v4805 = vadd.f32 0.0, %v4804
        %v4806 = vpop.f32.mrb[0].mxu0
        %4807 = vmatprep.mubr.f32.mxu0 0.0
        %4808 = vmatmul.mubr.f32.gmra.mrb[0].mxu0 %v4736
        %v4809 = vpop.f32.mrb[0].mxu0
        %v4810 = vadd.f32 0.0, %v4809
        %v4811 = vpop.f32.mrb[0].mxu0
        %4812 = vdwg.mxu0
        %v4814 = vsel %vm1805, %v4562, 0
        %v4817 = vsel %vm1805, %v4567, 0
        %4819 = vmatprep.subr.mxu0 0.0
        %4820 = vmatpush1.msra.mxu0 %v897
        %4821 = vmatprep.subr.mxu0 0.0
        %4822 = vmatpush1.msra.mxu0 %v898
        %4823 = vmatprep.subr.mxu0 0.0
        %4824 = vmatpush1.msra.mxu0 0.0
        %4825 = vmatprep.subr.mxu0 0.0
        %4826 = vmatpush1.msra.mxu0 0.0
        %4827 = vmatprep.subr.mxu0 0.0
        %4828 = vmatpush1.msra.mxu0 0.0
        %4829 = vmatprep.subr.mxu0 0.0
        %4830 = vmatpush1.msra.mxu0 0.0
        %4831 = vmatprep.subr.mxu0 0.0
        %4832 = vmatpush1.msra.mxu0 0.0
        %4833 = vmatprep.subr.mxu0 0.0
        %4834 = vmatpush1.msra.mxu0 0.0
        %4835 = vmatprep.subr.mxu0 0.0
        %4836 = vmatpush1.msra.mxu0 0.0
        %4837 = vmatprep.subr.mxu0 0.0
        %4838 = vmatpush1.msra.mxu0 0.0
        %4839 = vmatprep.subr.mxu0 0.0
        %4840 = vmatpush1.msra.mxu0 0.0
        %4841 = vmatprep.subr.mxu0 0.0
        %4842 = vmatpush1.msra.mxu0 0.0
        %4843 = vmatprep.subr.mxu0 0.0
        %4844 = vmatpush1.msra.mxu0 0.0
        %4845 = vmatprep.subr.mxu0 0.0
        %4846 = vmatpush1.msra.mxu0 0.0
        %4847 = vmatprep.subr.mxu0 0.0
        %4848 = vmatpush1.msra.mxu0 0.0
        %4849 = vmatprep.subr.mxu0 0.0
        %4850 = vmatpush1.msra.mxu0 0.0
        %4851 = vmatprep.subr.mxu0 0.0
        %4852 = vmatpush1.msra.mxu0 0.0
        %4853 = vmatprep.subr.mxu0 0.0
        %4854 = vmatpush1.msra.mxu0 0.0
        %4855 = vmatprep.subr.mxu0 0.0
        %4856 = vmatpush1.msra.mxu0 0.0
        %4857 = vmatprep.subr.mxu0 0.0
        %4858 = vmatpush1.msra.mxu0 0.0
        %4859 = vmatprep.subr.mxu0 0.0
        %4860 = vmatpush1.msra.mxu0 0.0
        %4861 = vmatprep.subr.mxu0 0.0
        %4862 = vmatpush1.msra.mxu0 0.0
        %4863 = vmatprep.subr.mxu0 0.0
        %4864 = vmatpush1.msra.mxu0 0.0
        %4865 = vmatprep.subr.mxu0 0.0
        %4866 = vmatpush1.msra.mxu0 0.0
        %4867 = vmatprep.subr.mxu0 0.0
        %4868 = vmatpush1.msra.mxu0 0.0
        %4869 = vmatprep.subr.mxu0 0.0
        %4870 = vmatpush1.msra.mxu0 0.0
        %4871 = vmatprep.subr.mxu0 0.0
        %4872 = vmatpush1.msra.mxu0 0.0
        %4873 = vmatprep.subr.mxu0 0.0
        %4874 = vmatpush1.msra.mxu0 0.0
        %4875 = vmatprep.subr.mxu0 0.0
        %4876 = vmatpush1.msra.mxu0 0.0
        %4877 = vmatprep.subr.mxu0 0.0
        %4878 = vmatpush1.msra.mxu0 0.0
        %4879 = vmatprep.subr.mxu0 0.0
        %4880 = vmatpush1.msra.mxu0 0.0
        %4881 = vmatprep.subr.mxu0 0.0
        %4882 = vmatpush1.msra.mxu0 0.0
        %4883 = vmatprep.mubr.f32.mxu0 0.0
        %4884 = vmatmul.mubr.f32.gmra.mrb[0].mxu0 %v4814
        %v4885 = vpop.f32.mrb[0].mxu0
        %v4886 = vadd.f32 0.0, %v4885
        %v4887 = vpop.f32.mrb[0].mxu0
        %4888 = vmatprep.mubr.f32.mxu0 0.0
        %4889 = vmatmul.mubr.f32.gmra.mrb[0].mxu0 %v4817
        %v4890 = vpop.f32.mrb[0].mxu0
        %v4891 = vadd.f32 0.0, %v4890
        %v4892 = vpop.f32.mrb[0].mxu0
        %4893 = vdwg.mxu0
        %v4894 = vsel %vm721, %v4643, 0.0
        %v4895 = vsel %vm721, %v4724, 0.0
        %v4896 = vadd.f32 %v4894, %v4895
        %v4897 = vsel %vm721, %v4805, 0.0
        %v4898 = vadd.f32 %v4896, %v4897
        %v4899 = vsel %vm721, %v4886, 0.0
        %v4900 = vadd.f32 %v4898, %v4899
        %v4901 = vsel %vm721, %v4648, 0.0
        %v4902 = vsel %vm721, %v4729, 0.0
        %v4903 = vadd.f32 %v4901, %v4902
        %v4904 = vsel %vm721, %v4810, 0.0
        %v4905 = vadd.f32 %v4903, %v4904
        %v4906 = vsel %vm721, %v4891, 0.0
        %v4907 = vadd.f32 %v4905, %v4906
        %v4908 = vld [vmem:[%s670] sm:$0x1]
        %v4910 = vlaneseq
        %v4911 = vshrl.u32 %v4910, 7
        %v4912 = vsub.s32 0, %v4911
        %v4913 = vrot.slane %v4908, %v4912
        %v4915 = vadd.f32 %v2896, %v4913
        %v4916 = vadd.f32 %v2903, %v4913
        %v4917 = vadd.f32 %v4900, %v4913
        %v4918 = vadd.f32 %v4907, %v4913
        %v4919 = vadd.f32 %v715, %v4915
        %v4920 = vadd.f32 %v716, %v4916
        %v4921 = vadd.f32 %v717, %v4917
        %v4922 = vadd.f32 %v718, %v4918
        %v4923 = vld [vmem:[%s673] sm:$0x1]
        %v4924 = vld [vmem:[%s676] sm:$0x1]
        %v4925 = vsel %vm721, %v4919, 0.0
        %4926 = vadd.xlane.f32.xlu0 %v4925
        %v4927 = vpop.xlane.xlu0 %4926
        %v4928 = vsel %vm721, %v4920, 0.0
        %4929 = vadd.xlane.f32.xlu0 %v4928
        %v4930 = vpop.xlane.xlu0 %4929
        %v4931 = vsel %vm721, %v4921, 0.0
        %4932 = vadd.xlane.f32.xlu0 %v4931
        %v4933 = vpop.xlane.xlu0 %4932
        %v4934 = vsel %vm721, %v4922, 0.0
        %4935 = vadd.xlane.f32.xlu0 %v4934
        %v4936 = vpop.xlane.xlu0 %4935
        %v4937 = vmul.f32 %v4927, %v734
        %v4938 = vmul.f32 %v4930, %v734
        %v4939 = vmul.f32 %v4933, %v734
        %v4940 = vmul.f32 %v4936, %v734
        %v4941 = vsub.f32 %v4919, %v4937
        %v4942 = vsub.f32 %v4920, %v4938
        %v4943 = vsub.f32 %v4921, %v4939
        %v4944 = vsub.f32 %v4922, %v4940
        %v4945 = vmul.f32 %v4941, %v4941
        %v4946 = vmul.f32 %v4942, %v4942
        %v4947 = vmul.f32 %v4943, %v4943
        %v4948 = vmul.f32 %v4944, %v4944
        %v4949 = vsel %vm721, %v4945, 0.0
        %4950 = vadd.xlane.f32.xlu0 %v4949
        %v4951 = vpop.xlane.xlu0 %4950
        %v4952 = vsel %vm721, %v4946, 0.0
        %4953 = vadd.xlane.f32.xlu0 %v4952
        %v4954 = vpop.xlane.xlu0 %4953
        %v4955 = vsel %vm721, %v4947, 0.0
        %4956 = vadd.xlane.f32.xlu0 %v4955
        %v4957 = vpop.xlane.xlu0 %4956
        %v4958 = vsel %vm721, %v4948, 0.0
        %4959 = vadd.xlane.f32.xlu0 %v4958
        %v4960 = vpop.xlane.xlu0 %4959
        %v4961 = vmul.f32 %v4951, %v734
        %v4962 = vmul.f32 %v4954, %v734
        %v4963 = vmul.f32 %v4957, %v734
        %v4964 = vmul.f32 %v4960, %v734
        %v4965 = vadd.f32 %v4961, 1e-05
        %v4966 = vadd.f32 %v4962, 1e-05
        %v4967 = vadd.f32 %v4963, 1e-05
        %v4968 = vadd.f32 %v4964, 1e-05
        %v4969 = vrsqrt.pop %v4965
        %v4970 = vrsqrt.pop %v4966
        %v4971 = vrsqrt.pop %v4967
        %v4972 = vrsqrt.pop %v4968
        %v4973 = vmul.f32 %v4941, %v4969
        %v4974 = vmul.f32 %v4942, %v4970
        %v4975 = vmul.f32 %v4943, %v4971
        %v4976 = vmul.f32 %v4944, %v4972
        %v4978 = vlaneseq
        %v4979 = vshrl.u32 %v4978, 7
        %v4980 = vsub.s32 0, %v4979
        %v4981 = vrot.slane %v4923, %v4980
        %v4983 = vmul.f32 %v4973, %v4981
        %v4984 = vmul.f32 %v4974, %v4981
        %v4985 = vmul.f32 %v4975, %v4981
        %v4986 = vmul.f32 %v4976, %v4981
        %v4988 = vlaneseq
        %v4989 = vshrl.u32 %v4988, 7
        %v4990 = vsub.s32 0, %v4989
        %v4991 = vrot.slane %v4924, %v4990
        %v4993 = vadd.f32 %v4983, %v4991
        %v4994 = vadd.f32 %v4984, %v4991
        %v4995 = vadd.f32 %v4985, %v4991
        %v4996 = vadd.f32 %v4986, %v4991
        %v4997 = vld [vmem:[%s681] sm:$0xff]
        %v4998 = vld [vmem:[%s681 + $0x8] sm:$0xff]
        %v4999 = vld [vmem:[%s681 + $0x10] sm:$0xff]
        %v5000 = vld [vmem:[%s681 + $0x18] sm:$0xff]
        %v5001 = vld [vmem:[%s681 + $0x20] sm:$0xff]
        %v5002 = vld [vmem:[%s681 + $0x28] sm:$0xff]
        %v5003 = vld [vmem:[%s681 + $0x30] sm:$0xff]
        %v5004 = vld [vmem:[%s681 + $0x38] sm:$0xff]
        %v5005 = vld [vmem:[%s681 + $0x40] sm:$0xff]
        %v5006 = vld [vmem:[%s681 + $0x48] sm:$0xff]
        %v5007 = vld [vmem:[%s681 + $0x50] sm:$0xff]
        %v5008 = vld [vmem:[%s681 + $0x58] sm:$0xff]
        %v5009 = vld [vmem:[%s681 + $0x60] sm:$0xff]
        %v5010 = vld [vmem:[%s681 + $0x68] sm:$0xff]
        %v5011 = vld [vmem:[%s681 + $0x70] sm:$0xff]
        %v5012 = vld [vmem:[%s681 + $0x78] sm:$0xff]
        %v5013 = vld [vmem:[%s685] sm:$0x3]
        %v5015 = vlaneseq
        %v5016 = vshrl.u32 %v5015, 7
        %v5017 = vsub.s32 0, %v5016
        %v5018 = vrot.slane %v5013, %v5017
        %v5019 = vlaneseq
        %v5020 = vshrl.u32 %v5019, 7
        %v5021 = vsub.s32 1, %v5020
        %v5022 = vrot.slane %v5013, %v5021
        %v5026 = vsel %vm721, %v4993, 0
        %v5029 = vsel %vm721, %v4994, 0
        %v5032 = vsel %vm721, %v4995, 0
        %v5035 = vsel %vm721, %v4996, 0
        %5037 = vmatprep.subr.mxu0 %v4998
        %5038 = vmatpush1.msra.mxu0 %v4997
        %5039 = vmatprep.subr.mxu0 %v5000
        %5040 = vmatpush1.msra.mxu0 %v4999
        %5041 = vmatprep.subr.mxu0 %v5002
        %5042 = vmatpush1.msra.mxu0 %v5001
        %5043 = vmatprep.subr.mxu0 %v5004
        %5044 = vmatpush1.msra.mxu0 %v5003
        %5045 = vmatprep.subr.mxu0 %v5006
        %5046 = vmatpush1.msra.mxu0 %v5005
        %5047 = vmatprep.subr.mxu0 %v5008
        %5048 = vmatpush1.msra.mxu0 %v5007
        %5049 = vmatprep.subr.mxu0 %v5010
        %5050 = vmatpush1.msra.mxu0 %v5009
        %5051 = vmatprep.subr.mxu0 %v5012
        %5052 = vmatpush1.msra.mxu0 %v5011
        %5053 = vmatprep.subr.mxu0 0.0
        %5054 = vmatpush1.msra.mxu0 0.0
        %5055 = vmatprep.subr.mxu0 0.0
        %5056 = vmatpush1.msra.mxu0 0.0
        %5057 = vmatprep.subr.mxu0 0.0
        %5058 = vmatpush1.msra.mxu0 0.0
        %5059 = vmatprep.subr.mxu0 0.0
        %5060 = vmatpush1.msra.mxu0 0.0
        %5061 = vmatprep.subr.mxu0 0.0
        %5062 = vmatpush1.msra.mxu0 0.0
        %5063 = vmatprep.subr.mxu0 0.0
        %5064 = vmatpush1.msra.mxu0 0.0
        %5065 = vmatprep.subr.mxu0 0.0
        %5066 = vmatpush1.msra.mxu0 0.0
        %5067 = vmatprep.subr.mxu0 0.0
        %5068 = vmatpush1.msra.mxu0 0.0
        %5069 = vmatprep.subr.mxu0 0.0
        %5070 = vmatpush1.msra.mxu0 0.0
        %5071 = vmatprep.subr.mxu0 0.0
        %5072 = vmatpush1.msra.mxu0 0.0
        %5073 = vmatprep.subr.mxu0 0.0
        %5074 = vmatpush1.msra.mxu0 0.0
        %5075 = vmatprep.subr.mxu0 0.0
        %5076 = vmatpush1.msra.mxu0 0.0
        %5077 = vmatprep.subr.mxu0 0.0
        %5078 = vmatpush1.msra.mxu0 0.0
        %5079 = vmatprep.subr.mxu0 0.0
        %5080 = vmatpush1.msra.mxu0 0.0
        %5081 = vmatprep.subr.mxu0 0.0
        %5082 = vmatpush1.msra.mxu0 0.0
        %5083 = vmatprep.subr.mxu0 0.0
        %5084 = vmatpush1.msra.mxu0 0.0
        %5085 = vmatprep.subr.mxu0 0.0
        %5086 = vmatpush1.msra.mxu0 0.0
        %5087 = vmatprep.subr.mxu0 0.0
        %5088 = vmatpush1.msra.mxu0 0.0
        %5089 = vmatprep.subr.mxu0 0.0
        %5090 = vmatpush1.msra.mxu0 0.0
        %5091 = vmatprep.subr.mxu0 0.0
        %5092 = vmatpush1.msra.mxu0 0.0
        %5093 = vmatprep.subr.mxu0 0.0
        %5094 = vmatpush1.msra.mxu0 0.0
        %5095 = vmatprep.subr.mxu0 0.0
        %5096 = vmatpush1.msra.mxu0 0.0
        %5097 = vmatprep.subr.mxu0 0.0
        %5098 = vmatpush1.msra.mxu0 0.0
        %5099 = vmatprep.subr.mxu0 0.0
        %5100 = vmatpush1.msra.mxu0 0.0
        %5101 = vmatprep.mubr.f32.mxu0 0.0
        %5102 = vmatmul.mubr.f32.gmra.mrb[0].mxu0 %v5026
        %v5103 = vpop.f32.mrb[0].mxu0
        %v5104 = vadd.f32 %v5018, %v5103
        %v5105 = vpop.f32.mrb[0].mxu0
        %v5106 = vadd.f32 %v5022, %v5105
        %5107 = vmatprep.mubr.f32.mxu0 0.0
        %5108 = vmatmul.mubr.f32.gmra.mrb[0].mxu0 %v5029
        %v5109 = vpop.f32.mrb[0].mxu0
        %v5110 = vadd.f32 %v5018, %v5109
        %v5111 = vpop.f32.mrb[0].mxu0
        %v5112 = vadd.f32 %v5022, %v5111
        %5113 = vmatprep.mubr.f32.mxu0 0.0
        %5114 = vmatmul.mubr.f32.gmra.mrb[0].mxu0 %v5032
        %v5115 = vpop.f32.mrb[0].mxu0
        %v5116 = vadd.f32 %v5018, %v5115
        %v5117 = vpop.f32.mrb[0].mxu0
        %v5118 = vadd.f32 %v5022, %v5117
        %5119 = vmatprep.mubr.f32.mxu0 0.0
        %5120 = vmatmul.mubr.f32.gmra.mrb[0].mxu0 %v5035
        %v5121 = vpop.f32.mrb[0].mxu0
        %v5122 = vadd.f32 %v5018, %v5121
        %v5123 = vpop.f32.mrb[0].mxu0
        %v5124 = vadd.f32 %v5022, %v5123
        %5125 = vdwg.mxu0
        %v5126 = vmul.f32 %v5104, 0.5
        %v5127 = vmul.f32 %v5106, 0.5
        %v5128 = vmul.f32 %v5110, 0.5
        %v5129 = vmul.f32 %v5112, 0.5
        %v5130 = vmul.f32 %v5116, 0.5
        %v5131 = vmul.f32 %v5118, 0.5
        %v5132 = vmul.f32 %v5122, 0.5
        %v5133 = vmul.f32 %v5124, 0.5
        %v5134 = vmul.f32 %v5104, 0.70710677
        %v5135 = vmul.f32 %v5106, 0.70710677
        %v5136 = vmul.f32 %v5110, 0.70710677
        %v5137 = vmul.f32 %v5112, 0.70710677
        %v5138 = vmul.f32 %v5116, 0.70710677
        %v5139 = vmul.f32 %v5118, 0.70710677
        %v5140 = vmul.f32 %v5122, 0.70710677
        %v5141 = vmul.f32 %v5124, 0.70710677
        %v5142 = verf.f32.pop %v5134
        %v5143 = verf.f32.pop %v5135
        %v5144 = verf.f32.pop %v5136
        %v5145 = verf.f32.pop %v5137
        %v5146 = verf.f32.pop %v5138
        %v5147 = verf.f32.pop %v5139
        %v5148 = verf.f32.pop %v5140
        %v5149 = verf.f32.pop %v5141
        %v5150 = vadd.f32 %v5142, 1.0
        %v5151 = vadd.f32 %v5143, 1.0
        %v5152 = vadd.f32 %v5144, 1.0
        %v5153 = vadd.f32 %v5145, 1.0
        %v5154 = vadd.f32 %v5146, 1.0
        %v5155 = vadd.f32 %v5147, 1.0
        %v5156 = vadd.f32 %v5148, 1.0
        %v5157 = vadd.f32 %v5149, 1.0
        %v5158 = vmul.f32 %v5126, %v5150
        %v5159 = vmul.f32 %v5127, %v5151
        %v5160 = vmul.f32 %v5128, %v5152
        %v5161 = vmul.f32 %v5129, %v5153
        %v5162 = vmul.f32 %v5130, %v5154
        %v5163 = vmul.f32 %v5131, %v5155
        %v5164 = vmul.f32 %v5132, %v5156
        %v5165 = vmul.f32 %v5133, %v5157
        %v5166 = vld [vmem:[%s690] sm:$0xff]
        %v5167 = vld [vmem:[%s690 + $0x8] sm:$0xff]
        %v5168 = vld [vmem:[%s690 + $0x10] sm:$0xff]
        %v5169 = vld [vmem:[%s690 + $0x18] sm:$0xff]
        %v5170 = vld [vmem:[%s690 + $0x20] sm:$0xff]
        %v5171 = vld [vmem:[%s690 + $0x28] sm:$0xff]
        %v5172 = vld [vmem:[%s690 + $0x30] sm:$0xff]
        %v5173 = vld [vmem:[%s690 + $0x38] sm:$0xff]
        %v5174 = vld [vmem:[%s690 + $0x40] sm:$0xff]
        %v5175 = vld [vmem:[%s690 + $0x48] sm:$0xff]
        %v5176 = vld [vmem:[%s690 + $0x50] sm:$0xff]
        %v5177 = vld [vmem:[%s690 + $0x58] sm:$0xff]
        %v5178 = vld [vmem:[%s690 + $0x60] sm:$0xff]
        %v5179 = vld [vmem:[%s690 + $0x68] sm:$0xff]
        %v5180 = vld [vmem:[%s690 + $0x70] sm:$0xff]
        %v5181 = vld [vmem:[%s690 + $0x78] sm:$0xff]
        %v5182 = vld [vmem:[%s690 + $0x80] sm:$0xff]
        %v5183 = vld [vmem:[%s690 + $0x88] sm:$0xff]
        %v5184 = vld [vmem:[%s690 + $0x90] sm:$0xff]
        %v5185 = vld [vmem:[%s690 + $0x98] sm:$0xff]
        %v5186 = vld [vmem:[%s690 + $0xa0] sm:$0xff]
        %v5187 = vld [vmem:[%s690 + $0xa8] sm:$0xff]
        %v5188 = vld [vmem:[%s690 + $0xb0] sm:$0xff]
        %v5189 = vld [vmem:[%s690 + $0xb8] sm:$0xff]
        %v5190 = vld [vmem:[%s690 + $0xc0] sm:$0xff]
        %v5191 = vld [vmem:[%s690 + $0xc8] sm:$0xff]
        %v5192 = vld [vmem:[%s690 + $0xd0] sm:$0xff]
        %v5193 = vld [vmem:[%s690 + $0xd8] sm:$0xff]
        %v5194 = vld [vmem:[%s690 + $0xe0] sm:$0xff]
        %v5195 = vld [vmem:[%s690 + $0xe8] sm:$0xff]
        %v5196 = vld [vmem:[%s690 + $0xf0] sm:$0xff]
        %v5197 = vld [vmem:[%s690 + $0xf8] sm:$0xff]
        %v5198 = vld [vmem:[%s693] sm:$0x1]
        %v5200 = vlaneseq
        %v5201 = vshrl.u32 %v5200, 7
        %v5202 = vsub.s32 0, %v5201
        %v5203 = vrot.slane %v5198, %v5202
        %5205 = vmatprep.subr.mxu0 0.0
        %5206 = vmatpush1.msra.mxu0 %v5166
        %5207 = vmatprep.subr.mxu0 0.0
        %5208 = vmatpush1.msra.mxu0 %v5167
        %5209 = vmatprep.subr.mxu0 0.0
        %5210 = vmatpush1.msra.mxu0 %v5168
        %5211 = vmatprep.subr.mxu0 0.0
        %5212 = vmatpush1.msra.mxu0 %v5169
        %5213 = vmatprep.subr.mxu0 0.0
        %5214 = vmatpush1.msra.mxu0 %v5170
        %5215 = vmatprep.subr.mxu0 0.0
        %5216 = vmatpush1.msra.mxu0 %v5171
        %5217 = vmatprep.subr.mxu0 0.0
        %5218 = vmatpush1.msra.mxu0 %v5172
        %5219 = vmatprep.subr.mxu0 0.0
        %5220 = vmatpush1.msra.mxu0 %v5173
        %5221 = vmatprep.subr.mxu0 0.0
        %5222 = vmatpush1.msra.mxu0 %v5174
        %5223 = vmatprep.subr.mxu0 0.0
        %5224 = vmatpush1.msra.mxu0 %v5175
        %5225 = vmatprep.subr.mxu0 0.0
        %5226 = vmatpush1.msra.mxu0 %v5176
        %5227 = vmatprep.subr.mxu0 0.0
        %5228 = vmatpush1.msra.mxu0 %v5177
        %5229 = vmatprep.subr.mxu0 0.0
        %5230 = vmatpush1.msra.mxu0 %v5178
        %5231 = vmatprep.subr.mxu0 0.0
        %5232 = vmatpush1.msra.mxu0 %v5179
        %5233 = vmatprep.subr.mxu0 0.0
        %5234 = vmatpush1.msra.mxu0 %v5180
        %5235 = vmatprep.subr.mxu0 0.0
        %5236 = vmatpush1.msra.mxu0 %v5181
        %5237 = vmatprep.subr.mxu0 0.0
        %5238 = vmatpush1.msra.mxu0 %v5182
        %5239 = vmatprep.subr.mxu0 0.0
        %5240 = vmatpush1.msra.mxu0 %v5183
        %5241 = vmatprep.subr.mxu0 0.0
        %5242 = vmatpush1.msra.mxu0 %v5184
        %5243 = vmatprep.subr.mxu0 0.0
        %5244 = vmatpush1.msra.mxu0 %v5185
        %5245 = vmatprep.subr.mxu0 0.0
        %5246 = vmatpush1.msra.mxu0 %v5186
        %5247 = vmatprep.subr.mxu0 0.0
        %5248 = vmatpush1.msra.mxu0 %v5187
        %5249 = vmatprep.subr.mxu0 0.0
        %5250 = vmatpush1.msra.mxu0 %v5188
        %5251 = vmatprep.subr.mxu0 0.0
        %5252 = vmatpush1.msra.mxu0 %v5189
        %5253 = vmatprep.subr.mxu0 0.0
        %5254 = vmatpush1.msra.mxu0 %v5190
        %5255 = vmatprep.subr.mxu0 0.0
        %5256 = vmatpush1.msra.mxu0 %v5191
        %5257 = vmatprep.subr.mxu0 0.0
        %5258 = vmatpush1.msra.mxu0 %v5192
        %5259 = vmatprep.subr.mxu0 0.0
        %5260 = vmatpush1.msra.mxu0 %v5193
        %5261 = vmatprep.subr.mxu0 0.0
        %5262 = vmatpush1.msra.mxu0 %v5194
        %5263 = vmatprep.subr.mxu0 0.0
        %5264 = vmatpush1.msra.mxu0 %v5195
        %5265 = vmatprep.subr.mxu0 0.0
        %5266 = vmatpush1.msra.mxu0 %v5196
        %5267 = vmatprep.subr.mxu0 0.0
        %5268 = vmatpush1.msra.mxu0 %v5197
        %5269 = vmatprep.mubr.f32.mxu0 %v5159
        %5270 = vmatmul.mubr.f32.gmra.mrb[0].mxu0 %v5158
        %v5271 = vpop.f32.mrb[0].mxu0
        %v5272 = vadd.f32 %v5203, %v5271
        %v5273 = vpop.f32.mrb[0].mxu0
        %5274 = vmatprep.mubr.f32.mxu0 %v5161
        %5275 = vmatmul.mubr.f32.gmra.mrb[0].mxu0 %v5160
        %v5276 = vpop.f32.mrb[0].mxu0
        %v5277 = vadd.f32 %v5203, %v5276
        %v5278 = vpop.f32.mrb[0].mxu0
        %5279 = vmatprep.mubr.f32.mxu0 %v5163
        %5280 = vmatmul.mubr.f32.gmra.mrb[0].mxu0 %v5162
        %v5281 = vpop.f32.mrb[0].mxu0
        %v5282 = vadd.f32 %v5203, %v5281
        %v5283 = vpop.f32.mrb[0].mxu0
        %5284 = vmatprep.mubr.f32.mxu0 %v5165
        %5285 = vmatmul.mubr.f32.gmra.mrb[0].mxu0 %v5164
        %v5286 = vpop.f32.mrb[0].mxu0
        %v5287 = vadd.f32 %v5203, %v5286
        %v5288 = vpop.f32.mrb[0].mxu0
        %5289 = vdwg.mxu0
        %v5290 = vadd.f32 %v4919, %v5272
        %v5291 = vadd.f32 %v4920, %v5277
        %v5292 = vadd.f32 %v4921, %v5282
        %v5293 = vadd.f32 %v4922, %v5287
        %5294 = vst.msk [vmem:[#allocation2] sm:$0xff] %vm721, %v5290
        %5295 = vst.msk [vmem:[#allocation2 + $0x8] sm:$0xff] %vm721, %v5291
        %5296 = vst.msk [vmem:[#allocation2 + $0x10] sm:$0xff] %vm721, %v5292
        %5297 = vst.msk [vmem:[#allocation2 + $0x18] sm:$0xff] %vm721, %v5293
        %5298 = vst.msk [vmem:[%s641] sm:$0xff] %vm721, %v5290
        %5299 = vst.msk [vmem:[%s641 + $0x8] sm:$0xff] %vm721, %v5291
        %5300 = vst.msk [vmem:[%s641 + $0x10] sm:$0xff] %vm721, %v5292
        %5301 = vst.msk [vmem:[%s641 + $0x18] sm:$0xff] %vm721, %v5293
        %s5302 = sand.u32 %s417, 1
        %s5303 = scalar_lea.sflag [#allocation4], %s5302
        %s5304 = sand.u32 %s417, 1
        %s5305 = smul.addr %s5304, 32
        %s5306 = scalar_lea.vmem [#allocation3], %s5305
        // Predicated region
        $region85: #{tpu_custom_call.1} parent=79 // pred_check
          %p5307 = pneg %p427
        $region86: #{tpu_custom_call.1} parent=79 // pred_check_branch
          %5309 = sbr.rel (%p5307) target = $region88
        $region87: #{tpu_custom_call.1} parent=79 // pred_region
          %s5311 = ssub.s32 512, 512
          %5312 = vsyncadd %s5303, %s5311
          %s5313 = smul.addr %s29, 4
          %s5314 = smul.addr %s5313, 128
          %s5315 = scalar_lea.hbm %s15, %s5314
          %s5316 = sshll.u32 %s5306, 4
          %s5317 = int_to_ptr.vmem [resolvable:$true] %s5316
          %5322 = dma.vmem_to_hbm [thread:$0]  %s5317, 512, %s5315, %s5303, 128, 128, 8
        $region88: #{tpu_custom_call.1} parent=79 // pred_fallthru
          _
      $region80: #{tpu_custom_call.1} parent=5 // pred_fallthru
        _
      %p5323 = scmp.le.s32.totalorder 2, %s24
      // Predicated region
      $region89: #{tpu_custom_call.1} parent=5 // pred_check
        %p5324 = pneg %p5323
      $region90: #{tpu_custom_call.1} parent=5 // pred_check_branch
        %5326 = sbr.rel (%p5324) target = $region92
      $region91: #{tpu_custom_call.1} parent=5 // pred_region
        %s5327 = ssub.s32 %s24, 2
        // Predicated region
        $region93: #{tpu_custom_call.1} parent=91 // pred_check
          %p5328 = pneg %p433
        $region94: #{tpu_custom_call.1} parent=91 // pred_check_branch
          %5330 = sbr.rel (%p5328) target = $region96
        $region95: #{tpu_custom_call.1} parent=91 // pred_region
          %s5331 = sand.u32 %s418, 1
          %s5332 = scalar_lea.sflag [#allocation4], %s5331
          %s5333 = sand.u32 %s418, 1
          %s5334 = smul.addr %s5333, 32
          %s5335 = scalar_lea.vmem [#allocation3], %s5334
          %5336 = dma.done %s5332, 512
        $region96: #{tpu_custom_call.1} parent=91 // pred_fallthru
          _
      $region92: #{tpu_custom_call.1} parent=5 // pred_fallthru
        _
    $region6: #{tpu_custom_call.1} parent=1 // loop_footer
      %s28 = sadd.s32 1, %s24
    $region7: #{tpu_custom_call.1} parent=1 // loop_footer_branch
      %23 = sbr.rel target = $region3
    $region8: #{tpu_custom_call.1} parent=1 // loop_exit
      _
    %5337 = vsyncpa [#allocation4], 1
    %s5338 = scalar_lea.sflag [#allocation4], 1
    %5339 = vsyncpa %s5338, 1

</llo_original>
